<compile_context>
chip_gen: v7x
topology: tpu7x:2x2x1
jax: 0.10.0
libtpu: 0.0.40
codegen_flags: <defaults>
</compile_context>

<pallas_src>
import functools

import jax
import jax.numpy as jnp
from jax.experimental import pallas as pl
from jax.experimental.pallas import tpu as pltpu

_MXU_DTYPE = jnp.bfloat16   # MXU operand dtype (f32 accumulation everywhere)


def _vmem_specs(n):
    return [pl.BlockSpec(memory_space=pltpu.MemorySpace.VMEM) for _ in range(n)]


_OUT_VMEM = pl.BlockSpec(memory_space=pltpu.MemorySpace.VMEM)


def _bn(y, gamma, beta, eps=1e-5):
    # y: (N, C); training-mode BatchNorm: batch statistics, biased variance.
    mean = jnp.mean(y, axis=0, keepdims=True)
    var = jnp.mean(jnp.square(y - mean), axis=0, keepdims=True)
    return (y - mean) * jax.lax.rsqrt(var + eps) * gamma + beta


# ----------------------------------------------------------------------------
# Fused kernel: conv bank -> maxpool -> proj1 -> proj2 + residual -> highway
# ----------------------------------------------------------------------------
def _cbhg_main_kernel(*refs, K):
    x_ref = refs[0]
    bank_w_refs = refs[1:1 + K]
    bank_b_ref, bank_g_ref, bank_be_ref = refs[1 + K:4 + K]
    p1w_ref, p1b_ref, p1g_ref, p1be_ref = refs[4 + K:8 + K]
    p2w_ref, p2b_ref, p2g_ref, p2be_ref = refs[8 + K:12 + K]
    hw_w_ref, hw_b_ref = refs[12 + K:14 + K]
    out_ref = refs[14 + K]

    x = x_ref[...].astype(jnp.float32)                       # (B, T, P)
    B, T, P = x.shape

    def conv_bn(cur, w2d, b, g, be, relu):
        # cur: (B, T, Cin) f32;  w2d: (k*Cin, Cout) pre-flattened im2col weight.
        Cin = cur.shape[-1]
        Cout = w2d.shape[1]
        k = w2d.shape[0] // Cin
        pad = k // 2
        if k == 1:
            xs = cur.reshape(B * T, Cin)
        else:
            # in-kernel 'same' padding: shifted views via XLU roll + mask (no pad copies)
            t_idx = jax.lax.broadcasted_iota(jnp.int32, cur.shape, 1)
            cols = []
            for d in range(k):                               # static unroll over taps
                off = d - pad
                if off == 0:
                    cols.append(cur)
                else:
                    sh = pltpu.roll(cur, shift=(-off) % T, axis=1)
                    valid = (t_idx + off >= 0) & (t_idx + off < T)
                    cols.append(jnp.where(valid, sh, 0.0))
            xs = jnp.concatenate(cols, axis=-1).reshape(B * T, k * Cin)
        # one wide MXU matmul per conv layer
        y = jnp.dot(xs.astype(_MXU_DTYPE), w2d.astype(_MXU_DTYPE),
                    preferred_element_type=jnp.float32) + b
        y = _bn(y, g, be)
        if relu:
            y = jnp.maximum(y, 0.0)
        return y.reshape(B, T, Cout)

    # --- sequential conv bank + BN + ReLU (matches reference forward) ---
    cur = x
    bank_outs = []
    for kk in range(K):
        cur = conv_bn(cur, bank_w_refs[kk][...], bank_b_ref[kk],
                      bank_g_ref[kk], bank_be_ref[kk], relu=True)
        bank_outs.append(cur)
    conv_cat = jnp.concatenate(bank_outs, axis=-1)           # (B, T, H*K) lane-dense

    # --- fused MaxPool1d(k=2, s=1, pad=1)[..., :-1] : out[t] = max(x[t-1], x[t]) ---
    t_idx = jax.lax.broadcasted_iota(jnp.int32, conv_cat.shape, 1)
    prev = jnp.where(t_idx == 0, conv_cat, pltpu.roll(conv_cat, shift=1, axis=1))
    pooled = jnp.maximum(conv_cat, prev)

    # --- conv projections ---
    p1 = conv_bn(pooled, p1w_ref[...], p1b_ref[...], p1g_ref[...], p1be_ref[...],
                 relu=True)                                  # (B, T, H)
    p2 = conv_bn(p1, p2w_ref[...], p2b_ref[...], p2g_ref[...], p2be_ref[...],
                 relu=False) + x                             # (B, T, P) + residual

    # --- highway: packed (P, 2P) weight -> one matmul per layer ---
    out = p2.reshape(B * T, P)
    L = hw_w_ref.shape[0]
    for l in range(L):
        ht = jnp.dot(out.astype(_MXU_DTYPE), hw_w_ref[l].astype(_MXU_DTYPE),
                     preferred_element_type=jnp.float32) + hw_b_ref[l]
        h = jnp.maximum(ht[:, :P], 0.0)
        t = jax.nn.sigmoid(ht[:, P:])
        out = h * t + out * (1.0 - t)
    out_ref[...] = out.reshape(B, T, P)


def cbhg_body(x_btp, params, K):
    B, T, P = x_btp.shape
    args = ([x_btp] + list(params['bank_w'])
            + [params['bank_b'], params['bank_g'], params['bank_be']]
            + list(params['proj1']) + list(params['proj2'])
            + [params['hw_w'], params['hw_b']])
    kern = functools.partial(_cbhg_main_kernel, K=K)
    return pl.pallas_call(
        kern,
        out_shape=jax.ShapeDtypeStruct((B, T, P), jnp.float32),
        in_specs=_vmem_specs(len(args)),
        out_specs=_OUT_VMEM,
    )(*args)


# ----------------------------------------------------------------------------
# Fused 2-layer bidirectional GRU (PyTorch gate order r, z, n), time-major
# (T, B, C).  Both layers and both directions run in ONE kernel; layer-0
# outputs never leave VMEM.  gi / per-direction output scratch is reused
# across layers.
# ----------------------------------------------------------------------------
def _bigru2_kernel(x_ref,
                   wih0_ref, whh0_ref, bih0_ref, bhh0_ref,
                   wih1_ref, whh1_ref, bih1_ref, bhh1_ref,
                   out_ref, gi_ref, of_ref, ob_ref):
    # x_ref: (T, B, In0); wih: (In, 6H) = [fwd r,z,n | bwd r,z,n]; whh: (2, H, 3H)
    T, B, In0 = x_ref.shape
    H = whh0_ref.shape[1]
    G = 3 * H

    def cell(gi_d, gh, h):
        r = jax.nn.sigmoid(gi_d[:, :H] + gh[:, :H])
        z = jax.nn.sigmoid(gi_d[:, H:2 * H] + gh[:, H:2 * H])
        n = jnp.tanh(gi_d[:, 2 * H:] + r * gh[:, 2 * H:])
        return (1.0 - z) * n + z * h

    def run_layer(x2d, wih_ref, bih_ref, whh_ref, bhh_ref):
        # Hoisted input projection: one GEMM for all timesteps and both directions.
        gi = jnp.dot(x2d.astype(_MXU_DTYPE), wih_ref[...].astype(_MXU_DTYPE),
                     preferred_element_type=jnp.float32) + bih_ref[...]
        gi_ref[...] = gi.reshape(T, B, 2 * G)

        whh_f = whh_ref[0].astype(_MXU_DTYPE)     # hoisted casts (loop-invariant)
        whh_b = whh_ref[1].astype(_MXU_DTYPE)
        bhh_f = bhh_ref[0]
        bhh_b = bhh_ref[1]

        def step(s, carry):
            h_f, h_b = carry
            gi_t = gi_ref[s]                       # (B, 6H) fwd gates at t = s
            gi_rt = gi_ref[T - 1 - s]              # (B, 6H) bwd gates at t = T-1-s
            gh_f = jnp.dot(h_f.astype(_MXU_DTYPE), whh_f,
                           preferred_element_type=jnp.float32) + bhh_f
            gh_b = jnp.dot(h_b.astype(_MXU_DTYPE), whh_b,
                           preferred_element_type=jnp.float32) + bhh_b
            h_f = cell(gi_t[:, :G], gh_f, h_f)
            h_b = cell(gi_rt[:, G:], gh_b, h_b)
            of_ref[s] = h_f
            ob_ref[T - 1 - s] = h_b
            return h_f, h_b

        h0 = jnp.zeros((B, H), jnp.float32)        # zero initial GRU state
        jax.lax.fori_loop(0, T, step, (h0, h0))

    # --- layer 0 ---
    run_layer(x_ref[...].astype(jnp.float32).reshape(T * B, In0),
              wih0_ref, bih0_ref, whh0_ref, bhh0_ref)
    l0 = jnp.concatenate([of_ref[...], ob_ref[...]], axis=-1)   # (T, B, 2H), VMEM only
    # --- layer 1 (reuses gi/of/ob scratch) ---
    run_layer(l0.reshape(T * B, 2 * H),
              wih1_ref, bih1_ref, whh1_ref, bhh1_ref)
    # single dense writeback of the concatenated (fwd, bwd) outputs
    out_ref[...] = jnp.concatenate([of_ref[...], ob_ref[...]], axis=-1)


def bigru_2layer(x_tbi, gru_params):
    T, B, _ = x_tbi.shape
    (wih0, whh0, bih0, bhh0), (wih1, whh1, bih1, bhh1) = gru_params
    H = whh0.shape[1]
    return pl.pallas_call(
        _bigru2_kernel,
        out_shape=jax.ShapeDtypeStruct((T, B, 2 * H), jnp.float32),
        in_specs=_vmem_specs(9),
        out_specs=_OUT_VMEM,
        scratch_shapes=[pltpu.VMEM((T, B, 6 * H), jnp.float32),
                        pltpu.VMEM((T, B, H), jnp.float32),
                        pltpu.VMEM((T, B, H), jnp.float32)],
    )(x_tbi, wih0, whh0, bih0, bhh0, wih1, whh1, bih1, bhh1)


# ----------------------------------------------------------------------------
# Parameter construction (deterministic, synthetic)
# ----------------------------------------------------------------------------
def init_params(key, hidden, proj, K, num_highway=4):
    keys = iter(jax.random.split(key, 64 + 8 * K))

    def nrm(shape, scale=0.1):
        return scale * jax.random.normal(next(keys), shape, jnp.float32)

    params = {}
    # conv-bank weights pre-flattened to im2col form (k*Cin, Cout)
    bank_w = []
    in_c = proj
    for k in range(1, K + 1):
        bank_w.append(nrm((k * in_c, hidden)))
        in_c = hidden
    params['bank_w'] = bank_w
    params['bank_b'] = nrm((K, 1, hidden))
    params['bank_g'] = 1.0 + nrm((K, 1, hidden))
    params['bank_be'] = nrm((K, 1, hidden))
    params['proj1'] = (nrm((3 * hidden * K, hidden)), nrm((1, hidden)),
                       1.0 + nrm((1, hidden)), nrm((1, hidden)))
    params['proj2'] = (nrm((3 * hidden, proj)), nrm((1, proj)),
                       1.0 + nrm((1, proj)), nrm((1, proj)))
    # Highway: packed [linear | gate] weights -> (L, P, 2P), (L, 1, 2P)
    params['hw_w'] = nrm((num_highway, proj, 2 * proj))
    params['hw_b'] = nrm((num_highway, 1, 2 * proj))
    # GRU: wih (In, 6H) = [fwd r,z,n | bwd r,z,n]; whh (2, H, 3H); biases to match.
    gru = []
    in_sz = proj
    for _layer in range(2):
        gru.append((nrm((in_sz, 6 * hidden)),
                    nrm((2, hidden, 3 * hidden)),
                    nrm((1, 6 * hidden)),
                    nrm((2, 1, 3 * hidden))))
        in_sz = 2 * hidden
    params['gru'] = gru
    return params


# ----------------------------------------------------------------------------
# Full CBHG forward
# ----------------------------------------------------------------------------
def cbhg_forward(x_ncw, params, K):
    # x_ncw: (B, projection_size, T)  -- PyTorch NCW input layout
    x = jnp.transpose(x_ncw, (0, 2, 1)).astype(jnp.float32)   # (B, T, P)

    # fused conv bank + maxpool + projections + residual + highway (one kernel)
    hw = cbhg_body(x, params, K)                              # (B, T, P)

    # fused 2-layer bidirectional GRU (one kernel for both layers & directions)
    xg = jnp.transpose(hw, (1, 0, 2))                         # (T, B, P)
    out = bigru_2layer(xg, params['gru'])                     # (T, B, 2H)
    return jnp.transpose(out, (1, 0, 2))                      # (B, T, 2H)


if __name__ == "__main__":
    B, T = 2, 16
    HIDDEN, PROJ, K = 32, 32, 4

    key = jax.random.PRNGKey(0)
    k_in, k_par = jax.random.split(key)
    x = jax.random.normal(k_in, (B, PROJ, T), jnp.float32)    # PyTorch NCW input
    params = init_params(k_par, HIDDEN, PROJ, K)

    fwd = jax.jit(functools.partial(cbhg_forward, K=K))
    out = fwd(x, params)
    jax.block_until_ready(out)

    assert out.shape == (B, T, 2 * HIDDEN), out.shape
    assert bool(jnp.all(jnp.isfinite(out)))
    print("KERNEL_OK")
</pallas_src>

<mosaic_0001>
module attributes {stable_mosaic.version = 11 : i64} {
  func.func @_bigru2_kernel(%arg0: memref<16x2x32xf32, #tpu.memory_space<vmem>>, %arg1: memref<32x192xf32, #tpu.memory_space<vmem>>, %arg2: memref<2x32x96xf32, #tpu.memory_space<vmem>>, %arg3: memref<1x192xf32, #tpu.memory_space<vmem>>, %arg4: memref<2x1x96xf32, #tpu.memory_space<vmem>>, %arg5: memref<64x192xf32, #tpu.memory_space<vmem>>, %arg6: memref<2x32x96xf32, #tpu.memory_space<vmem>>, %arg7: memref<1x192xf32, #tpu.memory_space<vmem>>, %arg8: memref<2x1x96xf32, #tpu.memory_space<vmem>>, %arg9: memref<16x2x64xf32, #tpu.memory_space<vmem>>, %arg10: memref<16x2x192xf32, #tpu.memory_space<vmem>>, %arg11: memref<16x2x32xf32, #tpu.memory_space<vmem>>, %arg12: memref<16x2x32xf32, #tpu.memory_space<vmem>>) attributes {dimension_semantics = [], scalar_prefetch = 0 : i64, scratch_operands = 3 : i64, tpu.core_type = #tpu.core_type<tc>} {
    %c0 = arith.constant 0 : index
    %c0_0 = arith.constant 0 : index
    %c0_1 = arith.constant 0 : index
    %0 = vector.load %arg0[%c0, %c0_0, %c0_1] : memref<16x2x32xf32, #tpu.memory_space<vmem>>, vector<16x2x32xf32>
    %1 = vector.shape_cast %0 : vector<16x2x32xf32> to vector<32x32xf32>
    %2 = arith.truncf %1 : vector<32x32xf32> to vector<32x32xbf16>
    %c0_2 = arith.constant 0 : index
    %c0_3 = arith.constant 0 : index
    %3 = vector.load %arg1[%c0_2, %c0_3] : memref<32x192xf32, #tpu.memory_space<vmem>>, vector<32x192xf32>
    %4 = arith.truncf %3 : vector<32x192xf32> to vector<32x192xbf16>
    %cst = arith.constant dense<0.000000e+00> : vector<32x192xf32>
    %5 = tpu.matmul %2, %4, %cst {dimension_numbers = #tpu.dot_dimension_numbers<[1], [0], [0], [1], [0, 0, 1, 1], [], []>} : vector<32x32xbf16>, vector<32x192xbf16>, vector<32x192xf32> -> vector<32x192xf32>
    %c0_4 = arith.constant 0 : index
    %c0_5 = arith.constant 0 : index
    %6 = vector.load %arg3[%c0_4, %c0_5] : memref<1x192xf32, #tpu.memory_space<vmem>>, vector<1x192xf32>
    %7 = vector.broadcast %6 : vector<1x192xf32> to vector<32x192xf32>
    %8 = arith.addf %5, %7 : vector<32x192xf32>
    %9 = vector.shape_cast %8 : vector<32x192xf32> to vector<16x2x192xf32>
    %c0_6 = arith.constant 0 : index
    %c0_7 = arith.constant 0 : index
    %c0_8 = arith.constant 0 : index
    %10 = vector.load %arg10[%c0_6, %c0_7, %c0_8] : memref<16x2x192xf32, #tpu.memory_space<vmem>>, vector<16x2x192xf32>
    tpu.vector_store %arg10[%c0_6, %c0_7, %c0_8], %9 {strides = array<i32>} : memref<16x2x192xf32, #tpu.memory_space<vmem>>, vector<16x2x192xf32>,
    %c0_9 = arith.constant 0 : index
    %c0_10 = arith.constant 0 : index
    %c0_11 = arith.constant 0 : index
    %11 = vector.load %arg2[%c0_9, %c0_10, %c0_11] : memref<2x32x96xf32, #tpu.memory_space<vmem>>, vector<1x32x96xf32>
    %12 = vector.shape_cast %11 : vector<1x32x96xf32> to vector<32x96xf32>
    %13 = arith.truncf %12 : vector<32x96xf32> to vector<32x96xbf16>
    %c1 = arith.constant 1 : index
    %c0_12 = arith.constant 0 : index
    %c0_13 = arith.constant 0 : index
    %14 = vector.load %arg2[%c1, %c0_12, %c0_13] : memref<2x32x96xf32, #tpu.memory_space<vmem>>, vector<1x32x96xf32>
    %15 = vector.shape_cast %14 : vector<1x32x96xf32> to vector<32x96xf32>
    %16 = arith.truncf %15 : vector<32x96xf32> to vector<32x96xbf16>
    %c0_14 = arith.constant 0 : index
    %c0_15 = arith.constant 0 : index
    %c0_16 = arith.constant 0 : index
    %17 = vector.load %arg4[%c0_14, %c0_15, %c0_16] : memref<2x1x96xf32, #tpu.memory_space<vmem>>, vector<1x1x96xf32>
    %18 = vector.shape_cast %17 : vector<1x1x96xf32> to vector<1x96xf32>
    %c1_17 = arith.constant 1 : index
    %c0_18 = arith.constant 0 : index
    %c0_19 = arith.constant 0 : index
    %19 = vector.load %arg4[%c1_17, %c0_18, %c0_19] : memref<2x1x96xf32, #tpu.memory_space<vmem>>, vector<1x1x96xf32>
    %20 = vector.shape_cast %19 : vector<1x1x96xf32> to vector<1x96xf32>
    %cst_20 = arith.constant 0.000000e+00 : f32
    %21 = vector.broadcast %cst_20 : f32 to vector<2x32xf32>
    %c0_i32 = arith.constant 0 : i32
    %c16_i32 = arith.constant 16 : i32
    %22 = arith.addi %c0_i32, %c16_i32 : i32
    %c1_i32 = arith.constant 1 : i32
    %23:2 = scf.for %arg13 = %c0_i32 to %22 step %c1_i32 iter_args(%arg14 = %21, %arg15 = %21) -> (vector<2x32xf32>, vector<2x32xf32>)  : i32 {
      %54 = arith.index_cast %arg13 : i32 to index
      %c0_62 = arith.constant 0 : index
      %c0_63 = arith.constant 0 : index
      %55 = vector.load %arg10[%54, %c0_62, %c0_63] : memref<16x2x192xf32, #tpu.memory_space<vmem>>, vector<1x2x192xf32>
      %56 = vector.shape_cast %55 : vector<1x2x192xf32> to vector<2x192xf32>
      %c15_i32 = arith.constant 15 : i32
      %57 = arith.subi %c15_i32, %arg13 : i32
      %58 = arith.index_cast %57 : i32 to index
      %c0_64 = arith.constant 0 : index
      %c0_65 = arith.constant 0 : index
      %59 = vector.load %arg10[%58, %c0_64, %c0_65] : memref<16x2x192xf32, #tpu.memory_space<vmem>>, vector<1x2x192xf32>
      %60 = vector.shape_cast %59 : vector<1x2x192xf32> to vector<2x192xf32>
      %61 = arith.truncf %arg14 : vector<2x32xf32> to vector<2x32xbf16>
      %cst_66 = arith.constant dense<0.000000e+00> : vector<2x96xf32>
      %62 = tpu.matmul %61, %13, %cst_66 {dimension_numbers = #tpu.dot_dimension_numbers<[1], [0], [0], [1], [0, 0, 1, 1], [], []>} : vector<2x32xbf16>, vector<32x96xbf16>, vector<2x96xf32> -> vector<2x96xf32>
      %63 = vector.broadcast %18 : vector<1x96xf32> to vector<2x96xf32>
      %64 = arith.addf %62, %63 : vector<2x96xf32>
      %65 = arith.truncf %arg15 : vector<2x32xf32> to vector<2x32xbf16>
      %cst_67 = arith.constant dense<0.000000e+00> : vector<2x96xf32>
      %66 = tpu.matmul %65, %16, %cst_67 {dimension_numbers = #tpu.dot_dimension_numbers<[1], [0], [0], [1], [0, 0, 1, 1], [], []>} : vector<2x32xbf16>, vector<32x96xbf16>, vector<2x96xf32> -> vector<2x96xf32>
      %67 = vector.broadcast %20 : vector<1x96xf32> to vector<2x96xf32>
      %68 = arith.addf %66, %67 : vector<2x96xf32>
      %69 = vector.extract_strided_slice %56 {offsets = [0, 0], sizes = [2, 96], strides = [1, 1]} : vector<2x192xf32> to vector<2x96xf32>
      %70 = vector.extract_strided_slice %69 {offsets = [0, 0], sizes = [2, 32], strides = [1, 1]} : vector<2x96xf32> to vector<2x32xf32>
      %71 = vector.extract_strided_slice %64 {offsets = [0, 0], sizes = [2, 32], strides = [1, 1]} : vector<2x96xf32> to vector<2x32xf32>
      %72 = arith.addf %70, %71 : vector<2x32xf32>
      %73 = arith.negf %72 : vector<2x32xf32>
      %74 = math.exp %73 : vector<2x32xf32>
      %cst_68 = arith.constant 1.000000e+00 : f32
      %75 = vector.broadcast %cst_68 : f32 to vector<2x32xf32>
      %76 = arith.addf %75, %74 : vector<2x32xf32>
      %77 = arith.divf %75, %76 : vector<2x32xf32>
      %78 = vector.extract_strided_slice %69 {offsets = [0, 32], sizes = [2, 32], strides = [1, 1]} : vector<2x96xf32> to vector<2x32xf32>
      %79 = vector.extract_strided_slice %64 {offsets = [0, 32], sizes = [2, 32], strides = [1, 1]} : vector<2x96xf32> to vector<2x32xf32>
      %80 = arith.addf %78, %79 : vector<2x32xf32>
      %81 = arith.negf %80 : vector<2x32xf32>
      %82 = math.exp %81 : vector<2x32xf32>
      %cst_69 = arith.constant 1.000000e+00 : f32
      %83 = vector.broadcast %cst_69 : f32 to vector<2x32xf32>
      %84 = arith.addf %83, %82 : vector<2x32xf32>
      %85 = arith.divf %83, %84 : vector<2x32xf32>
      %86 = vector.extract_strided_slice %69 {offsets = [0, 64], sizes = [2, 32], strides = [1, 1]} : vector<2x96xf32> to vector<2x32xf32>
      %87 = vector.extract_strided_slice %64 {offsets = [0, 64], sizes = [2, 32], strides = [1, 1]} : vector<2x96xf32> to vector<2x32xf32>
      %88 = arith.mulf %77, %87 : vector<2x32xf32>
      %89 = arith.addf %86, %88 : vector<2x32xf32>
      %90 = math.tanh %89 : vector<2x32xf32>
      %cst_70 = arith.constant 1.000000e+00 : f32
      %91 = vector.broadcast %cst_70 : f32 to vector<2x32xf32>
      %92 = arith.subf %91, %85 : vector<2x32xf32>
      %93 = arith.mulf %92, %90 : vector<2x32xf32>
      %94 = arith.mulf %85, %arg14 : vector<2x32xf32>
      %95 = arith.addf %93, %94 : vector<2x32xf32>
      %96 = vector.extract_strided_slice %60 {offsets = [0, 96], sizes = [2, 96], strides = [1, 1]} : vector<2x192xf32> to vector<2x96xf32>
      %97 = vector.extract_strided_slice %96 {offsets = [0, 0], sizes = [2, 32], strides = [1, 1]} : vector<2x96xf32> to vector<2x32xf32>
      %98 = vector.extract_strided_slice %68 {offsets = [0, 0], sizes = [2, 32], strides = [1, 1]} : vector<2x96xf32> to vector<2x32xf32>
      %99 = arith.addf %97, %98 : vector<2x32xf32>
      %100 = arith.negf %99 : vector<2x32xf32>
      %101 = math.exp %100 : vector<2x32xf32>
      %cst_71 = arith.constant 1.000000e+00 : f32
      %102 = vector.broadcast %cst_71 : f32 to vector<2x32xf32>
      %103 = arith.addf %102, %101 : vector<2x32xf32>
      %104 = arith.divf %102, %103 : vector<2x32xf32>
      %105 = vector.extract_strided_slice %96 {offsets = [0, 32], sizes = [2, 32], strides = [1, 1]} : vector<2x96xf32> to vector<2x32xf32>
      %106 = vector.extract_strided_slice %68 {offsets = [0, 32], sizes = [2, 32], strides = [1, 1]} : vector<2x96xf32> to vector<2x32xf32>
      %107 = arith.addf %105, %106 : vector<2x32xf32>
      %108 = arith.negf %107 : vector<2x32xf32>
      %109 = math.exp %108 : vector<2x32xf32>
      %cst_72 = arith.constant 1.000000e+00 : f32
      %110 = vector.broadcast %cst_72 : f32 to vector<2x32xf32>
      %111 = arith.addf %110, %109 : vector<2x32xf32>
      %112 = arith.divf %110, %111 : vector<2x32xf32>
      %113 = vector.extract_strided_slice %96 {offsets = [0, 64], sizes = [2, 32], strides = [1, 1]} : vector<2x96xf32> to vector<2x32xf32>
      %114 = vector.extract_strided_slice %68 {offsets = [0, 64], sizes = [2, 32], strides = [1, 1]} : vector<2x96xf32> to vector<2x32xf32>
      %115 = arith.mulf %104, %114 : vector<2x32xf32>
      %116 = arith.addf %113, %115 : vector<2x32xf32>
      %117 = math.tanh %116 : vector<2x32xf32>
      %cst_73 = arith.constant 1.000000e+00 : f32
      %118 = vector.broadcast %cst_73 : f32 to vector<2x32xf32>
      %119 = arith.subf %118, %112 : vector<2x32xf32>
      %120 = arith.mulf %119, %117 : vector<2x32xf32>
      %121 = arith.mulf %112, %arg15 : vector<2x32xf32>
      %122 = arith.addf %120, %121 : vector<2x32xf32>
      %123 = arith.index_cast %arg13 : i32 to index
      %c0_74 = arith.constant 0 : index
      %c0_75 = arith.constant 0 : index
      %124 = vector.load %arg11[%123, %c0_74, %c0_75] : memref<16x2x32xf32, #tpu.memory_space<vmem>>, vector<1x2x32xf32>
      %125 = vector.shape_cast %124 : vector<1x2x32xf32> to vector<2x32xf32>
      %126 = vector.shape_cast %95 : vector<2x32xf32> to vector<1x2x32xf32>
      tpu.vector_store %arg11[%123, %c0_74, %c0_75], %126 {strides = array<i32>} : memref<16x2x32xf32, #tpu.memory_space<vmem>>, vector<1x2x32xf32>,
      %c15_i32_76 = arith.constant 15 : i32
      %127 = arith.subi %c15_i32_76, %arg13 : i32
      %128 = arith.index_cast %127 : i32 to index
      %c0_77 = arith.constant 0 : index
      %c0_78 = arith.constant 0 : index
      %129 = vector.load %arg12[%128, %c0_77, %c0_78] : memref<16x2x32xf32, #tpu.memory_space<vmem>>, vector<1x2x32xf32>
      %130 = vector.shape_cast %129 : vector<1x2x32xf32> to vector<2x32xf32>
      %131 = vector.shape_cast %122 : vector<2x32xf32> to vector<1x2x32xf32>
      tpu.vector_store %arg12[%128, %c0_77, %c0_78], %131 {strides = array<i32>} : memref<16x2x32xf32, #tpu.memory_space<vmem>>, vector<1x2x32xf32>,
      scf.yield %95, %122 : vector<2x32xf32>, vector<2x32xf32>
    }
    %c16_i32_21 = arith.constant 16 : i32
    %c0_22 = arith.constant 0 : index
    %c0_23 = arith.constant 0 : index
    %c0_24 = arith.constant 0 : index
    %24 = vector.load %arg11[%c0_22, %c0_23, %c0_24] : memref<16x2x32xf32, #tpu.memory_space<vmem>>, vector<16x2x32xf32>
    %c0_25 = arith.constant 0 : index
    %c0_26 = arith.constant 0 : index
    %c0_27 = arith.constant 0 : index
    %25 = vector.load %arg12[%c0_25, %c0_26, %c0_27] : memref<16x2x32xf32, #tpu.memory_space<vmem>>, vector<16x2x32xf32>
    %26 = tpu.concatenate %24, %25 in 2 : vector<16x2x32xf32>, vector<16x2x32xf32> -> vector<16x2x64xf32>
    %27 = vector.shape_cast %26 : vector<16x2x64xf32> to vector<32x64xf32>
    %28 = arith.truncf %27 : vector<32x64xf32> to vector<32x64xbf16>
    %c0_28 = arith.constant 0 : index
    %c0_29 = arith.constant 0 : index
    %29 = vector.load %arg5[%c0_28, %c0_29] : memref<64x192xf32, #tpu.memory_space<vmem>>, vector<64x192xf32>
    %30 = arith.truncf %29 : vector<64x192xf32> to vector<64x192xbf16>
    %cst_30 = arith.constant dense<0.000000e+00> : vector<32x192xf32>
    %31 = tpu.matmul %28, %30, %cst_30 {dimension_numbers = #tpu.dot_dimension_numbers<[1], [0], [0], [1], [0, 0, 1, 1], [], []>} : vector<32x64xbf16>, vector<64x192xbf16>, vector<32x192xf32> -> vector<32x192xf32>
    %c0_31 = arith.constant 0 : index
    %c0_32 = arith.constant 0 : index
    %32 = vector.load %arg7[%c0_31, %c0_32] : memref<1x192xf32, #tpu.memory_space<vmem>>, vector<1x192xf32>
    %33 = vector.broadcast %32 : vector<1x192xf32> to vector<32x192xf32>
    %34 = arith.addf %31, %33 : vector<32x192xf32>
    %35 = vector.shape_cast %34 : vector<32x192xf32> to vector<16x2x192xf32>
    %c0_33 = arith.constant 0 : index
    %c0_34 = arith.constant 0 : index
    %c0_35 = arith.constant 0 : index
    %36 = vector.load %arg10[%c0_33, %c0_34, %c0_35] : memref<16x2x192xf32, #tpu.memory_space<vmem>>, vector<16x2x192xf32>
    tpu.vector_store %arg10[%c0_33, %c0_34, %c0_35], %35 {strides = array<i32>} : memref<16x2x192xf32, #tpu.memory_space<vmem>>, vector<16x2x192xf32>,
    %c0_36 = arith.constant 0 : index
    %c0_37 = arith.constant 0 : index
    %c0_38 = arith.constant 0 : index
    %37 = vector.load %arg6[%c0_36, %c0_37, %c0_38] : memref<2x32x96xf32, #tpu.memory_space<vmem>>, vector<1x32x96xf32>
    %38 = vector.shape_cast %37 : vector<1x32x96xf32> to vector<32x96xf32>
    %39 = arith.truncf %38 : vector<32x96xf32> to vector<32x96xbf16>
    %c1_39 = arith.constant 1 : index
    %c0_40 = arith.constant 0 : index
    %c0_41 = arith.constant 0 : index
    %40 = vector.load %arg6[%c1_39, %c0_40, %c0_41] : memref<2x32x96xf32, #tpu.memory_space<vmem>>, vector<1x32x96xf32>
    %41 = vector.shape_cast %40 : vector<1x32x96xf32> to vector<32x96xf32>
    %42 = arith.truncf %41 : vector<32x96xf32> to vector<32x96xbf16>
    %c0_42 = arith.constant 0 : index
    %c0_43 = arith.constant 0 : index
    %c0_44 = arith.constant 0 : index
    %43 = vector.load %arg8[%c0_42, %c0_43, %c0_44] : memref<2x1x96xf32, #tpu.memory_space<vmem>>, vector<1x1x96xf32>
    %44 = vector.shape_cast %43 : vector<1x1x96xf32> to vector<1x96xf32>
    %c1_45 = arith.constant 1 : index
    %c0_46 = arith.constant 0 : index
    %c0_47 = arith.constant 0 : index
    %45 = vector.load %arg8[%c1_45, %c0_46, %c0_47] : memref<2x1x96xf32, #tpu.memory_space<vmem>>, vector<1x1x96xf32>
    %46 = vector.shape_cast %45 : vector<1x1x96xf32> to vector<1x96xf32>
    %cst_48 = arith.constant 0.000000e+00 : f32
    %47 = vector.broadcast %cst_48 : f32 to vector<2x32xf32>
    %c0_i32_49 = arith.constant 0 : i32
    %c16_i32_50 = arith.constant 16 : i32
    %48 = arith.addi %c0_i32_49, %c16_i32_50 : i32
    %c1_i32_51 = arith.constant 1 : i32
    %49:2 = scf.for %arg13 = %c0_i32_49 to %48 step %c1_i32_51 iter_args(%arg14 = %47, %arg15 = %47) -> (vector<2x32xf32>, vector<2x32xf32>)  : i32 {
      %54 = arith.index_cast %arg13 : i32 to index
      %c0_62 = arith.constant 0 : index
      %c0_63 = arith.constant 0 : index
      %55 = vector.load %arg10[%54, %c0_62, %c0_63] : memref<16x2x192xf32, #tpu.memory_space<vmem>>, vector<1x2x192xf32>
      %56 = vector.shape_cast %55 : vector<1x2x192xf32> to vector<2x192xf32>
      %c15_i32 = arith.constant 15 : i32
      %57 = arith.subi %c15_i32, %arg13 : i32
      %58 = arith.index_cast %57 : i32 to index
      %c0_64 = arith.constant 0 : index
      %c0_65 = arith.constant 0 : index
      %59 = vector.load %arg10[%58, %c0_64, %c0_65] : memref<16x2x192xf32, #tpu.memory_space<vmem>>, vector<1x2x192xf32>
      %60 = vector.shape_cast %59 : vector<1x2x192xf32> to vector<2x192xf32>
      %61 = arith.truncf %arg14 : vector<2x32xf32> to vector<2x32xbf16>
      %cst_66 = arith.constant dense<0.000000e+00> : vector<2x96xf32>
      %62 = tpu.matmul %61, %39, %cst_66 {dimension_numbers = #tpu.dot_dimension_numbers<[1], [0], [0], [1], [0, 0, 1, 1], [], []>} : vector<2x32xbf16>, vector<32x96xbf16>, vector<2x96xf32> -> vector<2x96xf32>
      %63 = vector.broadcast %44 : vector<1x96xf32> to vector<2x96xf32>
      %64 = arith.addf %62, %63 : vector<2x96xf32>
      %65 = arith.truncf %arg15 : vector<2x32xf32> to vector<2x32xbf16>
      %cst_67 = arith.constant dense<0.000000e+00> : vector<2x96xf32>
      %66 = tpu.matmul %65, %42, %cst_67 {dimension_numbers = #tpu.dot_dimension_numbers<[1], [0], [0], [1], [0, 0, 1, 1], [], []>} : vector<2x32xbf16>, vector<32x96xbf16>, vector<2x96xf32> -> vector<2x96xf32>
      %67 = vector.broadcast %46 : vector<1x96xf32> to vector<2x96xf32>
      %68 = arith.addf %66, %67 : vector<2x96xf32>
      %69 = vector.extract_strided_slice %56 {offsets = [0, 0], sizes = [2, 96], strides = [1, 1]} : vector<2x192xf32> to vector<2x96xf32>
      %70 = vector.extract_strided_slice %69 {offsets = [0, 0], sizes = [2, 32], strides = [1, 1]} : vector<2x96xf32> to vector<2x32xf32>
      %71 = vector.extract_strided_slice %64 {offsets = [0, 0], sizes = [2, 32], strides = [1, 1]} : vector<2x96xf32> to vector<2x32xf32>
      %72 = arith.addf %70, %71 : vector<2x32xf32>
      %73 = arith.negf %72 : vector<2x32xf32>
      %74 = math.exp %73 : vector<2x32xf32>
      %cst_68 = arith.constant 1.000000e+00 : f32
      %75 = vector.broadcast %cst_68 : f32 to vector<2x32xf32>
      %76 = arith.addf %75, %74 : vector<2x32xf32>
      %77 = arith.divf %75, %76 : vector<2x32xf32>
      %78 = vector.extract_strided_slice %69 {offsets = [0, 32], sizes = [2, 32], strides = [1, 1]} : vector<2x96xf32> to vector<2x32xf32>
      %79 = vector.extract_strided_slice %64 {offsets = [0, 32], sizes = [2, 32], strides = [1, 1]} : vector<2x96xf32> to vector<2x32xf32>
      %80 = arith.addf %78, %79 : vector<2x32xf32>
      %81 = arith.negf %80 : vector<2x32xf32>
      %82 = math.exp %81 : vector<2x32xf32>
      %cst_69 = arith.constant 1.000000e+00 : f32
      %83 = vector.broadcast %cst_69 : f32 to vector<2x32xf32>
      %84 = arith.addf %83, %82 : vector<2x32xf32>
      %85 = arith.divf %83, %84 : vector<2x32xf32>
      %86 = vector.extract_strided_slice %69 {offsets = [0, 64], sizes = [2, 32], strides = [1, 1]} : vector<2x96xf32> to vector<2x32xf32>
      %87 = vector.extract_strided_slice %64 {offsets = [0, 64], sizes = [2, 32], strides = [1, 1]} : vector<2x96xf32> to vector<2x32xf32>
      %88 = arith.mulf %77, %87 : vector<2x32xf32>
      %89 = arith.addf %86, %88 : vector<2x32xf32>
      %90 = math.tanh %89 : vector<2x32xf32>
      %cst_70 = arith.constant 1.000000e+00 : f32
      %91 = vector.broadcast %cst_70 : f32 to vector<2x32xf32>
      %92 = arith.subf %91, %85 : vector<2x32xf32>
      %93 = arith.mulf %92, %90 : vector<2x32xf32>
      %94 = arith.mulf %85, %arg14 : vector<2x32xf32>
      %95 = arith.addf %93, %94 : vector<2x32xf32>
      %96 = vector.extract_strided_slice %60 {offsets = [0, 96], sizes = [2, 96], strides = [1, 1]} : vector<2x192xf32> to vector<2x96xf32>
      %97 = vector.extract_strided_slice %96 {offsets = [0, 0], sizes = [2, 32], strides = [1, 1]} : vector<2x96xf32> to vector<2x32xf32>
      %98 = vector.extract_strided_slice %68 {offsets = [0, 0], sizes = [2, 32], strides = [1, 1]} : vector<2x96xf32> to vector<2x32xf32>
      %99 = arith.addf %97, %98 : vector<2x32xf32>
      %100 = arith.negf %99 : vector<2x32xf32>
      %101 = math.exp %100 : vector<2x32xf32>
      %cst_71 = arith.constant 1.000000e+00 : f32
      %102 = vector.broadcast %cst_71 : f32 to vector<2x32xf32>
      %103 = arith.addf %102, %101 : vector<2x32xf32>
      %104 = arith.divf %102, %103 : vector<2x32xf32>
      %105 = vector.extract_strided_slice %96 {offsets = [0, 32], sizes = [2, 32], strides = [1, 1]} : vector<2x96xf32> to vector<2x32xf32>
      %106 = vector.extract_strided_slice %68 {offsets = [0, 32], sizes = [2, 32], strides = [1, 1]} : vector<2x96xf32> to vector<2x32xf32>
      %107 = arith.addf %105, %106 : vector<2x32xf32>
      %108 = arith.negf %107 : vector<2x32xf32>
      %109 = math.exp %108 : vector<2x32xf32>
      %cst_72 = arith.constant 1.000000e+00 : f32
      %110 = vector.broadcast %cst_72 : f32 to vector<2x32xf32>
      %111 = arith.addf %110, %109 : vector<2x32xf32>
      %112 = arith.divf %110, %111 : vector<2x32xf32>
      %113 = vector.extract_strided_slice %96 {offsets = [0, 64], sizes = [2, 32], strides = [1, 1]} : vector<2x96xf32> to vector<2x32xf32>
      %114 = vector.extract_strided_slice %68 {offsets = [0, 64], sizes = [2, 32], strides = [1, 1]} : vector<2x96xf32> to vector<2x32xf32>
      %115 = arith.mulf %104, %114 : vector<2x32xf32>
      %116 = arith.addf %113, %115 : vector<2x32xf32>
      %117 = math.tanh %116 : vector<2x32xf32>
      %cst_73 = arith.constant 1.000000e+00 : f32
      %118 = vector.broadcast %cst_73 : f32 to vector<2x32xf32>
      %119 = arith.subf %118, %112 : vector<2x32xf32>
      %120 = arith.mulf %119, %117 : vector<2x32xf32>
      %121 = arith.mulf %112, %arg15 : vector<2x32xf32>
      %122 = arith.addf %120, %121 : vector<2x32xf32>
      %123 = arith.index_cast %arg13 : i32 to index
      %c0_74 = arith.constant 0 : index
      %c0_75 = arith.constant 0 : index
      %124 = vector.load %arg11[%123, %c0_74, %c0_75] : memref<16x2x32xf32, #tpu.memory_space<vmem>>, vector<1x2x32xf32>
      %125 = vector.shape_cast %124 : vector<1x2x32xf32> to vector<2x32xf32>
      %126 = vector.shape_cast %95 : vector<2x32xf32> to vector<1x2x32xf32>
      tpu.vector_store %arg11[%123, %c0_74, %c0_75], %126 {strides = array<i32>} : memref<16x2x32xf32, #tpu.memory_space<vmem>>, vector<1x2x32xf32>,
      %c15_i32_76 = arith.constant 15 : i32
      %127 = arith.subi %c15_i32_76, %arg13 : i32
      %128 = arith.index_cast %127 : i32 to index
      %c0_77 = arith.constant 0 : index
      %c0_78 = arith.constant 0 : index
      %129 = vector.load %arg12[%128, %c0_77, %c0_78] : memref<16x2x32xf32, #tpu.memory_space<vmem>>, vector<1x2x32xf32>
      %130 = vector.shape_cast %129 : vector<1x2x32xf32> to vector<2x32xf32>
      %131 = vector.shape_cast %122 : vector<2x32xf32> to vector<1x2x32xf32>
      tpu.vector_store %arg12[%128, %c0_77, %c0_78], %131 {strides = array<i32>} : memref<16x2x32xf32, #tpu.memory_space<vmem>>, vector<1x2x32xf32>,
      scf.yield %95, %122 : vector<2x32xf32>, vector<2x32xf32>
    }
    %c16_i32_52 = arith.constant 16 : i32
    %c0_53 = arith.constant 0 : index
    %c0_54 = arith.constant 0 : index
    %c0_55 = arith.constant 0 : index
    %50 = vector.load %arg11[%c0_53, %c0_54, %c0_55] : memref<16x2x32xf32, #tpu.memory_space<vmem>>, vector<16x2x32xf32>
    %c0_56 = arith.constant 0 : index
    %c0_57 = arith.constant 0 : index
    %c0_58 = arith.constant 0 : index
    %51 = vector.load %arg12[%c0_56, %c0_57, %c0_58] : memref<16x2x32xf32, #tpu.memory_space<vmem>>, vector<16x2x32xf32>
    %52 = tpu.concatenate %50, %51 in 2 : vector<16x2x32xf32>, vector<16x2x32xf32> -> vector<16x2x64xf32>
    %c0_59 = arith.constant 0 : index
    %c0_60 = arith.constant 0 : index
    %c0_61 = arith.constant 0 : index
    %53 = vector.load %arg9[%c0_59, %c0_60, %c0_61] : memref<16x2x64xf32, #tpu.memory_space<vmem>>, vector<16x2x64xf32>
    tpu.vector_store %arg9[%c0_59, %c0_60, %c0_61], %52 {strides = array<i32>} : memref<16x2x64xf32, #tpu.memory_space<vmem>>, vector<16x2x64xf32>,
    return
  }
}

module attributes {stable_mosaic.version = 11 : i64} {
  func.func @_cbhg_main_kernel(%arg0: memref<2x16x32xf32, #tpu.memory_space<vmem>>, %arg1: memref<32x32xf32, #tpu.memory_space<vmem>>, %arg2: memref<64x32xf32, #tpu.memory_space<vmem>>, %arg3: memref<96x32xf32, #tpu.memory_space<vmem>>, %arg4: memref<128x32xf32, #tpu.memory_space<vmem>>, %arg5: memref<4x1x32xf32, #tpu.memory_space<vmem>>, %arg6: memref<4x1x32xf32, #tpu.memory_space<vmem>>, %arg7: memref<4x1x32xf32, #tpu.memory_space<vmem>>, %arg8: memref<384x32xf32, #tpu.memory_space<vmem>>, %arg9: memref<1x32xf32, #tpu.memory_space<vmem>>, %arg10: memref<1x32xf32, #tpu.memory_space<vmem>>, %arg11: memref<1x32xf32, #tpu.memory_space<vmem>>, %arg12: memref<96x32xf32, #tpu.memory_space<vmem>>, %arg13: memref<1x32xf32, #tpu.memory_space<vmem>>, %arg14: memref<1x32xf32, #tpu.memory_space<vmem>>, %arg15: memref<1x32xf32, #tpu.memory_space<vmem>>, %arg16: memref<4x32x64xf32, #tpu.memory_space<vmem>>, %arg17: memref<4x1x64xf32, #tpu.memory_space<vmem>>, %arg18: memref<2x16x32xf32, #tpu.memory_space<vmem>>) attributes {dimension_semantics = [], scalar_prefetch = 0 : i64, scratch_operands = 0 : i64, tpu.core_type = #tpu.core_type<tc>} {
    %c0 = arith.constant 0 : index
    %c0_0 = arith.constant 0 : index
    %c0_1 = arith.constant 0 : index
    %0 = vector.load %arg0[%c0, %c0_0, %c0_1] : memref<2x16x32xf32, #tpu.memory_space<vmem>>, vector<2x16x32xf32>
    %c0_2 = arith.constant 0 : index
    %c0_3 = arith.constant 0 : index
    %1 = vector.load %arg1[%c0_2, %c0_3] : memref<32x32xf32, #tpu.memory_space<vmem>>, vector<32x32xf32>
    %c0_4 = arith.constant 0 : index
    %c0_5 = arith.constant 0 : index
    %c0_6 = arith.constant 0 : index
    %2 = vector.load %arg5[%c0_4, %c0_5, %c0_6] : memref<4x1x32xf32, #tpu.memory_space<vmem>>, vector<1x1x32xf32>
    %3 = vector.shape_cast %2 : vector<1x1x32xf32> to vector<1x32xf32>
    %c0_7 = arith.constant 0 : index
    %c0_8 = arith.constant 0 : index
    %c0_9 = arith.constant 0 : index
    %4 = vector.load %arg6[%c0_7, %c0_8, %c0_9] : memref<4x1x32xf32, #tpu.memory_space<vmem>>, vector<1x1x32xf32>
    %5 = vector.shape_cast %4 : vector<1x1x32xf32> to vector<1x32xf32>
    %c0_10 = arith.constant 0 : index
    %c0_11 = arith.constant 0 : index
    %c0_12 = arith.constant 0 : index
    %6 = vector.load %arg7[%c0_10, %c0_11, %c0_12] : memref<4x1x32xf32, #tpu.memory_space<vmem>>, vector<1x1x32xf32>
    %7 = vector.shape_cast %6 : vector<1x1x32xf32> to vector<1x32xf32>
    %8 = vector.shape_cast %0 : vector<2x16x32xf32> to vector<32x32xf32>
    %9 = arith.truncf %8 : vector<32x32xf32> to vector<32x32xbf16>
    %10 = arith.truncf %1 : vector<32x32xf32> to vector<32x32xbf16>
    %cst = arith.constant dense<0.000000e+00> : vector<32x32xf32>
    %11 = tpu.matmul %9, %10, %cst {dimension_numbers = #tpu.dot_dimension_numbers<[1], [0], [0], [1], [0, 0, 1, 1], [], []>} : vector<32x32xbf16>, vector<32x32xbf16>, vector<32x32xf32> -> vector<32x32xf32>
    %12 = vector.broadcast %3 : vector<1x32xf32> to vector<32x32xf32>
    %13 = arith.addf %11, %12 : vector<32x32xf32>
    %cst_13 = arith.constant dense<0.000000e+00> : vector<32xf32>
    %14 = vector.multi_reduction <add>, %13, %cst_13 [0] : vector<32x32xf32> to vector<32xf32>
    %15 = vector.shape_cast %14 : vector<32xf32> to vector<1x32xf32>
    %cst_14 = arith.constant 3.200000e+01 : f32
    %16 = vector.broadcast %cst_14 : f32 to vector<1x32xf32>
    %17 = arith.divf %15, %16 : vector<1x32xf32>
    %18 = vector.broadcast %17 : vector<1x32xf32> to vector<32x32xf32>
    %19 = arith.subf %13, %18 : vector<32x32xf32>
    %20 = arith.mulf %19, %19 : vector<32x32xf32>
    %cst_15 = arith.constant dense<0.000000e+00> : vector<32xf32>
    %21 = vector.multi_reduction <add>, %20, %cst_15 [0] : vector<32x32xf32> to vector<32xf32>
    %22 = vector.shape_cast %21 : vector<32xf32> to vector<1x32xf32>
    %cst_16 = arith.constant 3.200000e+01 : f32
    %23 = vector.broadcast %cst_16 : f32 to vector<1x32xf32>
    %24 = arith.divf %22, %23 : vector<1x32xf32>
    %25 = vector.broadcast %17 : vector<1x32xf32> to vector<32x32xf32>
    %26 = arith.subf %13, %25 : vector<32x32xf32>
    %cst_17 = arith.constant 9.99999974E-6 : f32
    %27 = vector.broadcast %cst_17 : f32 to vector<1x32xf32>
    %28 = arith.addf %24, %27 : vector<1x32xf32>
    %29 = math.rsqrt %28 : vector<1x32xf32>
    %30 = vector.broadcast %29 : vector<1x32xf32> to vector<32x32xf32>
    %31 = arith.mulf %26, %30 : vector<32x32xf32>
    %32 = vector.broadcast %5 : vector<1x32xf32> to vector<32x32xf32>
    %33 = arith.mulf %31, %32 : vector<32x32xf32>
    %34 = vector.broadcast %7 : vector<1x32xf32> to vector<32x32xf32>
    %35 = arith.addf %33, %34 : vector<32x32xf32>
    %cst_18 = arith.constant 0.000000e+00 : f32
    %36 = vector.broadcast %cst_18 : f32 to vector<32x32xf32>
    %37 = arith.maximumf %35, %36 : vector<32x32xf32>
    %38 = vector.shape_cast %37 : vector<32x32xf32> to vector<2x16x32xf32>
    %c0_19 = arith.constant 0 : index
    %c0_20 = arith.constant 0 : index
    %39 = vector.load %arg2[%c0_19, %c0_20] : memref<64x32xf32, #tpu.memory_space<vmem>>, vector<64x32xf32>
    %c1 = arith.constant 1 : index
    %c0_21 = arith.constant 0 : index
    %c0_22 = arith.constant 0 : index
    %40 = vector.load %arg5[%c1, %c0_21, %c0_22] : memref<4x1x32xf32, #tpu.memory_space<vmem>>, vector<1x1x32xf32>
    %41 = vector.shape_cast %40 : vector<1x1x32xf32> to vector<1x32xf32>
    %c1_23 = arith.constant 1 : index
    %c0_24 = arith.constant 0 : index
    %c0_25 = arith.constant 0 : index
    %42 = vector.load %arg6[%c1_23, %c0_24, %c0_25] : memref<4x1x32xf32, #tpu.memory_space<vmem>>, vector<1x1x32xf32>
    %43 = vector.shape_cast %42 : vector<1x1x32xf32> to vector<1x32xf32>
    %c1_26 = arith.constant 1 : index
    %c0_27 = arith.constant 0 : index
    %c0_28 = arith.constant 0 : index
    %44 = vector.load %arg7[%c1_26, %c0_27, %c0_28] : memref<4x1x32xf32, #tpu.memory_space<vmem>>, vector<1x1x32xf32>
    %45 = vector.shape_cast %44 : vector<1x1x32xf32> to vector<1x32xf32>
    %46 = tpu.iota {dimensions = array<i32: 1>} : vector<2x16x32xi32>
    %c1_i32 = arith.constant 1 : i32
    %47 = tpu.dynamic_rotate %38 by %c1_i32 dim 1 : vector<2x16x32xf32>, i32 -> vector<2x16x32xf32>
    %c-1_i32 = arith.constant -1 : i32
    %48 = vector.broadcast %c-1_i32 : i32 to vector<2x16x32xi32>
    %49 = arith.addi %46, %48 : vector<2x16x32xi32>
    %c0_i32 = arith.constant 0 : i32
    %50 = vector.broadcast %c0_i32 : i32 to vector<2x16x32xi32>
    %51 = arith.cmpi sge, %49, %50 : vector<2x16x32xi32>
    %c-1_i32_29 = arith.constant -1 : i32
    %52 = vector.broadcast %c-1_i32_29 : i32 to vector<2x16x32xi32>
    %53 = arith.addi %46, %52 : vector<2x16x32xi32>
    %c16_i32 = arith.constant 16 : i32
    %54 = vector.broadcast %c16_i32 : i32 to vector<2x16x32xi32>
    %55 = arith.cmpi slt, %53, %54 : vector<2x16x32xi32>
    %56 = arith.andi %51, %55 : vector<2x16x32xi1>
    %cst_30 = arith.constant 0.000000e+00 : f32
    %57 = vector.broadcast %cst_30 : f32 to vector<2x16x32xf32>
    %58 = arith.select %56, %47, %57 : vector<2x16x32xi1>, vector<2x16x32xf32>
    %59 = tpu.concatenate %58, %38 in 2 : vector<2x16x32xf32>, vector<2x16x32xf32> -> vector<2x16x64xf32>
    %60 = vector.shape_cast %59 : vector<2x16x64xf32> to vector<32x64xf32>
    %61 = arith.truncf %60 : vector<32x64xf32> to vector<32x64xbf16>
    %62 = arith.truncf %39 : vector<64x32xf32> to vector<64x32xbf16>
    %cst_31 = arith.constant dense<0.000000e+00> : vector<32x32xf32>
    %63 = tpu.matmul %61, %62, %cst_31 {dimension_numbers = #tpu.dot_dimension_numbers<[1], [0], [0], [1], [0, 0, 1, 1], [], []>} : vector<32x64xbf16>, vector<64x32xbf16>, vector<32x32xf32> -> vector<32x32xf32>
    %64 = vector.broadcast %41 : vector<1x32xf32> to vector<32x32xf32>
    %65 = arith.addf %63, %64 : vector<32x32xf32>
    %cst_32 = arith.constant dense<0.000000e+00> : vector<32xf32>
    %66 = vector.multi_reduction <add>, %65, %cst_32 [0] : vector<32x32xf32> to vector<32xf32>
    %67 = vector.shape_cast %66 : vector<32xf32> to vector<1x32xf32>
    %cst_33 = arith.constant 3.200000e+01 : f32
    %68 = vector.broadcast %cst_33 : f32 to vector<1x32xf32>
    %69 = arith.divf %67, %68 : vector<1x32xf32>
    %70 = vector.broadcast %69 : vector<1x32xf32> to vector<32x32xf32>
    %71 = arith.subf %65, %70 : vector<32x32xf32>
    %72 = arith.mulf %71, %71 : vector<32x32xf32>
    %cst_34 = arith.constant dense<0.000000e+00> : vector<32xf32>
    %73 = vector.multi_reduction <add>, %72, %cst_34 [0] : vector<32x32xf32> to vector<32xf32>
    %74 = vector.shape_cast %73 : vector<32xf32> to vector<1x32xf32>
    %cst_35 = arith.constant 3.200000e+01 : f32
    %75 = vector.broadcast %cst_35 : f32 to vector<1x32xf32>
    %76 = arith.divf %74, %75 : vector<1x32xf32>
    %77 = vector.broadcast %69 : vector<1x32xf32> to vector<32x32xf32>
    %78 = arith.subf %65, %77 : vector<32x32xf32>
    %cst_36 = arith.constant 9.99999974E-6 : f32
    %79 = vector.broadcast %cst_36 : f32 to vector<1x32xf32>
    %80 = arith.addf %76, %79 : vector<1x32xf32>
    %81 = math.rsqrt %80 : vector<1x32xf32>
    %82 = vector.broadcast %81 : vector<1x32xf32> to vector<32x32xf32>
    %83 = arith.mulf %78, %82 : vector<32x32xf32>
    %84 = vector.broadcast %43 : vector<1x32xf32> to vector<32x32xf32>
    %85 = arith.mulf %83, %84 : vector<32x32xf32>
    %86 = vector.broadcast %45 : vector<1x32xf32> to vector<32x32xf32>
    %87 = arith.addf %85, %86 : vector<32x32xf32>
    %cst_37 = arith.constant 0.000000e+00 : f32
    %88 = vector.broadcast %cst_37 : f32 to vector<32x32xf32>
    %89 = arith.maximumf %87, %88 : vector<32x32xf32>
    %90 = vector.shape_cast %89 : vector<32x32xf32> to vector<2x16x32xf32>
    %c0_38 = arith.constant 0 : index
    %c0_39 = arith.constant 0 : index
    %91 = vector.load %arg3[%c0_38, %c0_39] : memref<96x32xf32, #tpu.memory_space<vmem>>, vector<96x32xf32>
    %c2 = arith.constant 2 : index
    %c0_40 = arith.constant 0 : index
    %c0_41 = arith.constant 0 : index
    %92 = vector.load %arg5[%c2, %c0_40, %c0_41] : memref<4x1x32xf32, #tpu.memory_space<vmem>>, vector<1x1x32xf32>
    %93 = vector.shape_cast %92 : vector<1x1x32xf32> to vector<1x32xf32>
    %c2_42 = arith.constant 2 : index
    %c0_43 = arith.constant 0 : index
    %c0_44 = arith.constant 0 : index
    %94 = vector.load %arg6[%c2_42, %c0_43, %c0_44] : memref<4x1x32xf32, #tpu.memory_space<vmem>>, vector<1x1x32xf32>
    %95 = vector.shape_cast %94 : vector<1x1x32xf32> to vector<1x32xf32>
    %c2_45 = arith.constant 2 : index
    %c0_46 = arith.constant 0 : index
    %c0_47 = arith.constant 0 : index
    %96 = vector.load %arg7[%c2_45, %c0_46, %c0_47] : memref<4x1x32xf32, #tpu.memory_space<vmem>>, vector<1x1x32xf32>
    %97 = vector.shape_cast %96 : vector<1x1x32xf32> to vector<1x32xf32>
    %98 = tpu.iota {dimensions = array<i32: 1>} : vector<2x16x32xi32>
    %c1_i32_48 = arith.constant 1 : i32
    %99 = tpu.dynamic_rotate %90 by %c1_i32_48 dim 1 : vector<2x16x32xf32>, i32 -> vector<2x16x32xf32>
    %c-1_i32_49 = arith.constant -1 : i32
    %100 = vector.broadcast %c-1_i32_49 : i32 to vector<2x16x32xi32>
    %101 = arith.addi %98, %100 : vector<2x16x32xi32>
    %c0_i32_50 = arith.constant 0 : i32
    %102 = vector.broadcast %c0_i32_50 : i32 to vector<2x16x32xi32>
    %103 = arith.cmpi sge, %101, %102 : vector<2x16x32xi32>
    %c-1_i32_51 = arith.constant -1 : i32
    %104 = vector.broadcast %c-1_i32_51 : i32 to vector<2x16x32xi32>
    %105 = arith.addi %98, %104 : vector<2x16x32xi32>
    %c16_i32_52 = arith.constant 16 : i32
    %106 = vector.broadcast %c16_i32_52 : i32 to vector<2x16x32xi32>
    %107 = arith.cmpi slt, %105, %106 : vector<2x16x32xi32>
    %108 = arith.andi %103, %107 : vector<2x16x32xi1>
    %cst_53 = arith.constant 0.000000e+00 : f32
    %109 = vector.broadcast %cst_53 : f32 to vector<2x16x32xf32>
    %110 = arith.select %108, %99, %109 : vector<2x16x32xi1>, vector<2x16x32xf32>
    %c15_i32 = arith.constant 15 : i32
    %111 = tpu.dynamic_rotate %90 by %c15_i32 dim 1 : vector<2x16x32xf32>, i32 -> vector<2x16x32xf32>
    %c1_i32_54 = arith.constant 1 : i32
    %112 = vector.broadcast %c1_i32_54 : i32 to vector<2x16x32xi32>
    %113 = arith.addi %98, %112 : vector<2x16x32xi32>
    %c0_i32_55 = arith.constant 0 : i32
    %114 = vector.broadcast %c0_i32_55 : i32 to vector<2x16x32xi32>
    %115 = arith.cmpi sge, %113, %114 : vector<2x16x32xi32>
    %c1_i32_56 = arith.constant 1 : i32
    %116 = vector.broadcast %c1_i32_56 : i32 to vector<2x16x32xi32>
    %117 = arith.addi %98, %116 : vector<2x16x32xi32>
    %c16_i32_57 = arith.constant 16 : i32
    %118 = vector.broadcast %c16_i32_57 : i32 to vector<2x16x32xi32>
    %119 = arith.cmpi slt, %117, %118 : vector<2x16x32xi32>
    %120 = arith.andi %115, %119 : vector<2x16x32xi1>
    %cst_58 = arith.constant 0.000000e+00 : f32
    %121 = vector.broadcast %cst_58 : f32 to vector<2x16x32xf32>
    %122 = arith.select %120, %111, %121 : vector<2x16x32xi1>, vector<2x16x32xf32>
    %123 = tpu.concatenate %110, %90, %122 in 2 : vector<2x16x32xf32>, vector<2x16x32xf32>, vector<2x16x32xf32> -> vector<2x16x96xf32>
    %124 = vector.shape_cast %123 : vector<2x16x96xf32> to vector<32x96xf32>
    %125 = arith.truncf %124 : vector<32x96xf32> to vector<32x96xbf16>
    %126 = arith.truncf %91 : vector<96x32xf32> to vector<96x32xbf16>
    %cst_59 = arith.constant dense<0.000000e+00> : vector<32x32xf32>
    %127 = tpu.matmul %125, %126, %cst_59 {dimension_numbers = #tpu.dot_dimension_numbers<[1], [0], [0], [1], [0, 0, 1, 1], [], []>} : vector<32x96xbf16>, vector<96x32xbf16>, vector<32x32xf32> -> vector<32x32xf32>
    %128 = vector.broadcast %93 : vector<1x32xf32> to vector<32x32xf32>
    %129 = arith.addf %127, %128 : vector<32x32xf32>
    %cst_60 = arith.constant dense<0.000000e+00> : vector<32xf32>
    %130 = vector.multi_reduction <add>, %129, %cst_60 [0] : vector<32x32xf32> to vector<32xf32>
    %131 = vector.shape_cast %130 : vector<32xf32> to vector<1x32xf32>
    %cst_61 = arith.constant 3.200000e+01 : f32
    %132 = vector.broadcast %cst_61 : f32 to vector<1x32xf32>
    %133 = arith.divf %131, %132 : vector<1x32xf32>
    %134 = vector.broadcast %133 : vector<1x32xf32> to vector<32x32xf32>
    %135 = arith.subf %129, %134 : vector<32x32xf32>
    %136 = arith.mulf %135, %135 : vector<32x32xf32>
    %cst_62 = arith.constant dense<0.000000e+00> : vector<32xf32>
    %137 = vector.multi_reduction <add>, %136, %cst_62 [0] : vector<32x32xf32> to vector<32xf32>
    %138 = vector.shape_cast %137 : vector<32xf32> to vector<1x32xf32>
    %cst_63 = arith.constant 3.200000e+01 : f32
    %139 = vector.broadcast %cst_63 : f32 to vector<1x32xf32>
    %140 = arith.divf %138, %139 : vector<1x32xf32>
    %141 = vector.broadcast %133 : vector<1x32xf32> to vector<32x32xf32>
    %142 = arith.subf %129, %141 : vector<32x32xf32>
    %cst_64 = arith.constant 9.99999974E-6 : f32
    %143 = vector.broadcast %cst_64 : f32 to vector<1x32xf32>
    %144 = arith.addf %140, %143 : vector<1x32xf32>
    %145 = math.rsqrt %144 : vector<1x32xf32>
    %146 = vector.broadcast %145 : vector<1x32xf32> to vector<32x32xf32>
    %147 = arith.mulf %142, %146 : vector<32x32xf32>
    %148 = vector.broadcast %95 : vector<1x32xf32> to vector<32x32xf32>
    %149 = arith.mulf %147, %148 : vector<32x32xf32>
    %150 = vector.broadcast %97 : vector<1x32xf32> to vector<32x32xf32>
    %151 = arith.addf %149, %150 : vector<32x32xf32>
    %cst_65 = arith.constant 0.000000e+00 : f32
    %152 = vector.broadcast %cst_65 : f32 to vector<32x32xf32>
    %153 = arith.maximumf %151, %152 : vector<32x32xf32>
    %154 = vector.shape_cast %153 : vector<32x32xf32> to vector<2x16x32xf32>
    %c0_66 = arith.constant 0 : index
    %c0_67 = arith.constant 0 : index
    %155 = vector.load %arg4[%c0_66, %c0_67] : memref<128x32xf32, #tpu.memory_space<vmem>>, vector<128x32xf32>
    %c3 = arith.constant 3 : index
    %c0_68 = arith.constant 0 : index
    %c0_69 = arith.constant 0 : index
    %156 = vector.load %arg5[%c3, %c0_68, %c0_69] : memref<4x1x32xf32, #tpu.memory_space<vmem>>, vector<1x1x32xf32>
    %157 = vector.shape_cast %156 : vector<1x1x32xf32> to vector<1x32xf32>
    %c3_70 = arith.constant 3 : index
    %c0_71 = arith.constant 0 : index
    %c0_72 = arith.constant 0 : index
    %158 = vector.load %arg6[%c3_70, %c0_71, %c0_72] : memref<4x1x32xf32, #tpu.memory_space<vmem>>, vector<1x1x32xf32>
    %159 = vector.shape_cast %158 : vector<1x1x32xf32> to vector<1x32xf32>
    %c3_73 = arith.constant 3 : index
    %c0_74 = arith.constant 0 : index
    %c0_75 = arith.constant 0 : index
    %160 = vector.load %arg7[%c3_73, %c0_74, %c0_75] : memref<4x1x32xf32, #tpu.memory_space<vmem>>, vector<1x1x32xf32>
    %161 = vector.shape_cast %160 : vector<1x1x32xf32> to vector<1x32xf32>
    %162 = tpu.iota {dimensions = array<i32: 1>} : vector<2x16x32xi32>
    %c2_i32 = arith.constant 2 : i32
    %163 = tpu.dynamic_rotate %154 by %c2_i32 dim 1 : vector<2x16x32xf32>, i32 -> vector<2x16x32xf32>
    %c-2_i32 = arith.constant -2 : i32
    %164 = vector.broadcast %c-2_i32 : i32 to vector<2x16x32xi32>
    %165 = arith.addi %162, %164 : vector<2x16x32xi32>
    %c0_i32_76 = arith.constant 0 : i32
    %166 = vector.broadcast %c0_i32_76 : i32 to vector<2x16x32xi32>
    %167 = arith.cmpi sge, %165, %166 : vector<2x16x32xi32>
    %c-2_i32_77 = arith.constant -2 : i32
    %168 = vector.broadcast %c-2_i32_77 : i32 to vector<2x16x32xi32>
    %169 = arith.addi %162, %168 : vector<2x16x32xi32>
    %c16_i32_78 = arith.constant 16 : i32
    %170 = vector.broadcast %c16_i32_78 : i32 to vector<2x16x32xi32>
    %171 = arith.cmpi slt, %169, %170 : vector<2x16x32xi32>
    %172 = arith.andi %167, %171 : vector<2x16x32xi1>
    %cst_79 = arith.constant 0.000000e+00 : f32
    %173 = vector.broadcast %cst_79 : f32 to vector<2x16x32xf32>
    %174 = arith.select %172, %163, %173 : vector<2x16x32xi1>, vector<2x16x32xf32>
    %c1_i32_80 = arith.constant 1 : i32
    %175 = tpu.dynamic_rotate %154 by %c1_i32_80 dim 1 : vector<2x16x32xf32>, i32 -> vector<2x16x32xf32>
    %c-1_i32_81 = arith.constant -1 : i32
    %176 = vector.broadcast %c-1_i32_81 : i32 to vector<2x16x32xi32>
    %177 = arith.addi %162, %176 : vector<2x16x32xi32>
    %c0_i32_82 = arith.constant 0 : i32
    %178 = vector.broadcast %c0_i32_82 : i32 to vector<2x16x32xi32>
    %179 = arith.cmpi sge, %177, %178 : vector<2x16x32xi32>
    %c-1_i32_83 = arith.constant -1 : i32
    %180 = vector.broadcast %c-1_i32_83 : i32 to vector<2x16x32xi32>
    %181 = arith.addi %162, %180 : vector<2x16x32xi32>
    %c16_i32_84 = arith.constant 16 : i32
    %182 = vector.broadcast %c16_i32_84 : i32 to vector<2x16x32xi32>
    %183 = arith.cmpi slt, %181, %182 : vector<2x16x32xi32>
    %184 = arith.andi %179, %183 : vector<2x16x32xi1>
    %cst_85 = arith.constant 0.000000e+00 : f32
    %185 = vector.broadcast %cst_85 : f32 to vector<2x16x32xf32>
    %186 = arith.select %184, %175, %185 : vector<2x16x32xi1>, vector<2x16x32xf32>
    %c15_i32_86 = arith.constant 15 : i32
    %187 = tpu.dynamic_rotate %154 by %c15_i32_86 dim 1 : vector<2x16x32xf32>, i32 -> vector<2x16x32xf32>
    %c1_i32_87 = arith.constant 1 : i32
    %188 = vector.broadcast %c1_i32_87 : i32 to vector<2x16x32xi32>
    %189 = arith.addi %162, %188 : vector<2x16x32xi32>
    %c0_i32_88 = arith.constant 0 : i32
    %190 = vector.broadcast %c0_i32_88 : i32 to vector<2x16x32xi32>
    %191 = arith.cmpi sge, %189, %190 : vector<2x16x32xi32>
    %c1_i32_89 = arith.constant 1 : i32
    %192 = vector.broadcast %c1_i32_89 : i32 to vector<2x16x32xi32>
    %193 = arith.addi %162, %192 : vector<2x16x32xi32>
    %c16_i32_90 = arith.constant 16 : i32
    %194 = vector.broadcast %c16_i32_90 : i32 to vector<2x16x32xi32>
    %195 = arith.cmpi slt, %193, %194 : vector<2x16x32xi32>
    %196 = arith.andi %191, %195 : vector<2x16x32xi1>
    %cst_91 = arith.constant 0.000000e+00 : f32
    %197 = vector.broadcast %cst_91 : f32 to vector<2x16x32xf32>
    %198 = arith.select %196, %187, %197 : vector<2x16x32xi1>, vector<2x16x32xf32>
    %199 = tpu.concatenate %174, %186, %154, %198 in 2 : vector<2x16x32xf32>, vector<2x16x32xf32>, vector<2x16x32xf32>, vector<2x16x32xf32> -> vector<2x16x128xf32>
    %200 = vector.shape_cast %199 : vector<2x16x128xf32> to vector<32x128xf32>
    %201 = arith.truncf %200 : vector<32x128xf32> to vector<32x128xbf16>
    %202 = arith.truncf %155 : vector<128x32xf32> to vector<128x32xbf16>
    %cst_92 = arith.constant dense<0.000000e+00> : vector<32x32xf32>
    %203 = tpu.matmul %201, %202, %cst_92 {dimension_numbers = #tpu.dot_dimension_numbers<[1], [0], [0], [1], [0, 0, 1, 1], [], []>} : vector<32x128xbf16>, vector<128x32xbf16>, vector<32x32xf32> -> vector<32x32xf32>
    %204 = vector.broadcast %157 : vector<1x32xf32> to vector<32x32xf32>
    %205 = arith.addf %203, %204 : vector<32x32xf32>
    %cst_93 = arith.constant dense<0.000000e+00> : vector<32xf32>
    %206 = vector.multi_reduction <add>, %205, %cst_93 [0] : vector<32x32xf32> to vector<32xf32>
    %207 = vector.shape_cast %206 : vector<32xf32> to vector<1x32xf32>
    %cst_94 = arith.constant 3.200000e+01 : f32
    %208 = vector.broadcast %cst_94 : f32 to vector<1x32xf32>
    %209 = arith.divf %207, %208 : vector<1x32xf32>
    %210 = vector.broadcast %209 : vector<1x32xf32> to vector<32x32xf32>
    %211 = arith.subf %205, %210 : vector<32x32xf32>
    %212 = arith.mulf %211, %211 : vector<32x32xf32>
    %cst_95 = arith.constant dense<0.000000e+00> : vector<32xf32>
    %213 = vector.multi_reduction <add>, %212, %cst_95 [0] : vector<32x32xf32> to vector<32xf32>
    %214 = vector.shape_cast %213 : vector<32xf32> to vector<1x32xf32>
    %cst_96 = arith.constant 3.200000e+01 : f32
    %215 = vector.broadcast %cst_96 : f32 to vector<1x32xf32>
    %216 = arith.divf %214, %215 : vector<1x32xf32>
    %217 = vector.broadcast %209 : vector<1x32xf32> to vector<32x32xf32>
    %218 = arith.subf %205, %217 : vector<32x32xf32>
    %cst_97 = arith.constant 9.99999974E-6 : f32
    %219 = vector.broadcast %cst_97 : f32 to vector<1x32xf32>
    %220 = arith.addf %216, %219 : vector<1x32xf32>
    %221 = math.rsqrt %220 : vector<1x32xf32>
    %222 = vector.broadcast %221 : vector<1x32xf32> to vector<32x32xf32>
    %223 = arith.mulf %218, %222 : vector<32x32xf32>
    %224 = vector.broadcast %159 : vector<1x32xf32> to vector<32x32xf32>
    %225 = arith.mulf %223, %224 : vector<32x32xf32>
    %226 = vector.broadcast %161 : vector<1x32xf32> to vector<32x32xf32>
    %227 = arith.addf %225, %226 : vector<32x32xf32>
    %cst_98 = arith.constant 0.000000e+00 : f32
    %228 = vector.broadcast %cst_98 : f32 to vector<32x32xf32>
    %229 = arith.maximumf %227, %228 : vector<32x32xf32>
    %230 = vector.shape_cast %229 : vector<32x32xf32> to vector<2x16x32xf32>
    %231 = tpu.concatenate %38, %90, %154, %230 in 2 : vector<2x16x32xf32>, vector<2x16x32xf32>, vector<2x16x32xf32>, vector<2x16x32xf32> -> vector<2x16x128xf32>
    %232 = tpu.iota {dimensions = array<i32: 1>} : vector<2x16x128xi32>
    %c0_i32_99 = arith.constant 0 : i32
    %233 = vector.broadcast %c0_i32_99 : i32 to vector<2x16x128xi32>
    %234 = arith.cmpi eq, %232, %233 : vector<2x16x128xi32>
    %c1_i32_100 = arith.constant 1 : i32
    %235 = tpu.dynamic_rotate %231 by %c1_i32_100 dim 1 : vector<2x16x128xf32>, i32 -> vector<2x16x128xf32>
    %236 = arith.select %234, %231, %235 : vector<2x16x128xi1>, vector<2x16x128xf32>
    %237 = arith.maximumf %231, %236 : vector<2x16x128xf32>
    %c0_101 = arith.constant 0 : index
    %c0_102 = arith.constant 0 : index
    %238 = vector.load %arg8[%c0_101, %c0_102] : memref<384x32xf32, #tpu.memory_space<vmem>>, vector<384x32xf32>
    %c0_103 = arith.constant 0 : index
    %c0_104 = arith.constant 0 : index
    %239 = vector.load %arg9[%c0_103, %c0_104] : memref<1x32xf32, #tpu.memory_space<vmem>>, vector<1x32xf32>
    %c0_105 = arith.constant 0 : index
    %c0_106 = arith.constant 0 : index
    %240 = vector.load %arg10[%c0_105, %c0_106] : memref<1x32xf32, #tpu.memory_space<vmem>>, vector<1x32xf32>
    %c0_107 = arith.constant 0 : index
    %c0_108 = arith.constant 0 : index
    %241 = vector.load %arg11[%c0_107, %c0_108] : memref<1x32xf32, #tpu.memory_space<vmem>>, vector<1x32xf32>
    %242 = tpu.iota {dimensions = array<i32: 1>} : vector<2x16x128xi32>
    %c1_i32_109 = arith.constant 1 : i32
    %243 = tpu.dynamic_rotate %237 by %c1_i32_109 dim 1 : vector<2x16x128xf32>, i32 -> vector<2x16x128xf32>
    %c-1_i32_110 = arith.constant -1 : i32
    %244 = vector.broadcast %c-1_i32_110 : i32 to vector<2x16x128xi32>
    %245 = arith.addi %242, %244 : vector<2x16x128xi32>
    %c0_i32_111 = arith.constant 0 : i32
    %246 = vector.broadcast %c0_i32_111 : i32 to vector<2x16x128xi32>
    %247 = arith.cmpi sge, %245, %246 : vector<2x16x128xi32>
    %c-1_i32_112 = arith.constant -1 : i32
    %248 = vector.broadcast %c-1_i32_112 : i32 to vector<2x16x128xi32>
    %249 = arith.addi %242, %248 : vector<2x16x128xi32>
    %c16_i32_113 = arith.constant 16 : i32
    %250 = vector.broadcast %c16_i32_113 : i32 to vector<2x16x128xi32>
    %251 = arith.cmpi slt, %249, %250 : vector<2x16x128xi32>
    %252 = arith.andi %247, %251 : vector<2x16x128xi1>
    %cst_114 = arith.constant 0.000000e+00 : f32
    %253 = vector.broadcast %cst_114 : f32 to vector<2x16x128xf32>
    %254 = arith.select %252, %243, %253 : vector<2x16x128xi1>, vector<2x16x128xf32>
    %c15_i32_115 = arith.constant 15 : i32
    %255 = tpu.dynamic_rotate %237 by %c15_i32_115 dim 1 : vector<2x16x128xf32>, i32 -> vector<2x16x128xf32>
    %c1_i32_116 = arith.constant 1 : i32
    %256 = vector.broadcast %c1_i32_116 : i32 to vector<2x16x128xi32>
    %257 = arith.addi %242, %256 : vector<2x16x128xi32>
    %c0_i32_117 = arith.constant 0 : i32
    %258 = vector.broadcast %c0_i32_117 : i32 to vector<2x16x128xi32>
    %259 = arith.cmpi sge, %257, %258 : vector<2x16x128xi32>
    %c1_i32_118 = arith.constant 1 : i32
    %260 = vector.broadcast %c1_i32_118 : i32 to vector<2x16x128xi32>
    %261 = arith.addi %242, %260 : vector<2x16x128xi32>
    %c16_i32_119 = arith.constant 16 : i32
    %262 = vector.broadcast %c16_i32_119 : i32 to vector<2x16x128xi32>
    %263 = arith.cmpi slt, %261, %262 : vector<2x16x128xi32>
    %264 = arith.andi %259, %263 : vector<2x16x128xi1>
    %cst_120 = arith.constant 0.000000e+00 : f32
    %265 = vector.broadcast %cst_120 : f32 to vector<2x16x128xf32>
    %266 = arith.select %264, %255, %265 : vector<2x16x128xi1>, vector<2x16x128xf32>
    %267 = tpu.concatenate %254, %237, %266 in 2 : vector<2x16x128xf32>, vector<2x16x128xf32>, vector<2x16x128xf32> -> vector<2x16x384xf32>
    %268 = vector.shape_cast %267 : vector<2x16x384xf32> to vector<32x384xf32>
    %269 = arith.truncf %268 : vector<32x384xf32> to vector<32x384xbf16>
    %270 = arith.truncf %238 : vector<384x32xf32> to vector<384x32xbf16>
    %cst_121 = arith.constant dense<0.000000e+00> : vector<32x32xf32>
    %271 = tpu.matmul %269, %270, %cst_121 {dimension_numbers = #tpu.dot_dimension_numbers<[1], [0], [0], [1], [0, 0, 1, 1], [], []>} : vector<32x384xbf16>, vector<384x32xbf16>, vector<32x32xf32> -> vector<32x32xf32>
    %272 = vector.broadcast %239 : vector<1x32xf32> to vector<32x32xf32>
    %273 = arith.addf %271, %272 : vector<32x32xf32>
    %cst_122 = arith.constant dense<0.000000e+00> : vector<32xf32>
    %274 = vector.multi_reduction <add>, %273, %cst_122 [0] : vector<32x32xf32> to vector<32xf32>
    %275 = vector.shape_cast %274 : vector<32xf32> to vector<1x32xf32>
    %cst_123 = arith.constant 3.200000e+01 : f32
    %276 = vector.broadcast %cst_123 : f32 to vector<1x32xf32>
    %277 = arith.divf %275, %276 : vector<1x32xf32>
    %278 = vector.broadcast %277 : vector<1x32xf32> to vector<32x32xf32>
    %279 = arith.subf %273, %278 : vector<32x32xf32>
    %280 = arith.mulf %279, %279 : vector<32x32xf32>
    %cst_124 = arith.constant dense<0.000000e+00> : vector<32xf32>
    %281 = vector.multi_reduction <add>, %280, %cst_124 [0] : vector<32x32xf32> to vector<32xf32>
    %282 = vector.shape_cast %281 : vector<32xf32> to vector<1x32xf32>
    %cst_125 = arith.constant 3.200000e+01 : f32
    %283 = vector.broadcast %cst_125 : f32 to vector<1x32xf32>
    %284 = arith.divf %282, %283 : vector<1x32xf32>
    %285 = vector.broadcast %277 : vector<1x32xf32> to vector<32x32xf32>
    %286 = arith.subf %273, %285 : vector<32x32xf32>
    %cst_126 = arith.constant 9.99999974E-6 : f32
    %287 = vector.broadcast %cst_126 : f32 to vector<1x32xf32>
    %288 = arith.addf %284, %287 : vector<1x32xf32>
    %289 = math.rsqrt %288 : vector<1x32xf32>
    %290 = vector.broadcast %289 : vector<1x32xf32> to vector<32x32xf32>
    %291 = arith.mulf %286, %290 : vector<32x32xf32>
    %292 = vector.broadcast %240 : vector<1x32xf32> to vector<32x32xf32>
    %293 = arith.mulf %291, %292 : vector<32x32xf32>
    %294 = vector.broadcast %241 : vector<1x32xf32> to vector<32x32xf32>
    %295 = arith.addf %293, %294 : vector<32x32xf32>
    %cst_127 = arith.constant 0.000000e+00 : f32
    %296 = vector.broadcast %cst_127 : f32 to vector<32x32xf32>
    %297 = arith.maximumf %295, %296 : vector<32x32xf32>
    %298 = vector.shape_cast %297 : vector<32x32xf32> to vector<2x16x32xf32>
    %c0_128 = arith.constant 0 : index
    %c0_129 = arith.constant 0 : index
    %299 = vector.load %arg12[%c0_128, %c0_129] : memref<96x32xf32, #tpu.memory_space<vmem>>, vector<96x32xf32>
    %c0_130 = arith.constant 0 : index
    %c0_131 = arith.constant 0 : index
    %300 = vector.load %arg13[%c0_130, %c0_131] : memref<1x32xf32, #tpu.memory_space<vmem>>, vector<1x32xf32>
    %c0_132 = arith.constant 0 : index
    %c0_133 = arith.constant 0 : index
    %301 = vector.load %arg14[%c0_132, %c0_133] : memref<1x32xf32, #tpu.memory_space<vmem>>, vector<1x32xf32>
    %c0_134 = arith.constant 0 : index
    %c0_135 = arith.constant 0 : index
    %302 = vector.load %arg15[%c0_134, %c0_135] : memref<1x32xf32, #tpu.memory_space<vmem>>, vector<1x32xf32>
    %303 = tpu.iota {dimensions = array<i32: 1>} : vector<2x16x32xi32>
    %c1_i32_136 = arith.constant 1 : i32
    %304 = tpu.dynamic_rotate %298 by %c1_i32_136 dim 1 : vector<2x16x32xf32>, i32 -> vector<2x16x32xf32>
    %c-1_i32_137 = arith.constant -1 : i32
    %305 = vector.broadcast %c-1_i32_137 : i32 to vector<2x16x32xi32>
    %306 = arith.addi %303, %305 : vector<2x16x32xi32>
    %c0_i32_138 = arith.constant 0 : i32
    %307 = vector.broadcast %c0_i32_138 : i32 to vector<2x16x32xi32>
    %308 = arith.cmpi sge, %306, %307 : vector<2x16x32xi32>
    %c-1_i32_139 = arith.constant -1 : i32
    %309 = vector.broadcast %c-1_i32_139 : i32 to vector<2x16x32xi32>
    %310 = arith.addi %303, %309 : vector<2x16x32xi32>
    %c16_i32_140 = arith.constant 16 : i32
    %311 = vector.broadcast %c16_i32_140 : i32 to vector<2x16x32xi32>
    %312 = arith.cmpi slt, %310, %311 : vector<2x16x32xi32>
    %313 = arith.andi %308, %312 : vector<2x16x32xi1>
    %cst_141 = arith.constant 0.000000e+00 : f32
    %314 = vector.broadcast %cst_141 : f32 to vector<2x16x32xf32>
    %315 = arith.select %313, %304, %314 : vector<2x16x32xi1>, vector<2x16x32xf32>
    %c15_i32_142 = arith.constant 15 : i32
    %316 = tpu.dynamic_rotate %298 by %c15_i32_142 dim 1 : vector<2x16x32xf32>, i32 -> vector<2x16x32xf32>
    %c1_i32_143 = arith.constant 1 : i32
    %317 = vector.broadcast %c1_i32_143 : i32 to vector<2x16x32xi32>
    %318 = arith.addi %303, %317 : vector<2x16x32xi32>
    %c0_i32_144 = arith.constant 0 : i32
    %319 = vector.broadcast %c0_i32_144 : i32 to vector<2x16x32xi32>
    %320 = arith.cmpi sge, %318, %319 : vector<2x16x32xi32>
    %c1_i32_145 = arith.constant 1 : i32
    %321 = vector.broadcast %c1_i32_145 : i32 to vector<2x16x32xi32>
    %322 = arith.addi %303, %321 : vector<2x16x32xi32>
    %c16_i32_146 = arith.constant 16 : i32
    %323 = vector.broadcast %c16_i32_146 : i32 to vector<2x16x32xi32>
    %324 = arith.cmpi slt, %322, %323 : vector<2x16x32xi32>
    %325 = arith.andi %320, %324 : vector<2x16x32xi1>
    %cst_147 = arith.constant 0.000000e+00 : f32
    %326 = vector.broadcast %cst_147 : f32 to vector<2x16x32xf32>
    %327 = arith.select %325, %316, %326 : vector<2x16x32xi1>, vector<2x16x32xf32>
    %328 = tpu.concatenate %315, %298, %327 in 2 : vector<2x16x32xf32>, vector<2x16x32xf32>, vector<2x16x32xf32> -> vector<2x16x96xf32>
    %329 = vector.shape_cast %328 : vector<2x16x96xf32> to vector<32x96xf32>
    %330 = arith.truncf %329 : vector<32x96xf32> to vector<32x96xbf16>
    %331 = arith.truncf %299 : vector<96x32xf32> to vector<96x32xbf16>
    %cst_148 = arith.constant dense<0.000000e+00> : vector<32x32xf32>
    %332 = tpu.matmul %330, %331, %cst_148 {dimension_numbers = #tpu.dot_dimension_numbers<[1], [0], [0], [1], [0, 0, 1, 1], [], []>} : vector<32x96xbf16>, vector<96x32xbf16>, vector<32x32xf32> -> vector<32x32xf32>
    %333 = vector.broadcast %300 : vector<1x32xf32> to vector<32x32xf32>
    %334 = arith.addf %332, %333 : vector<32x32xf32>
    %cst_149 = arith.constant dense<0.000000e+00> : vector<32xf32>
    %335 = vector.multi_reduction <add>, %334, %cst_149 [0] : vector<32x32xf32> to vector<32xf32>
    %336 = vector.shape_cast %335 : vector<32xf32> to vector<1x32xf32>
    %cst_150 = arith.constant 3.200000e+01 : f32
    %337 = vector.broadcast %cst_150 : f32 to vector<1x32xf32>
    %338 = arith.divf %336, %337 : vector<1x32xf32>
    %339 = vector.broadcast %338 : vector<1x32xf32> to vector<32x32xf32>
    %340 = arith.subf %334, %339 : vector<32x32xf32>
    %341 = arith.mulf %340, %340 : vector<32x32xf32>
    %cst_151 = arith.constant dense<0.000000e+00> : vector<32xf32>
    %342 = vector.multi_reduction <add>, %341, %cst_151 [0] : vector<32x32xf32> to vector<32xf32>
    %343 = vector.shape_cast %342 : vector<32xf32> to vector<1x32xf32>
    %cst_152 = arith.constant 3.200000e+01 : f32
    %344 = vector.broadcast %cst_152 : f32 to vector<1x32xf32>
    %345 = arith.divf %343, %344 : vector<1x32xf32>
    %346 = vector.broadcast %338 : vector<1x32xf32> to vector<32x32xf32>
    %347 = arith.subf %334, %346 : vector<32x32xf32>
    %cst_153 = arith.constant 9.99999974E-6 : f32
    %348 = vector.broadcast %cst_153 : f32 to vector<1x32xf32>
    %349 = arith.addf %345, %348 : vector<1x32xf32>
    %350 = math.rsqrt %349 : vector<1x32xf32>
    %351 = vector.broadcast %350 : vector<1x32xf32> to vector<32x32xf32>
    %352 = arith.mulf %347, %351 : vector<32x32xf32>
    %353 = vector.broadcast %301 : vector<1x32xf32> to vector<32x32xf32>
    %354 = arith.mulf %352, %353 : vector<32x32xf32>
    %355 = vector.broadcast %302 : vector<1x32xf32> to vector<32x32xf32>
    %356 = arith.addf %354, %355 : vector<32x32xf32>
    %357 = vector.shape_cast %356 : vector<32x32xf32> to vector<2x16x32xf32>
    %358 = arith.addf %357, %0 : vector<2x16x32xf32>
    %359 = vector.shape_cast %358 : vector<2x16x32xf32> to vector<32x32xf32>
    %360 = arith.truncf %359 : vector<32x32xf32> to vector<32x32xbf16>
    %c0_154 = arith.constant 0 : index
    %c0_155 = arith.constant 0 : index
    %c0_156 = arith.constant 0 : index
    %361 = vector.load %arg16[%c0_154, %c0_155, %c0_156] : memref<4x32x64xf32, #tpu.memory_space<vmem>>, vector<1x32x64xf32>
    %362 = vector.shape_cast %361 : vector<1x32x64xf32> to vector<32x64xf32>
    %363 = arith.truncf %362 : vector<32x64xf32> to vector<32x64xbf16>
    %cst_157 = arith.constant dense<0.000000e+00> : vector<32x64xf32>
    %364 = tpu.matmul %360, %363, %cst_157 {dimension_numbers = #tpu.dot_dimension_numbers<[1], [0], [0], [1], [0, 0, 1, 1], [], []>} : vector<32x32xbf16>, vector<32x64xbf16>, vector<32x64xf32> -> vector<32x64xf32>
    %c0_158 = arith.constant 0 : index
    %c0_159 = arith.constant 0 : index
    %c0_160 = arith.constant 0 : index
    %365 = vector.load %arg17[%c0_158, %c0_159, %c0_160] : memref<4x1x64xf32, #tpu.memory_space<vmem>>, vector<1x1x64xf32>
    %366 = vector.shape_cast %365 : vector<1x1x64xf32> to vector<1x64xf32>
    %367 = vector.broadcast %366 : vector<1x64xf32> to vector<32x64xf32>
    %368 = arith.addf %364, %367 : vector<32x64xf32>
    %369 = vector.extract_strided_slice %368 {offsets = [0, 0], sizes = [32, 32], strides = [1, 1]} : vector<32x64xf32> to vector<32x32xf32>
    %cst_161 = arith.constant 0.000000e+00 : f32
    %370 = vector.broadcast %cst_161 : f32 to vector<32x32xf32>
    %371 = arith.maximumf %369, %370 : vector<32x32xf32>
    %372 = vector.extract_strided_slice %368 {offsets = [0, 32], sizes = [32, 32], strides = [1, 1]} : vector<32x64xf32> to vector<32x32xf32>
    %373 = arith.negf %372 : vector<32x32xf32>
    %374 = math.exp %373 : vector<32x32xf32>
    %cst_162 = arith.constant 1.000000e+00 : f32
    %375 = vector.broadcast %cst_162 : f32 to vector<32x32xf32>
    %376 = arith.addf %375, %374 : vector<32x32xf32>
    %377 = arith.divf %375, %376 : vector<32x32xf32>
    %378 = arith.mulf %371, %377 : vector<32x32xf32>
    %cst_163 = arith.constant 1.000000e+00 : f32
    %379 = vector.broadcast %cst_163 : f32 to vector<32x32xf32>
    %380 = arith.subf %379, %377 : vector<32x32xf32>
    %381 = arith.mulf %359, %380 : vector<32x32xf32>
    %382 = arith.addf %378, %381 : vector<32x32xf32>
    %383 = arith.truncf %382 : vector<32x32xf32> to vector<32x32xbf16>
    %c1_164 = arith.constant 1 : index
    %c0_165 = arith.constant 0 : index
    %c0_166 = arith.constant 0 : index
    %384 = vector.load %arg16[%c1_164, %c0_165, %c0_166] : memref<4x32x64xf32, #tpu.memory_space<vmem>>, vector<1x32x64xf32>
    %385 = vector.shape_cast %384 : vector<1x32x64xf32> to vector<32x64xf32>
    %386 = arith.truncf %385 : vector<32x64xf32> to vector<32x64xbf16>
    %cst_167 = arith.constant dense<0.000000e+00> : vector<32x64xf32>
    %387 = tpu.matmul %383, %386, %cst_167 {dimension_numbers = #tpu.dot_dimension_numbers<[1], [0], [0], [1], [0, 0, 1, 1], [], []>} : vector<32x32xbf16>, vector<32x64xbf16>, vector<32x64xf32> -> vector<32x64xf32>
    %c1_168 = arith.constant 1 : index
    %c0_169 = arith.constant 0 : index
    %c0_170 = arith.constant 0 : index
    %388 = vector.load %arg17[%c1_168, %c0_169, %c0_170] : memref<4x1x64xf32, #tpu.memory_space<vmem>>, vector<1x1x64xf32>
    %389 = vector.shape_cast %388 : vector<1x1x64xf32> to vector<1x64xf32>
    %390 = vector.broadcast %389 : vector<1x64xf32> to vector<32x64xf32>
    %391 = arith.addf %387, %390 : vector<32x64xf32>
    %392 = vector.extract_strided_slice %391 {offsets = [0, 0], sizes = [32, 32], strides = [1, 1]} : vector<32x64xf32> to vector<32x32xf32>
    %cst_171 = arith.constant 0.000000e+00 : f32
    %393 = vector.broadcast %cst_171 : f32 to vector<32x32xf32>
    %394 = arith.maximumf %392, %393 : vector<32x32xf32>
    %395 = vector.extract_strided_slice %391 {offsets = [0, 32], sizes = [32, 32], strides = [1, 1]} : vector<32x64xf32> to vector<32x32xf32>
    %396 = arith.negf %395 : vector<32x32xf32>
    %397 = math.exp %396 : vector<32x32xf32>
    %cst_172 = arith.constant 1.000000e+00 : f32
    %398 = vector.broadcast %cst_172 : f32 to vector<32x32xf32>
    %399 = arith.addf %398, %397 : vector<32x32xf32>
    %400 = arith.divf %398, %399 : vector<32x32xf32>
    %401 = arith.mulf %394, %400 : vector<32x32xf32>
    %cst_173 = arith.constant 1.000000e+00 : f32
    %402 = vector.broadcast %cst_173 : f32 to vector<32x32xf32>
    %403 = arith.subf %402, %400 : vector<32x32xf32>
    %404 = arith.mulf %382, %403 : vector<32x32xf32>
    %405 = arith.addf %401, %404 : vector<32x32xf32>
    %406 = arith.truncf %405 : vector<32x32xf32> to vector<32x32xbf16>
    %c2_174 = arith.constant 2 : index
    %c0_175 = arith.constant 0 : index
    %c0_176 = arith.constant 0 : index
    %407 = vector.load %arg16[%c2_174, %c0_175, %c0_176] : memref<4x32x64xf32, #tpu.memory_space<vmem>>, vector<1x32x64xf32>
    %408 = vector.shape_cast %407 : vector<1x32x64xf32> to vector<32x64xf32>
    %409 = arith.truncf %408 : vector<32x64xf32> to vector<32x64xbf16>
    %cst_177 = arith.constant dense<0.000000e+00> : vector<32x64xf32>
    %410 = tpu.matmul %406, %409, %cst_177 {dimension_numbers = #tpu.dot_dimension_numbers<[1], [0], [0], [1], [0, 0, 1, 1], [], []>} : vector<32x32xbf16>, vector<32x64xbf16>, vector<32x64xf32> -> vector<32x64xf32>
    %c2_178 = arith.constant 2 : index
    %c0_179 = arith.constant 0 : index
    %c0_180 = arith.constant 0 : index
    %411 = vector.load %arg17[%c2_178, %c0_179, %c0_180] : memref<4x1x64xf32, #tpu.memory_space<vmem>>, vector<1x1x64xf32>
    %412 = vector.shape_cast %411 : vector<1x1x64xf32> to vector<1x64xf32>
    %413 = vector.broadcast %412 : vector<1x64xf32> to vector<32x64xf32>
    %414 = arith.addf %410, %413 : vector<32x64xf32>
    %415 = vector.extract_strided_slice %414 {offsets = [0, 0], sizes = [32, 32], strides = [1, 1]} : vector<32x64xf32> to vector<32x32xf32>
    %cst_181 = arith.constant 0.000000e+00 : f32
    %416 = vector.broadcast %cst_181 : f32 to vector<32x32xf32>
    %417 = arith.maximumf %415, %416 : vector<32x32xf32>
    %418 = vector.extract_strided_slice %414 {offsets = [0, 32], sizes = [32, 32], strides = [1, 1]} : vector<32x64xf32> to vector<32x32xf32>
    %419 = arith.negf %418 : vector<32x32xf32>
    %420 = math.exp %419 : vector<32x32xf32>
    %cst_182 = arith.constant 1.000000e+00 : f32
    %421 = vector.broadcast %cst_182 : f32 to vector<32x32xf32>
    %422 = arith.addf %421, %420 : vector<32x32xf32>
    %423 = arith.divf %421, %422 : vector<32x32xf32>
    %424 = arith.mulf %417, %423 : vector<32x32xf32>
    %cst_183 = arith.constant 1.000000e+00 : f32
    %425 = vector.broadcast %cst_183 : f32 to vector<32x32xf32>
    %426 = arith.subf %425, %423 : vector<32x32xf32>
    %427 = arith.mulf %405, %426 : vector<32x32xf32>
    %428 = arith.addf %424, %427 : vector<32x32xf32>
    %429 = arith.truncf %428 : vector<32x32xf32> to vector<32x32xbf16>
    %c3_184 = arith.constant 3 : index
    %c0_185 = arith.constant 0 : index
    %c0_186 = arith.constant 0 : index
    %430 = vector.load %arg16[%c3_184, %c0_185, %c0_186] : memref<4x32x64xf32, #tpu.memory_space<vmem>>, vector<1x32x64xf32>
    %431 = vector.shape_cast %430 : vector<1x32x64xf32> to vector<32x64xf32>
    %432 = arith.truncf %431 : vector<32x64xf32> to vector<32x64xbf16>
    %cst_187 = arith.constant dense<0.000000e+00> : vector<32x64xf32>
    %433 = tpu.matmul %429, %432, %cst_187 {dimension_numbers = #tpu.dot_dimension_numbers<[1], [0], [0], [1], [0, 0, 1, 1], [], []>} : vector<32x32xbf16>, vector<32x64xbf16>, vector<32x64xf32> -> vector<32x64xf32>
    %c3_188 = arith.constant 3 : index
    %c0_189 = arith.constant 0 : index
    %c0_190 = arith.constant 0 : index
    %434 = vector.load %arg17[%c3_188, %c0_189, %c0_190] : memref<4x1x64xf32, #tpu.memory_space<vmem>>, vector<1x1x64xf32>
    %435 = vector.shape_cast %434 : vector<1x1x64xf32> to vector<1x64xf32>
    %436 = vector.broadcast %435 : vector<1x64xf32> to vector<32x64xf32>
    %437 = arith.addf %433, %436 : vector<32x64xf32>
    %438 = vector.extract_strided_slice %437 {offsets = [0, 0], sizes = [32, 32], strides = [1, 1]} : vector<32x64xf32> to vector<32x32xf32>
    %cst_191 = arith.constant 0.000000e+00 : f32
    %439 = vector.broadcast %cst_191 : f32 to vector<32x32xf32>
    %440 = arith.maximumf %438, %439 : vector<32x32xf32>
    %441 = vector.extract_strided_slice %437 {offsets = [0, 32], sizes = [32, 32], strides = [1, 1]} : vector<32x64xf32> to vector<32x32xf32>
    %442 = arith.negf %441 : vector<32x32xf32>
    %443 = math.exp %442 : vector<32x32xf32>
    %cst_192 = arith.constant 1.000000e+00 : f32
    %444 = vector.broadcast %cst_192 : f32 to vector<32x32xf32>
    %445 = arith.addf %444, %443 : vector<32x32xf32>
    %446 = arith.divf %444, %445 : vector<32x32xf32>
    %447 = arith.mulf %440, %446 : vector<32x32xf32>
    %cst_193 = arith.constant 1.000000e+00 : f32
    %448 = vector.broadcast %cst_193 : f32 to vector<32x32xf32>
    %449 = arith.subf %448, %446 : vector<32x32xf32>
    %450 = arith.mulf %428, %449 : vector<32x32xf32>
    %451 = arith.addf %447, %450 : vector<32x32xf32>
    %452 = vector.shape_cast %451 : vector<32x32xf32> to vector<2x16x32xf32>
    %c0_194 = arith.constant 0 : index
    %c0_195 = arith.constant 0 : index
    %c0_196 = arith.constant 0 : index
    %453 = vector.load %arg18[%c0_194, %c0_195, %c0_196] : memref<2x16x32xf32, #tpu.memory_space<vmem>>, vector<2x16x32xf32>
    tpu.vector_store %arg18[%c0_194, %c0_195, %c0_196], %452 {strides = array<i32>} : memref<2x16x32xf32, #tpu.memory_space<vmem>>, vector<2x16x32xf32>,
    return
  }
}

</mosaic_0001>

<llo_original>
// kernel: cbhg_forward.3
$region0: #{cbhg_forward.3}
  #allocation0 [shape = 'u32[]', space=smem, size = 0x4, offset = 0x4, fixed_abs, tag = 'smem constant byte address 0x4 - core index']
  #allocation1 [shape = 'u32[144,128]{1,0:T(1,128)}', space=vmem, size = 0x12000, scoped, tag = 'internal scratch']
  #allocation2 [shape = 'f32[16,2,192]{2,1,0:T(2,128)}', space=vmem, size = 0x8000, scoped, tag = 'scratch operand']
  #allocation3 [shape = 'f32[16,2,32]{2,1,0:T(2,128)}', space=vmem, size = 0x4000, scoped, tag = 'scratch operand']
  #allocation4 [shape = 'f32[16,2,32]{2,1,0:T(2,128)}', space=vmem, size = 0x4000, scoped, tag = 'scratch operand']
  %s0 = inlined_call_operand.vmem [shape: f32[16,2,32], index: 0, kind: input, shape index: {}]
  %s1 = inlined_call_operand.vmem [shape: f32[32,192], index: 1, kind: input, shape index: {}]
  %s2 = inlined_call_operand.vmem [shape: f32[2,32,96], index: 2, kind: input, shape index: {}]
  %s3 = inlined_call_operand.vmem [shape: f32[1,192], index: 3, kind: input, shape index: {}]
  %s4 = inlined_call_operand.vmem [shape: f32[2,1,96], index: 4, kind: input, shape index: {}]
  %s5 = inlined_call_operand.vmem [shape: f32[64,192], index: 5, kind: input, shape index: {}]
  %s6 = inlined_call_operand.vmem [shape: f32[2,32,96], index: 6, kind: input, shape index: {}]
  %s7 = inlined_call_operand.vmem [shape: f32[1,192], index: 7, kind: input, shape index: {}]
  %s8 = inlined_call_operand.vmem [shape: f32[2,1,96], index: 8, kind: input, shape index: {}]
  %s9 = inlined_call_operand.vmem [shape: f32[16,2,64], index: 9, kind: output, shape index: {}]
  %s10 = sld [smem:[#allocation0]]
  $region60: #{cbhg_forward.3} parent=0
    _
  %s12 = ssub.s32 1, %s10
  %s13 = scalar_select 0, %s12, %s10
  // Predicated region
  $region2: #{cbhg_forward.3} parent=0 // pred_check
    _
  $region3: #{cbhg_forward.3} parent=0 // pred_check_branch
    %15 = sbr.rel (0) target = $region5
  $region4: #{cbhg_forward.3} parent=0 // pred_region
    _
  $region5: #{cbhg_forward.3} parent=0 // pred_fallthru
    _
  // Predicated region
  $region6: #{cbhg_forward.3} parent=0 // pred_check
    _
  $region7: #{cbhg_forward.3} parent=0 // pred_check_branch
    %17 = sbr.rel (0) target = $region9
  $region8: #{cbhg_forward.3} parent=0 // pred_region
    _
  $region9: #{cbhg_forward.3} parent=0 // pred_fallthru
    _
  // Predicated region
  $region10: #{cbhg_forward.3} parent=0 // pred_check
    _
  $region11: #{cbhg_forward.3} parent=0 // pred_check_branch
    %19 = sbr.rel (0) target = $region13
  $region12: #{cbhg_forward.3} parent=0 // pred_region
    _
  $region13: #{cbhg_forward.3} parent=0 // pred_fallthru
    _
  // Predicated region
  $region14: #{cbhg_forward.3} parent=0 // pred_check
    _
  $region15: #{cbhg_forward.3} parent=0 // pred_check_branch
    %21 = sbr.rel (0) target = $region17
  $region16: #{cbhg_forward.3} parent=0 // pred_region
    _
  $region17: #{cbhg_forward.3} parent=0 // pred_fallthru
    _
  // Predicated region
  $region18: #{cbhg_forward.3} parent=0 // pred_check
    _
  $region19: #{cbhg_forward.3} parent=0 // pred_check_branch
    %23 = sbr.rel (0) target = $region21
  $region20: #{cbhg_forward.3} parent=0 // pred_region
    _
  $region21: #{cbhg_forward.3} parent=0 // pred_fallthru
    _
  // Predicated region
  $region22: #{cbhg_forward.3} parent=0 // pred_check
    _
  $region23: #{cbhg_forward.3} parent=0 // pred_check_branch
    %25 = sbr.rel (0) target = $region25
  $region24: #{cbhg_forward.3} parent=0 // pred_region
    _
  $region25: #{cbhg_forward.3} parent=0 // pred_fallthru
    _
  // Predicated region
  $region26: #{cbhg_forward.3} parent=0 // pred_check
    _
  $region27: #{cbhg_forward.3} parent=0 // pred_check_branch
    %27 = sbr.rel (0) target = $region29
  $region28: #{cbhg_forward.3} parent=0 // pred_region
    _
  $region29: #{cbhg_forward.3} parent=0 // pred_fallthru
    _
  // Predicated region
  $region30: #{cbhg_forward.3} parent=0 // pred_check
    _
  $region31: #{cbhg_forward.3} parent=0 // pred_check_branch
    %29 = sbr.rel (0) target = $region33
  $region32: #{cbhg_forward.3} parent=0 // pred_region
    _
  $region33: #{cbhg_forward.3} parent=0 // pred_fallthru
    _
  // Predicated region
  $region34: #{cbhg_forward.3} parent=0 // pred_check
    _
  $region35: #{cbhg_forward.3} parent=0 // pred_check_branch
    %31 = sbr.rel (0) target = $region37
  $region36: #{cbhg_forward.3} parent=0 // pred_region
    _
  $region37: #{cbhg_forward.3} parent=0 // pred_fallthru
    _
  %v33 = vld [vmem:[%s0] sm:$0x3]
  %v34 = vld [vmem:[%s0 + $0x2] sm:$0x3]
  %v35 = vld [vmem:[%s0 + $0x4] sm:$0x3]
  %v36 = vld [vmem:[%s0 + $0x6] sm:$0x3]
  %v37 = vld [vmem:[%s0 + $0x8] sm:$0x3]
  %v38 = vld [vmem:[%s0 + $0xa] sm:$0x3]
  %v39 = vld [vmem:[%s0 + $0xc] sm:$0x3]
  %v40 = vld [vmem:[%s0 + $0xe] sm:$0x3]
  %v41 = vld [vmem:[%s0 + $0x10] sm:$0x3]
  %v42 = vld [vmem:[%s0 + $0x12] sm:$0x3]
  %v43 = vld [vmem:[%s0 + $0x14] sm:$0x3]
  %v44 = vld [vmem:[%s0 + $0x16] sm:$0x3]
  %v45 = vld [vmem:[%s0 + $0x18] sm:$0x3]
  %v46 = vld [vmem:[%s0 + $0x1a] sm:$0x3]
  %v47 = vld [vmem:[%s0 + $0x1c] sm:$0x3]
  %v48 = vld [vmem:[%s0 + $0x1e] sm:$0x3]
  %v65 = vcombine.low %v33, %v34
  %v66 = vcombine.low %v35, %v36
  %v68 = vunpack.c.l.s4 1983009808
  %v69 = vunpack.c.0.s8 %v68
  %v70 = vlaneseq
  %v71 = vshrl.u32 %v70, 7
  %v72 = vsub.s32 %v69, %v71
  %v73 = vrot.slane %v65, %v72
  %v75 = vunpack.c.l.s4 1983009808
  %v76 = vunpack.c.0.s8 %v75
  %v77 = vlaneseq
  %v78 = vshrl.u32 %v77, 7
  %v79 = vsub.s32 %v76, %v78
  %v80 = vrot.slane %v66, %v79
  %v81 = vcombine.low %v73, %v80
  %v82 = vcombine.low %v37, %v38
  %v83 = vcombine.low %v39, %v40
  %v85 = vunpack.c.l.s4 1983009808
  %v86 = vunpack.c.0.s8 %v85
  %v87 = vlaneseq
  %v88 = vshrl.u32 %v87, 7
  %v89 = vsub.s32 %v86, %v88
  %v90 = vrot.slane %v82, %v89
  %v92 = vunpack.c.l.s4 1983009808
  %v93 = vunpack.c.0.s8 %v92
  %v94 = vlaneseq
  %v95 = vshrl.u32 %v94, 7
  %v96 = vsub.s32 %v93, %v95
  %v97 = vrot.slane %v83, %v96
  %v98 = vcombine.low %v90, %v97
  %v99 = vcombine.low %v41, %v42
  %v100 = vcombine.low %v43, %v44
  %v102 = vunpack.c.l.s4 1983009808
  %v103 = vunpack.c.0.s8 %v102
  %v104 = vlaneseq
  %v105 = vshrl.u32 %v104, 7
  %v106 = vsub.s32 %v103, %v105
  %v107 = vrot.slane %v99, %v106
  %v109 = vunpack.c.l.s4 1983009808
  %v110 = vunpack.c.0.s8 %v109
  %v111 = vlaneseq
  %v112 = vshrl.u32 %v111, 7
  %v113 = vsub.s32 %v110, %v112
  %v114 = vrot.slane %v100, %v113
  %v115 = vcombine.low %v107, %v114
  %v116 = vcombine.low %v45, %v46
  %v117 = vcombine.low %v47, %v48
  %v119 = vunpack.c.l.s4 1983009808
  %v120 = vunpack.c.0.s8 %v119
  %v121 = vlaneseq
  %v122 = vshrl.u32 %v121, 7
  %v123 = vsub.s32 %v120, %v122
  %v124 = vrot.slane %v116, %v123
  %v126 = vunpack.c.l.s4 1983009808
  %v127 = vunpack.c.0.s8 %v126
  %v128 = vlaneseq
  %v129 = vshrl.u32 %v128, 7
  %v130 = vsub.s32 %v127, %v129
  %v131 = vrot.slane %v117, %v130
  %v132 = vcombine.low %v124, %v131
  %v137 = vpack.c.bf16 %v98, %v81
  %v138 = vpack.c.bf16 %v132, %v115
  %v139 = vld [vmem:[%s1] sm:$0xff]
  %v140 = vld [vmem:[%s1 + $0x8] sm:$0xff]
  %v141 = vld [vmem:[%s1 + $0x10] sm:$0xff]
  %v142 = vld [vmem:[%s1 + $0x18] sm:$0xff]
  %v143 = vld [vmem:[%s1 + $0x20] sm:$0xff]
  %v144 = vld [vmem:[%s1 + $0x28] sm:$0xff]
  %v145 = vld [vmem:[%s1 + $0x30] sm:$0xff]
  %v146 = vld [vmem:[%s1 + $0x38] sm:$0xff]
  %v147 = vpack.c.bf16 %v141, %v139
  %v148 = vpack.c.bf16 %v142, %v140
  %v149 = vpack.c.bf16 %v145, %v143
  %v150 = vpack.c.bf16 %v146, %v144
  %v151 = vld [vmem:[%s3] sm:$0x3]
  %v153 = vlaneseq
  %v154 = vshrl.u32 %v153, 7
  %v155 = vsub.s32 0, %v154
  %v156 = vrot.slane %v151, %v155
  %v157 = vlaneseq
  %v158 = vshrl.u32 %v157, 7
  %v159 = vsub.s32 1, %v158
  %v160 = vrot.slane %v151, %v159
  %vm163 = vcmask 261120
  %v165 = vsel %vm163, %v137, 0
  %v168 = vsel %vm163, %v138, 0
  %170 = vmatprep.subr.bf16.mxu0 %v148
  %171 = vmatpush1.bf16.msra.mxu0 %v147
  %172 = vmatprep.subr.bf16.mxu0 %v150
  %173 = vmatpush1.bf16.msra.mxu0 %v149
  %174 = vmatprep.subr.bf16.mxu0 0
  %175 = vmatpush1.bf16.msra.mxu0 0
  %176 = vmatprep.subr.bf16.mxu0 0
  %177 = vmatpush1.bf16.msra.mxu0 0
  %178 = vmatprep.subr.bf16.mxu0 0
  %179 = vmatpush1.bf16.msra.mxu0 0
  %180 = vmatprep.subr.bf16.mxu0 0
  %181 = vmatpush1.bf16.msra.mxu0 0
  %182 = vmatprep.subr.bf16.mxu0 0
  %183 = vmatpush1.bf16.msra.mxu0 0
  %184 = vmatprep.subr.bf16.mxu0 0
  %185 = vmatpush1.bf16.msra.mxu0 0
  %186 = vmatprep.subr.bf16.mxu0 0
  %187 = vmatpush1.bf16.msra.mxu0 0
  %188 = vmatprep.subr.bf16.mxu0 0
  %189 = vmatpush1.bf16.msra.mxu0 0
  %190 = vmatprep.subr.bf16.mxu0 0
  %191 = vmatpush1.bf16.msra.mxu0 0
  %192 = vmatprep.subr.bf16.mxu0 0
  %193 = vmatpush1.bf16.msra.mxu0 0
  %194 = vmatprep.subr.bf16.mxu0 0
  %195 = vmatpush1.bf16.msra.mxu0 0
  %196 = vmatprep.subr.bf16.mxu0 0
  %197 = vmatpush1.bf16.msra.mxu0 0
  %198 = vmatprep.subr.bf16.mxu0 0
  %199 = vmatpush1.bf16.msra.mxu0 0
  %200 = vmatprep.subr.bf16.mxu0 0
  %201 = vmatpush1.bf16.msra.mxu0 0
  %202 = vmatprep.mubr.bf16.mxu0 0
  %203 = vmatmul.mubr.bf16.gmra.mrb[0].mxu0 %v165
  %v204 = vpop.f32.mrb[0].mxu0
  %v205 = vadd.f32 %v156, %v204
  %v206 = vpop.f32.mrb[0].mxu0
  %v207 = vadd.f32 %v160, %v206
  %v208 = vpop.f32.mrb[0].mxu0
  %v209 = vadd.f32 %v156, %v208
  %v210 = vpop.f32.mrb[0].mxu0
  %v211 = vadd.f32 %v160, %v210
  %212 = vmatprep.mubr.bf16.mxu0 0
  %213 = vmatmul.mubr.bf16.gmra.mrb[0].mxu0 %v168
  %v214 = vpop.f32.mrb[0].mxu0
  %v215 = vadd.f32 %v156, %v214
  %v216 = vpop.f32.mrb[0].mxu0
  %v217 = vadd.f32 %v160, %v216
  %v218 = vpop.f32.mrb[0].mxu0
  %v219 = vadd.f32 %v156, %v218
  %v220 = vpop.f32.mrb[0].mxu0
  %v221 = vadd.f32 %v160, %v220
  %222 = vdwg.mxu0
  %v231 = vcombine.low %v205, %v207
  %v232 = vcombine.high %v205, %v207
  %v234 = vunpack.c.l.s4 1983009808
  %v235 = vunpack.c.0.s8 %v234
  %v236 = vlaneseq
  %v237 = vshrl.u32 %v236, 7
  %v238 = vsub.s32 %v235, %v237
  %v239 = vrot.slane %v231, %v238
  %v241 = vunpack.c.l.s4 1983009808
  %v242 = vunpack.c.0.s8 %v241
  %v243 = vlaneseq
  %v244 = vshrl.u32 %v243, 7
  %v245 = vsub.s32 %v242, %v244
  %v246 = vrot.slane %v232, %v245
  %v247 = vcombine.high %v239, %v239
  %v248 = vcombine.high %v246, %v246
  %v249 = vcombine.low %v209, %v211
  %v250 = vcombine.high %v209, %v211
  %v252 = vunpack.c.l.s4 1983009808
  %v253 = vunpack.c.0.s8 %v252
  %v254 = vlaneseq
  %v255 = vshrl.u32 %v254, 7
  %v256 = vsub.s32 %v253, %v255
  %v257 = vrot.slane %v249, %v256
  %v259 = vunpack.c.l.s4 1983009808
  %v260 = vunpack.c.0.s8 %v259
  %v261 = vlaneseq
  %v262 = vshrl.u32 %v261, 7
  %v263 = vsub.s32 %v260, %v262
  %v264 = vrot.slane %v250, %v263
  %v265 = vcombine.high %v257, %v257
  %v266 = vcombine.high %v264, %v264
  %v267 = vcombine.low %v215, %v217
  %v268 = vcombine.high %v215, %v217
  %v270 = vunpack.c.l.s4 1983009808
  %v271 = vunpack.c.0.s8 %v270
  %v272 = vlaneseq
  %v273 = vshrl.u32 %v272, 7
  %v274 = vsub.s32 %v271, %v273
  %v275 = vrot.slane %v267, %v274
  %v277 = vunpack.c.l.s4 1983009808
  %v278 = vunpack.c.0.s8 %v277
  %v279 = vlaneseq
  %v280 = vshrl.u32 %v279, 7
  %v281 = vsub.s32 %v278, %v280
  %v282 = vrot.slane %v268, %v281
  %v283 = vcombine.high %v275, %v275
  %v284 = vcombine.high %v282, %v282
  %v285 = vcombine.low %v219, %v221
  %v286 = vcombine.high %v219, %v221
  %v288 = vunpack.c.l.s4 1983009808
  %v289 = vunpack.c.0.s8 %v288
  %v290 = vlaneseq
  %v291 = vshrl.u32 %v290, 7
  %v292 = vsub.s32 %v289, %v291
  %v293 = vrot.slane %v285, %v292
  %v295 = vunpack.c.l.s4 1983009808
  %v296 = vunpack.c.0.s8 %v295
  %v297 = vlaneseq
  %v298 = vshrl.u32 %v297, 7
  %v299 = vsub.s32 %v296, %v298
  %v300 = vrot.slane %v286, %v299
  %v301 = vcombine.high %v293, %v293
  %v302 = vcombine.high %v300, %v300
  %vm319 = vcmask 1041408
  %vm320 = vcmask 519170
  %vm321 = vmor %vm320, %vm319
  %322 = vst.msk [vmem:[#allocation2] sm:$0xf] %vm321, %v239
  %323 = vst.msk [vmem:[#allocation2 + $0x4] sm:$0xf] %vm321, %v247
  %324 = vst.msk [vmem:[#allocation2 + $0x8] sm:$0xf] %vm321, %v246
  %325 = vst.msk [vmem:[#allocation2 + $0xc] sm:$0xf] %vm321, %v248
  %326 = vst.msk [vmem:[#allocation2 + $0x10] sm:$0xf] %vm321, %v257
  %327 = vst.msk [vmem:[#allocation2 + $0x14] sm:$0xf] %vm321, %v265
  %328 = vst.msk [vmem:[#allocation2 + $0x18] sm:$0xf] %vm321, %v264
  %329 = vst.msk [vmem:[#allocation2 + $0x1c] sm:$0xf] %vm321, %v266
  %330 = vst.msk [vmem:[#allocation2 + $0x20] sm:$0xf] %vm321, %v275
  %331 = vst.msk [vmem:[#allocation2 + $0x24] sm:$0xf] %vm321, %v283
  %332 = vst.msk [vmem:[#allocation2 + $0x28] sm:$0xf] %vm321, %v282
  %333 = vst.msk [vmem:[#allocation2 + $0x2c] sm:$0xf] %vm321, %v284
  %334 = vst.msk [vmem:[#allocation2 + $0x30] sm:$0xf] %vm321, %v293
  %335 = vst.msk [vmem:[#allocation2 + $0x34] sm:$0xf] %vm321, %v301
  %336 = vst.msk [vmem:[#allocation2 + $0x38] sm:$0xf] %vm321, %v300
  %337 = vst.msk [vmem:[#allocation2 + $0x3c] sm:$0xf] %vm321, %v302
  %v338 = vld [vmem:[%s2] sm:$0xff]
  %v339 = vld [vmem:[%s2 + $0x8] sm:$0xff]
  %v340 = vld [vmem:[%s2 + $0x10] sm:$0xff]
  %v341 = vld [vmem:[%s2 + $0x18] sm:$0xff]
  %v342 = vpack.c.bf16 %v339, %v338
  %v343 = vpack.c.bf16 %v341, %v340
  %s344 = scalar_lea.vmem %s2, 32
  %v345 = vld [vmem:[%s344] sm:$0xff]
  %v346 = vld [vmem:[%s344 + $0x8] sm:$0xff]
  %v347 = vld [vmem:[%s344 + $0x10] sm:$0xff]
  %v348 = vld [vmem:[%s344 + $0x18] sm:$0xff]
  %v349 = vpack.c.bf16 %v346, %v345
  %v350 = vpack.c.bf16 %v348, %v347
  %v351 = vld [vmem:[%s4] sm:$0x1]
  %s352 = scalar_lea.vmem %s4, 1
  %v353 = vld [vmem:[%s352] sm:$0x1]
  loop: start=0, step=1, limit=16
  $region38: #{cbhg_forward.3} parent=0 // loop_pre_header
    _
  $region39: #{cbhg_forward.3} parent=0 // loop_header
    %s355 = sphi 0, %s359
    %p356 = scmp.ge.s32.totalorder %s355, 16
    %v360 = vphi 0.0, %v506
    %v361 = vphi 0.0, %v552
  $region40: #{cbhg_forward.3} parent=0 // loop_header_branch
    %358 = sbr.rel (%p356) target = $region44
  $region41: #{cbhg_forward.3} parent=0 // loop_body
    %s362 = smul.u32 %s355, 2
    %s363 = smul.addr %s362, 2
    %s364 = scalar_lea.vmem [#allocation2], %s363
    %v365 = vld [vmem:[%s364] sm:$0xf]
    %s366 = ssub.s32 15, %s355
    %s367 = smul.u32 %s366, 2
    %s368 = smul.addr %s367, 2
    %s369 = scalar_lea.vmem [#allocation2], %s368
    %v370 = vld [vmem:[%s369] sm:$0xf]
    %v371 = vpack.c.bf16 %v360, %v360
    %v373 = vlaneseq
    %v374 = vshrl.u32 %v373, 7
    %v375 = vsub.s32 0, %v374
    %v376 = vrot.slane %v351, %v375
    %379 = vrot.lane.b32.xlu0 %v371, 96
    %v380 = vpop.permute.xlu0 %379
    %v382 = vsel %vm163, %v380, 0
    %384 = vmatprep.subr.bf16.mxu0 0
    %385 = vmatpush1.bf16.msra.mxu0 %v342
    %386 = vmatprep.subr.bf16.mxu0 0
    %387 = vmatpush1.bf16.msra.mxu0 %v343
    %388 = vmatprep.subr.bf16.mxu0 0
    %389 = vmatpush1.bf16.msra.mxu0 0
    %390 = vmatprep.subr.bf16.mxu0 0
    %391 = vmatpush1.bf16.msra.mxu0 0
    %392 = vmatprep.subr.bf16.mxu0 0
    %393 = vmatpush1.bf16.msra.mxu0 0
    %394 = vmatprep.subr.bf16.mxu0 0
    %395 = vmatpush1.bf16.msra.mxu0 0
    %396 = vmatprep.subr.bf16.mxu0 0
    %397 = vmatpush1.bf16.msra.mxu0 0
    %398 = vmatprep.subr.bf16.mxu0 0
    %399 = vmatpush1.bf16.msra.mxu0 0
    %400 = vmatprep.subr.bf16.mxu0 0
    %401 = vmatpush1.bf16.msra.mxu0 0
    %402 = vmatprep.subr.bf16.mxu0 0
    %403 = vmatpush1.bf16.msra.mxu0 0
    %404 = vmatprep.subr.bf16.mxu0 0
    %405 = vmatpush1.bf16.msra.mxu0 0
    %406 = vmatprep.subr.bf16.mxu0 0
    %407 = vmatpush1.bf16.msra.mxu0 0
    %408 = vmatprep.subr.bf16.mxu0 0
    %409 = vmatpush1.bf16.msra.mxu0 0
    %410 = vmatprep.subr.bf16.mxu0 0
    %411 = vmatpush1.bf16.msra.mxu0 0
    %412 = vmatprep.subr.bf16.mxu0 0
    %413 = vmatpush1.bf16.msra.mxu0 0
    %414 = vmatprep.subr.bf16.mxu0 0
    %415 = vmatpush1.bf16.msra.mxu0 0
    %416 = vmatprep.mubr.bf16.mxu0 0
    %417 = vmatmul.mubr.bf16.gmra.mrb[0].mxu0 %v382
    %v418 = vpop.f32.mrb[0].mxu0
    %v419 = vadd.f32 %v376, %v418
    %v420 = vpop.f32.mrb[0].mxu0
    %v421 = vpop.f32.mrb[0].mxu0
    %v422 = vpop.f32.mrb[0].mxu0
    %423 = vdwg.mxu0
    %v424 = vpack.c.bf16 %v361, %v361
    %v426 = vlaneseq
    %v427 = vshrl.u32 %v426, 7
    %v428 = vsub.s32 0, %v427
    %v429 = vrot.slane %v353, %v428
    %v432 = vsel %vm163, %v424, 0
    %434 = vmatprep.subr.bf16.mxu0 0
    %435 = vmatpush1.bf16.msra.mxu0 %v349
    %436 = vmatprep.subr.bf16.mxu0 0
    %437 = vmatpush1.bf16.msra.mxu0 %v350
    %438 = vmatprep.subr.bf16.mxu0 0
    %439 = vmatpush1.bf16.msra.mxu0 0
    %440 = vmatprep.subr.bf16.mxu0 0
    %441 = vmatpush1.bf16.msra.mxu0 0
    %442 = vmatprep.subr.bf16.mxu0 0
    %443 = vmatpush1.bf16.msra.mxu0 0
    %444 = vmatprep.subr.bf16.mxu0 0
    %445 = vmatpush1.bf16.msra.mxu0 0
    %446 = vmatprep.subr.bf16.mxu0 0
    %447 = vmatpush1.bf16.msra.mxu0 0
    %448 = vmatprep.subr.bf16.mxu0 0
    %449 = vmatpush1.bf16.msra.mxu0 0
    %450 = vmatprep.subr.bf16.mxu0 0
    %451 = vmatpush1.bf16.msra.mxu0 0
    %452 = vmatprep.subr.bf16.mxu0 0
    %453 = vmatpush1.bf16.msra.mxu0 0
    %454 = vmatprep.subr.bf16.mxu0 0
    %455 = vmatpush1.bf16.msra.mxu0 0
    %456 = vmatprep.subr.bf16.mxu0 0
    %457 = vmatpush1.bf16.msra.mxu0 0
    %458 = vmatprep.subr.bf16.mxu0 0
    %459 = vmatpush1.bf16.msra.mxu0 0
    %460 = vmatprep.subr.bf16.mxu0 0
    %461 = vmatpush1.bf16.msra.mxu0 0
    %462 = vmatprep.subr.bf16.mxu0 0
    %463 = vmatpush1.bf16.msra.mxu0 0
    %464 = vmatprep.subr.bf16.mxu0 0
    %465 = vmatpush1.bf16.msra.mxu0 0
    %466 = vmatprep.mubr.bf16.mxu0 0
    %467 = vmatmul.mubr.bf16.gmra.mrb[0].mxu0 %v432
    %v468 = vpop.f32.mrb[0].mxu0
    %v469 = vadd.f32 %v429, %v468
    %v470 = vpop.f32.mrb[0].mxu0
    %v471 = vpop.f32.mrb[0].mxu0
    %v472 = vpop.f32.mrb[0].mxu0
    %473 = vdwg.mxu0
    %v474 = vadd.f32 %v365, %v419
    %v475 = vxor.u32 %v474, 2147483648
    %v476 = vmul.f32 %v475, 1.442695
    %v477 = vpow.pop %v476
    %v478 = vadd.f32 %v477, 1.0
    %v479 = vrcp.pop %v478
    %v480 = vmul.f32 1.0, %v479
    %v483 = vunpack.c.l.s4 1983009808
    %v484 = vunpack.c.0.s8 %v483
    %v485 = vlaneseq
    %v486 = vshrl.u32 %v485, 7
    %v487 = vsub.s32 %v484, %v486
    %v488 = vrot.slane %v419, %v487
    %489 = vrot.lane.b32.xlu0 %v488, 64
    %v490 = vpop.permute.xlu0 %489
    %v492 = vmul.f32 %v480, %v490
    %494 = vrot.lane.b32.xlu0 %v492, 64
    %v495 = vpop.permute.xlu0 %494
    %v497 = vadd.f32 %v365, %v495
    %v498 = vtanh.pop %v497
    %v499 = vsub.f32 1.0, %v480
    %501 = vrot.lane.b32.xlu0 %v498, 96
    %v502 = vpop.permute.xlu0 %501
    %v504 = vmul.f32 %v499, %v502
    %v505 = vmul.f32 %v480, %v360
    %v506 = vadd.f32 %v504, %v505
    %v509 = vunpack.c.l.s4 1983009808
    %v510 = vunpack.c.0.s8 %v509
    %v511 = vlaneseq
    %v512 = vshrl.u32 %v511, 7
    %v513 = vsub.s32 %v510, %v512
    %v514 = vrot.slane %v469, %v513
    %515 = vrot.lane.b32.xlu0 %v514, 96
    %v516 = vpop.permute.xlu0 %515
    %v518 = vadd.f32 %v370, %v516
    %v519 = vxor.u32 %v518, 2147483648
    %v520 = vmul.f32 %v519, 1.442695
    %v521 = vpow.pop %v520
    %v522 = vadd.f32 %v521, 1.0
    %v523 = vrcp.pop %v522
    %v524 = vmul.f32 1.0, %v523
    %v526 = vrot.slane %v370, 2
    %v528 = vadd.f32 %v526, %v516
    %v529 = vxor.u32 %v528, 2147483648
    %v530 = vmul.f32 %v529, 1.442695
    %v531 = vpow.pop %v530
    %v532 = vadd.f32 %v531, 1.0
    %v533 = vrcp.pop %v532
    %v534 = vmul.f32 1.0, %v533
    %535 = vrot.lane.b32.xlu0 %v514, 32
    %v536 = vpop.permute.xlu0 %535
    %v538 = vmul.f32 %v524, %v536
    %539 = vrot.lane.b32.xlu0 %v370, 96
    %v540 = vpop.permute.xlu0 %539
    %v541 = vrot.slane %v540, 2
    %544 = vrot.lane.b32.xlu0 %v538, 32
    %v545 = vpop.permute.xlu0 %544
    %v547 = vadd.f32 %v541, %v545
    %v548 = vtanh.pop %v547
    %v549 = vsub.f32 1.0, %v534
    %v550 = vmul.f32 %v549, %v548
    %v551 = vmul.f32 %v534, %v361
    %v552 = vadd.f32 %v550, %v551
    %v555 = vunpack.c.l.s4 1983009808
    %v556 = vunpack.c.0.s8 %v555
    %v557 = vlaneseq
    %v558 = vshrl.u32 %v557, 7
    %v559 = vsub.s32 %v556, %v558
    %v560 = vrot.slane %v506, %v559
    %561 = vrot.lane.b32.xlu0 %v560, 96
    %v562 = vpop.permute.xlu0 %561
    %s564 = scalar_lea.vmem [#allocation3], %s362
    %vm565 = vcmask 254976
    %566 = vst.msk [vmem:[%s564] sm:$0x3] %vm565, %v562
    %s567 = scalar_lea.vmem [#allocation4], %s367
    %568 = vst.msk [vmem:[%s567] sm:$0x3] %vm565, %v552
  $region42: #{cbhg_forward.3} parent=0 // loop_footer
    %s359 = sadd.s32 1, %s355
  $region43: #{cbhg_forward.3} parent=0 // loop_footer_branch
    %354 = sbr.rel target = $region39
  $region44: #{cbhg_forward.3} parent=0 // loop_exit
    _
  %v569 = vld [vmem:[#allocation3] sm:$0x3]
  %v570 = vld [vmem:[#allocation3 + $0x2] sm:$0x3]
  %v571 = vld [vmem:[#allocation3 + $0x4] sm:$0x3]
  %v572 = vld [vmem:[#allocation3 + $0x6] sm:$0x3]
  %v573 = vld [vmem:[#allocation3 + $0x8] sm:$0x3]
  %v574 = vld [vmem:[#allocation3 + $0xa] sm:$0x3]
  %v575 = vld [vmem:[#allocation3 + $0xc] sm:$0x3]
  %v576 = vld [vmem:[#allocation3 + $0xe] sm:$0x3]
  %v577 = vld [vmem:[#allocation3 + $0x10] sm:$0x3]
  %v578 = vld [vmem:[#allocation3 + $0x12] sm:$0x3]
  %v579 = vld [vmem:[#allocation3 + $0x14] sm:$0x3]
  %v580 = vld [vmem:[#allocation3 + $0x16] sm:$0x3]
  %v581 = vld [vmem:[#allocation3 + $0x18] sm:$0x3]
  %v582 = vld [vmem:[#allocation3 + $0x1a] sm:$0x3]
  %v583 = vld [vmem:[#allocation3 + $0x1c] sm:$0x3]
  %v584 = vld [vmem:[#allocation3 + $0x1e] sm:$0x3]
  %v585 = vld [vmem:[#allocation4] sm:$0x3]
  %v586 = vld [vmem:[#allocation4 + $0x2] sm:$0x3]
  %v587 = vld [vmem:[#allocation4 + $0x4] sm:$0x3]
  %v588 = vld [vmem:[#allocation4 + $0x6] sm:$0x3]
  %v589 = vld [vmem:[#allocation4 + $0x8] sm:$0x3]
  %v590 = vld [vmem:[#allocation4 + $0xa] sm:$0x3]
  %v591 = vld [vmem:[#allocation4 + $0xc] sm:$0x3]
  %v592 = vld [vmem:[#allocation4 + $0xe] sm:$0x3]
  %v593 = vld [vmem:[#allocation4 + $0x10] sm:$0x3]
  %v594 = vld [vmem:[#allocation4 + $0x12] sm:$0x3]
  %v595 = vld [vmem:[#allocation4 + $0x14] sm:$0x3]
  %v596 = vld [vmem:[#allocation4 + $0x16] sm:$0x3]
  %v597 = vld [vmem:[#allocation4 + $0x18] sm:$0x3]
  %v598 = vld [vmem:[#allocation4 + $0x1a] sm:$0x3]
  %v599 = vld [vmem:[#allocation4 + $0x1c] sm:$0x3]
  %v600 = vld [vmem:[#allocation4 + $0x1e] sm:$0x3]
  %617 = vrot.lane.b32.xlu0 %v585, 32
  %v618 = vpop.permute.xlu0 %617
  %619 = vrot.lane.b32.xlu0 %v586, 32
  %v620 = vpop.permute.xlu0 %619
  %621 = vrot.lane.b32.xlu0 %v587, 32
  %v622 = vpop.permute.xlu0 %621
  %623 = vrot.lane.b32.xlu0 %v588, 32
  %v624 = vpop.permute.xlu0 %623
  %625 = vrot.lane.b32.xlu0 %v589, 32
  %v626 = vpop.permute.xlu0 %625
  %627 = vrot.lane.b32.xlu0 %v590, 32
  %v628 = vpop.permute.xlu0 %627
  %629 = vrot.lane.b32.xlu0 %v591, 32
  %v630 = vpop.permute.xlu0 %629
  %631 = vrot.lane.b32.xlu0 %v592, 32
  %v632 = vpop.permute.xlu0 %631
  %633 = vrot.lane.b32.xlu0 %v593, 32
  %v634 = vpop.permute.xlu0 %633
  %635 = vrot.lane.b32.xlu0 %v594, 32
  %v636 = vpop.permute.xlu0 %635
  %637 = vrot.lane.b32.xlu0 %v595, 32
  %v638 = vpop.permute.xlu0 %637
  %639 = vrot.lane.b32.xlu0 %v596, 32
  %v640 = vpop.permute.xlu0 %639
  %641 = vrot.lane.b32.xlu0 %v597, 32
  %v642 = vpop.permute.xlu0 %641
  %643 = vrot.lane.b32.xlu0 %v598, 32
  %v644 = vpop.permute.xlu0 %643
  %645 = vrot.lane.b32.xlu0 %v599, 32
  %v646 = vpop.permute.xlu0 %645
  %647 = vrot.lane.b32.xlu0 %v600, 32
  %v648 = vpop.permute.xlu0 %647
  %v665 = vsel %vm163, %v569, %v618
  %v666 = vsel %vm163, %v570, %v620
  %v667 = vsel %vm163, %v571, %v622
  %v668 = vsel %vm163, %v572, %v624
  %v669 = vsel %vm163, %v573, %v626
  %v670 = vsel %vm163, %v574, %v628
  %v671 = vsel %vm163, %v575, %v630
  %v672 = vsel %vm163, %v576, %v632
  %v673 = vsel %vm163, %v577, %v634
  %v674 = vsel %vm163, %v578, %v636
  %v675 = vsel %vm163, %v579, %v638
  %v676 = vsel %vm163, %v580, %v640
  %v677 = vsel %vm163, %v581, %v642
  %v678 = vsel %vm163, %v582, %v644
  %v679 = vsel %vm163, %v583, %v646
  %v680 = vsel %vm163, %v584, %v648
  %v697 = vcombine.low %v665, %v666
  %v698 = vcombine.low %v667, %v668
  %v700 = vunpack.c.l.s4 1983009808
  %v701 = vunpack.c.0.s8 %v700
  %v702 = vlaneseq
  %v703 = vshrl.u32 %v702, 7
  %v704 = vsub.s32 %v701, %v703
  %v705 = vrot.slane %v697, %v704
  %v707 = vunpack.c.l.s4 1983009808
  %v708 = vunpack.c.0.s8 %v707
  %v709 = vlaneseq
  %v710 = vshrl.u32 %v709, 7
  %v711 = vsub.s32 %v708, %v710
  %v712 = vrot.slane %v698, %v711
  %v713 = vcombine.low %v705, %v712
  %v714 = vcombine.low %v669, %v670
  %v715 = vcombine.low %v671, %v672
  %v717 = vunpack.c.l.s4 1983009808
  %v718 = vunpack.c.0.s8 %v717
  %v719 = vlaneseq
  %v720 = vshrl.u32 %v719, 7
  %v721 = vsub.s32 %v718, %v720
  %v722 = vrot.slane %v714, %v721
  %v724 = vunpack.c.l.s4 1983009808
  %v725 = vunpack.c.0.s8 %v724
  %v726 = vlaneseq
  %v727 = vshrl.u32 %v726, 7
  %v728 = vsub.s32 %v725, %v727
  %v729 = vrot.slane %v715, %v728
  %v730 = vcombine.low %v722, %v729
  %v731 = vcombine.low %v673, %v674
  %v732 = vcombine.low %v675, %v676
  %v734 = vunpack.c.l.s4 1983009808
  %v735 = vunpack.c.0.s8 %v734
  %v736 = vlaneseq
  %v737 = vshrl.u32 %v736, 7
  %v738 = vsub.s32 %v735, %v737
  %v739 = vrot.slane %v731, %v738
  %v741 = vunpack.c.l.s4 1983009808
  %v742 = vunpack.c.0.s8 %v741
  %v743 = vlaneseq
  %v744 = vshrl.u32 %v743, 7
  %v745 = vsub.s32 %v742, %v744
  %v746 = vrot.slane %v732, %v745
  %v747 = vcombine.low %v739, %v746
  %v748 = vcombine.low %v677, %v678
  %v749 = vcombine.low %v679, %v680
  %v751 = vunpack.c.l.s4 1983009808
  %v752 = vunpack.c.0.s8 %v751
  %v753 = vlaneseq
  %v754 = vshrl.u32 %v753, 7
  %v755 = vsub.s32 %v752, %v754
  %v756 = vrot.slane %v748, %v755
  %v758 = vunpack.c.l.s4 1983009808
  %v759 = vunpack.c.0.s8 %v758
  %v760 = vlaneseq
  %v761 = vshrl.u32 %v760, 7
  %v762 = vsub.s32 %v759, %v761
  %v763 = vrot.slane %v749, %v762
  %v764 = vcombine.low %v756, %v763
  %v769 = vpack.c.bf16 %v730, %v713
  %v770 = vpack.c.bf16 %v764, %v747
  %v771 = vld [vmem:[%s5] sm:$0xff]
  %v772 = vld [vmem:[%s5 + $0x8] sm:$0xff]
  %v773 = vld [vmem:[%s5 + $0x10] sm:$0xff]
  %v774 = vld [vmem:[%s5 + $0x18] sm:$0xff]
  %v775 = vld [vmem:[%s5 + $0x20] sm:$0xff]
  %v776 = vld [vmem:[%s5 + $0x28] sm:$0xff]
  %v777 = vld [vmem:[%s5 + $0x30] sm:$0xff]
  %v778 = vld [vmem:[%s5 + $0x38] sm:$0xff]
  %v779 = vld [vmem:[%s5 + $0x40] sm:$0xff]
  %v780 = vld [vmem:[%s5 + $0x48] sm:$0xff]
  %v781 = vld [vmem:[%s5 + $0x50] sm:$0xff]
  %v782 = vld [vmem:[%s5 + $0x58] sm:$0xff]
  %v783 = vld [vmem:[%s5 + $0x60] sm:$0xff]
  %v784 = vld [vmem:[%s5 + $0x68] sm:$0xff]
  %v785 = vld [vmem:[%s5 + $0x70] sm:$0xff]
  %v786 = vld [vmem:[%s5 + $0x78] sm:$0xff]
  %v787 = vpack.c.bf16 %v773, %v771
  %v788 = vpack.c.bf16 %v774, %v772
  %v789 = vpack.c.bf16 %v777, %v775
  %v790 = vpack.c.bf16 %v778, %v776
  %v791 = vpack.c.bf16 %v781, %v779
  %v792 = vpack.c.bf16 %v782, %v780
  %v793 = vpack.c.bf16 %v785, %v783
  %v794 = vpack.c.bf16 %v786, %v784
  %v795 = vld [vmem:[%s7] sm:$0x3]
  %v797 = vlaneseq
  %v798 = vshrl.u32 %v797, 7
  %v799 = vsub.s32 0, %v798
  %v800 = vrot.slane %v795, %v799
  %v801 = vlaneseq
  %v802 = vshrl.u32 %v801, 7
  %v803 = vsub.s32 1, %v802
  %v804 = vrot.slane %v795, %v803
  %vm807 = vcmask 523264
  %v809 = vsel %vm807, %v769, 0
  %v812 = vsel %vm807, %v770, 0
  %814 = vmatprep.subr.bf16.mxu0 %v788
  %815 = vmatpush1.bf16.msra.mxu0 %v787
  %816 = vmatprep.subr.bf16.mxu0 %v790
  %817 = vmatpush1.bf16.msra.mxu0 %v789
  %818 = vmatprep.subr.bf16.mxu0 %v792
  %819 = vmatpush1.bf16.msra.mxu0 %v791
  %820 = vmatprep.subr.bf16.mxu0 %v794
  %821 = vmatpush1.bf16.msra.mxu0 %v793
  %822 = vmatprep.subr.bf16.mxu0 0
  %823 = vmatpush1.bf16.msra.mxu0 0
  %824 = vmatprep.subr.bf16.mxu0 0
  %825 = vmatpush1.bf16.msra.mxu0 0
  %826 = vmatprep.subr.bf16.mxu0 0
  %827 = vmatpush1.bf16.msra.mxu0 0
  %828 = vmatprep.subr.bf16.mxu0 0
  %829 = vmatpush1.bf16.msra.mxu0 0
  %830 = vmatprep.subr.bf16.mxu0 0
  %831 = vmatpush1.bf16.msra.mxu0 0
  %832 = vmatprep.subr.bf16.mxu0 0
  %833 = vmatpush1.bf16.msra.mxu0 0
  %834 = vmatprep.subr.bf16.mxu0 0
  %835 = vmatpush1.bf16.msra.mxu0 0
  %836 = vmatprep.subr.bf16.mxu0 0
  %837 = vmatpush1.bf16.msra.mxu0 0
  %838 = vmatprep.subr.bf16.mxu0 0
  %839 = vmatpush1.bf16.msra.mxu0 0
  %840 = vmatprep.subr.bf16.mxu0 0
  %841 = vmatpush1.bf16.msra.mxu0 0
  %842 = vmatprep.subr.bf16.mxu0 0
  %843 = vmatpush1.bf16.msra.mxu0 0
  %844 = vmatprep.subr.bf16.mxu0 0
  %845 = vmatpush1.bf16.msra.mxu0 0
  %846 = vmatprep.mubr.bf16.mxu0 0
  %847 = vmatmul.mubr.bf16.gmra.mrb[0].mxu0 %v809
  %v848 = vpop.f32.mrb[0].mxu0
  %v849 = vadd.f32 %v800, %v848
  %v850 = vpop.f32.mrb[0].mxu0
  %v851 = vadd.f32 %v804, %v850
  %v852 = vpop.f32.mrb[0].mxu0
  %v853 = vadd.f32 %v800, %v852
  %v854 = vpop.f32.mrb[0].mxu0
  %v855 = vadd.f32 %v804, %v854
  %856 = vmatprep.mubr.bf16.mxu0 0
  %857 = vmatmul.mubr.bf16.gmra.mrb[0].mxu0 %v812
  %v858 = vpop.f32.mrb[0].mxu0
  %v859 = vadd.f32 %v800, %v858
  %v860 = vpop.f32.mrb[0].mxu0
  %v861 = vadd.f32 %v804, %v860
  %v862 = vpop.f32.mrb[0].mxu0
  %v863 = vadd.f32 %v800, %v862
  %v864 = vpop.f32.mrb[0].mxu0
  %v865 = vadd.f32 %v804, %v864
  %866 = vdwg.mxu0
  %v875 = vcombine.low %v849, %v851
  %v876 = vcombine.high %v849, %v851
  %v878 = vunpack.c.l.s4 1983009808
  %v879 = vunpack.c.0.s8 %v878
  %v880 = vlaneseq
  %v881 = vshrl.u32 %v880, 7
  %v882 = vsub.s32 %v879, %v881
  %v883 = vrot.slane %v875, %v882
  %v885 = vunpack.c.l.s4 1983009808
  %v886 = vunpack.c.0.s8 %v885
  %v887 = vlaneseq
  %v888 = vshrl.u32 %v887, 7
  %v889 = vsub.s32 %v886, %v888
  %v890 = vrot.slane %v876, %v889
  %v891 = vcombine.high %v883, %v883
  %v892 = vcombine.high %v890, %v890
  %v893 = vcombine.low %v853, %v855
  %v894 = vcombine.high %v853, %v855
  %v896 = vunpack.c.l.s4 1983009808
  %v897 = vunpack.c.0.s8 %v896
  %v898 = vlaneseq
  %v899 = vshrl.u32 %v898, 7
  %v900 = vsub.s32 %v897, %v899
  %v901 = vrot.slane %v893, %v900
  %v903 = vunpack.c.l.s4 1983009808
  %v904 = vunpack.c.0.s8 %v903
  %v905 = vlaneseq
  %v906 = vshrl.u32 %v905, 7
  %v907 = vsub.s32 %v904, %v906
  %v908 = vrot.slane %v894, %v907
  %v909 = vcombine.high %v901, %v901
  %v910 = vcombine.high %v908, %v908
  %v911 = vcombine.low %v859, %v861
  %v912 = vcombine.high %v859, %v861
  %v914 = vunpack.c.l.s4 1983009808
  %v915 = vunpack.c.0.s8 %v914
  %v916 = vlaneseq
  %v917 = vshrl.u32 %v916, 7
  %v918 = vsub.s32 %v915, %v917
  %v919 = vrot.slane %v911, %v918
  %v921 = vunpack.c.l.s4 1983009808
  %v922 = vunpack.c.0.s8 %v921
  %v923 = vlaneseq
  %v924 = vshrl.u32 %v923, 7
  %v925 = vsub.s32 %v922, %v924
  %v926 = vrot.slane %v912, %v925
  %v927 = vcombine.high %v919, %v919
  %v928 = vcombine.high %v926, %v926
  %v929 = vcombine.low %v863, %v865
  %v930 = vcombine.high %v863, %v865
  %v932 = vunpack.c.l.s4 1983009808
  %v933 = vunpack.c.0.s8 %v932
  %v934 = vlaneseq
  %v935 = vshrl.u32 %v934, 7
  %v936 = vsub.s32 %v933, %v935
  %v937 = vrot.slane %v929, %v936
  %v939 = vunpack.c.l.s4 1983009808
  %v940 = vunpack.c.0.s8 %v939
  %v941 = vlaneseq
  %v942 = vshrl.u32 %v941, 7
  %v943 = vsub.s32 %v940, %v942
  %v944 = vrot.slane %v930, %v943
  %v945 = vcombine.high %v937, %v937
  %v946 = vcombine.high %v944, %v944
  %963 = vst.msk [vmem:[#allocation2] sm:$0xf] %vm321, %v883
  %964 = vst.msk [vmem:[#allocation2 + $0x4] sm:$0xf] %vm321, %v891
  %965 = vst.msk [vmem:[#allocation2 + $0x8] sm:$0xf] %vm321, %v890
  %966 = vst.msk [vmem:[#allocation2 + $0xc] sm:$0xf] %vm321, %v892
  %967 = vst.msk [vmem:[#allocation2 + $0x10] sm:$0xf] %vm321, %v901
  %968 = vst.msk [vmem:[#allocation2 + $0x14] sm:$0xf] %vm321, %v909
  %969 = vst.msk [vmem:[#allocation2 + $0x18] sm:$0xf] %vm321, %v908
  %970 = vst.msk [vmem:[#allocation2 + $0x1c] sm:$0xf] %vm321, %v910
  %971 = vst.msk [vmem:[#allocation2 + $0x20] sm:$0xf] %vm321, %v919
  %972 = vst.msk [vmem:[#allocation2 + $0x24] sm:$0xf] %vm321, %v927
  %973 = vst.msk [vmem:[#allocation2 + $0x28] sm:$0xf] %vm321, %v926
  %974 = vst.msk [vmem:[#allocation2 + $0x2c] sm:$0xf] %vm321, %v928
  %975 = vst.msk [vmem:[#allocation2 + $0x30] sm:$0xf] %vm321, %v937
  %976 = vst.msk [vmem:[#allocation2 + $0x34] sm:$0xf] %vm321, %v945
  %977 = vst.msk [vmem:[#allocation2 + $0x38] sm:$0xf] %vm321, %v944
  %978 = vst.msk [vmem:[#allocation2 + $0x3c] sm:$0xf] %vm321, %v946
  %v979 = vld [vmem:[%s6] sm:$0xff]
  %v980 = vld [vmem:[%s6 + $0x8] sm:$0xff]
  %v981 = vld [vmem:[%s6 + $0x10] sm:$0xff]
  %v982 = vld [vmem:[%s6 + $0x18] sm:$0xff]
  %v983 = vpack.c.bf16 %v980, %v979
  %v984 = vpack.c.bf16 %v982, %v981
  %s985 = scalar_lea.vmem %s6, 32
  %v986 = vld [vmem:[%s985] sm:$0xff]
  %v987 = vld [vmem:[%s985 + $0x8] sm:$0xff]
  %v988 = vld [vmem:[%s985 + $0x10] sm:$0xff]
  %v989 = vld [vmem:[%s985 + $0x18] sm:$0xff]
  %v990 = vpack.c.bf16 %v987, %v986
  %v991 = vpack.c.bf16 %v989, %v988
  %v992 = vld [vmem:[%s8] sm:$0x1]
  %s993 = scalar_lea.vmem %s8, 1
  %v994 = vld [vmem:[%s993] sm:$0x1]
  loop: start=0, step=1, limit=16
  $region45: #{cbhg_forward.3} parent=0 // loop_pre_header
    _
  $region46: #{cbhg_forward.3} parent=0 // loop_header
    %s996 = sphi 0, %s1000
    %p997 = scmp.ge.s32.totalorder %s996, 16
    %v1001 = vphi 0.0, %v1147
    %v1002 = vphi 0.0, %v1193
  $region47: #{cbhg_forward.3} parent=0 // loop_header_branch
    %999 = sbr.rel (%p997) target = $region51
  $region48: #{cbhg_forward.3} parent=0 // loop_body
    %s1003 = smul.u32 %s996, 2
    %s1004 = smul.addr %s1003, 2
    %s1005 = scalar_lea.vmem [#allocation2], %s1004
    %v1006 = vld [vmem:[%s1005] sm:$0xf]
    %s1007 = ssub.s32 15, %s996
    %s1008 = smul.u32 %s1007, 2
    %s1009 = smul.addr %s1008, 2
    %s1010 = scalar_lea.vmem [#allocation2], %s1009
    %v1011 = vld [vmem:[%s1010] sm:$0xf]
    %v1012 = vpack.c.bf16 %v1001, %v1001
    %v1014 = vlaneseq
    %v1015 = vshrl.u32 %v1014, 7
    %v1016 = vsub.s32 0, %v1015
    %v1017 = vrot.slane %v992, %v1016
    %1020 = vrot.lane.b32.xlu0 %v1012, 96
    %v1021 = vpop.permute.xlu0 %1020
    %v1023 = vsel %vm163, %v1021, 0
    %1025 = vmatprep.subr.bf16.mxu0 0
    %1026 = vmatpush1.bf16.msra.mxu0 %v983
    %1027 = vmatprep.subr.bf16.mxu0 0
    %1028 = vmatpush1.bf16.msra.mxu0 %v984
    %1029 = vmatprep.subr.bf16.mxu0 0
    %1030 = vmatpush1.bf16.msra.mxu0 0
    %1031 = vmatprep.subr.bf16.mxu0 0
    %1032 = vmatpush1.bf16.msra.mxu0 0
    %1033 = vmatprep.subr.bf16.mxu0 0
    %1034 = vmatpush1.bf16.msra.mxu0 0
    %1035 = vmatprep.subr.bf16.mxu0 0
    %1036 = vmatpush1.bf16.msra.mxu0 0
    %1037 = vmatprep.subr.bf16.mxu0 0
    %1038 = vmatpush1.bf16.msra.mxu0 0
    %1039 = vmatprep.subr.bf16.mxu0 0
    %1040 = vmatpush1.bf16.msra.mxu0 0
    %1041 = vmatprep.subr.bf16.mxu0 0
    %1042 = vmatpush1.bf16.msra.mxu0 0
    %1043 = vmatprep.subr.bf16.mxu0 0
    %1044 = vmatpush1.bf16.msra.mxu0 0
    %1045 = vmatprep.subr.bf16.mxu0 0
    %1046 = vmatpush1.bf16.msra.mxu0 0
    %1047 = vmatprep.subr.bf16.mxu0 0
    %1048 = vmatpush1.bf16.msra.mxu0 0
    %1049 = vmatprep.subr.bf16.mxu0 0
    %1050 = vmatpush1.bf16.msra.mxu0 0
    %1051 = vmatprep.subr.bf16.mxu0 0
    %1052 = vmatpush1.bf16.msra.mxu0 0
    %1053 = vmatprep.subr.bf16.mxu0 0
    %1054 = vmatpush1.bf16.msra.mxu0 0
    %1055 = vmatprep.subr.bf16.mxu0 0
    %1056 = vmatpush1.bf16.msra.mxu0 0
    %1057 = vmatprep.mubr.bf16.mxu0 0
    %1058 = vmatmul.mubr.bf16.gmra.mrb[0].mxu0 %v1023
    %v1059 = vpop.f32.mrb[0].mxu0
    %v1060 = vadd.f32 %v1017, %v1059
    %v1061 = vpop.f32.mrb[0].mxu0
    %v1062 = vpop.f32.mrb[0].mxu0
    %v1063 = vpop.f32.mrb[0].mxu0
    %1064 = vdwg.mxu0
    %v1065 = vpack.c.bf16 %v1002, %v1002
    %v1067 = vlaneseq
    %v1068 = vshrl.u32 %v1067, 7
    %v1069 = vsub.s32 0, %v1068
    %v1070 = vrot.slane %v994, %v1069
    %v1073 = vsel %vm163, %v1065, 0
    %1075 = vmatprep.subr.bf16.mxu0 0
    %1076 = vmatpush1.bf16.msra.mxu0 %v990
    %1077 = vmatprep.subr.bf16.mxu0 0
    %1078 = vmatpush1.bf16.msra.mxu0 %v991
    %1079 = vmatprep.subr.bf16.mxu0 0
    %1080 = vmatpush1.bf16.msra.mxu0 0
    %1081 = vmatprep.subr.bf16.mxu0 0
    %1082 = vmatpush1.bf16.msra.mxu0 0
    %1083 = vmatprep.subr.bf16.mxu0 0
    %1084 = vmatpush1.bf16.msra.mxu0 0
    %1085 = vmatprep.subr.bf16.mxu0 0
    %1086 = vmatpush1.bf16.msra.mxu0 0
    %1087 = vmatprep.subr.bf16.mxu0 0
    %1088 = vmatpush1.bf16.msra.mxu0 0
    %1089 = vmatprep.subr.bf16.mxu0 0
    %1090 = vmatpush1.bf16.msra.mxu0 0
    %1091 = vmatprep.subr.bf16.mxu0 0
    %1092 = vmatpush1.bf16.msra.mxu0 0
    %1093 = vmatprep.subr.bf16.mxu0 0
    %1094 = vmatpush1.bf16.msra.mxu0 0
    %1095 = vmatprep.subr.bf16.mxu0 0
    %1096 = vmatpush1.bf16.msra.mxu0 0
    %1097 = vmatprep.subr.bf16.mxu0 0
    %1098 = vmatpush1.bf16.msra.mxu0 0
    %1099 = vmatprep.subr.bf16.mxu0 0
    %1100 = vmatpush1.bf16.msra.mxu0 0
    %1101 = vmatprep.subr.bf16.mxu0 0
    %1102 = vmatpush1.bf16.msra.mxu0 0
    %1103 = vmatprep.subr.bf16.mxu0 0
    %1104 = vmatpush1.bf16.msra.mxu0 0
    %1105 = vmatprep.subr.bf16.mxu0 0
    %1106 = vmatpush1.bf16.msra.mxu0 0
    %1107 = vmatprep.mubr.bf16.mxu0 0
    %1108 = vmatmul.mubr.bf16.gmra.mrb[0].mxu0 %v1073
    %v1109 = vpop.f32.mrb[0].mxu0
    %v1110 = vadd.f32 %v1070, %v1109
    %v1111 = vpop.f32.mrb[0].mxu0
    %v1112 = vpop.f32.mrb[0].mxu0
    %v1113 = vpop.f32.mrb[0].mxu0
    %1114 = vdwg.mxu0
    %v1115 = vadd.f32 %v1006, %v1060
    %v1116 = vxor.u32 %v1115, 2147483648
    %v1117 = vmul.f32 %v1116, 1.442695
    %v1118 = vpow.pop %v1117
    %v1119 = vadd.f32 %v1118, 1.0
    %v1120 = vrcp.pop %v1119
    %v1121 = vmul.f32 1.0, %v1120
    %v1124 = vunpack.c.l.s4 1983009808
    %v1125 = vunpack.c.0.s8 %v1124
    %v1126 = vlaneseq
    %v1127 = vshrl.u32 %v1126, 7
    %v1128 = vsub.s32 %v1125, %v1127
    %v1129 = vrot.slane %v1060, %v1128
    %1130 = vrot.lane.b32.xlu0 %v1129, 64
    %v1131 = vpop.permute.xlu0 %1130
    %v1133 = vmul.f32 %v1121, %v1131
    %1135 = vrot.lane.b32.xlu0 %v1133, 64
    %v1136 = vpop.permute.xlu0 %1135
    %v1138 = vadd.f32 %v1006, %v1136
    %v1139 = vtanh.pop %v1138
    %v1140 = vsub.f32 1.0, %v1121
    %1142 = vrot.lane.b32.xlu0 %v1139, 96
    %v1143 = vpop.permute.xlu0 %1142
    %v1145 = vmul.f32 %v1140, %v1143
    %v1146 = vmul.f32 %v1121, %v1001
    %v1147 = vadd.f32 %v1145, %v1146
    %v1150 = vunpack.c.l.s4 1983009808
    %v1151 = vunpack.c.0.s8 %v1150
    %v1152 = vlaneseq
    %v1153 = vshrl.u32 %v1152, 7
    %v1154 = vsub.s32 %v1151, %v1153
    %v1155 = vrot.slane %v1110, %v1154
    %1156 = vrot.lane.b32.xlu0 %v1155, 96
    %v1157 = vpop.permute.xlu0 %1156
    %v1159 = vadd.f32 %v1011, %v1157
    %v1160 = vxor.u32 %v1159, 2147483648
    %v1161 = vmul.f32 %v1160, 1.442695
    %v1162 = vpow.pop %v1161
    %v1163 = vadd.f32 %v1162, 1.0
    %v1164 = vrcp.pop %v1163
    %v1165 = vmul.f32 1.0, %v1164
    %v1167 = vrot.slane %v1011, 2
    %v1169 = vadd.f32 %v1167, %v1157
    %v1170 = vxor.u32 %v1169, 2147483648
    %v1171 = vmul.f32 %v1170, 1.442695
    %v1172 = vpow.pop %v1171
    %v1173 = vadd.f32 %v1172, 1.0
    %v1174 = vrcp.pop %v1173
    %v1175 = vmul.f32 1.0, %v1174
    %1176 = vrot.lane.b32.xlu0 %v1155, 32
    %v1177 = vpop.permute.xlu0 %1176
    %v1179 = vmul.f32 %v1165, %v1177
    %1180 = vrot.lane.b32.xlu0 %v1011, 96
    %v1181 = vpop.permute.xlu0 %1180
    %v1182 = vrot.slane %v1181, 2
    %1185 = vrot.lane.b32.xlu0 %v1179, 32
    %v1186 = vpop.permute.xlu0 %1185
    %v1188 = vadd.f32 %v1182, %v1186
    %v1189 = vtanh.pop %v1188
    %v1190 = vsub.f32 1.0, %v1175
    %v1191 = vmul.f32 %v1190, %v1189
    %v1192 = vmul.f32 %v1175, %v1002
    %v1193 = vadd.f32 %v1191, %v1192
    %v1196 = vunpack.c.l.s4 1983009808
    %v1197 = vunpack.c.0.s8 %v1196
    %v1198 = vlaneseq
    %v1199 = vshrl.u32 %v1198, 7
    %v1200 = vsub.s32 %v1197, %v1199
    %v1201 = vrot.slane %v1147, %v1200
    %1202 = vrot.lane.b32.xlu0 %v1201, 96
    %v1203 = vpop.permute.xlu0 %1202
    %s1205 = scalar_lea.vmem [#allocation3], %s1003
    %vm1206 = vcmask 254976
    %1207 = vst.msk [vmem:[%s1205] sm:$0x3] %vm1206, %v1203
    %s1208 = scalar_lea.vmem [#allocation4], %s1008
    %1209 = vst.msk [vmem:[%s1208] sm:$0x3] %vm1206, %v1193
  $region49: #{cbhg_forward.3} parent=0 // loop_footer
    %s1000 = sadd.s32 1, %s996
  $region50: #{cbhg_forward.3} parent=0 // loop_footer_branch
    %995 = sbr.rel target = $region46
  $region51: #{cbhg_forward.3} parent=0 // loop_exit
    _
  %v1210 = vld [vmem:[#allocation3] sm:$0x3]
  %v1211 = vld [vmem:[#allocation3 + $0x2] sm:$0x3]
  %v1212 = vld [vmem:[#allocation3 + $0x4] sm:$0x3]
  %v1213 = vld [vmem:[#allocation3 + $0x6] sm:$0x3]
  %v1214 = vld [vmem:[#allocation3 + $0x8] sm:$0x3]
  %v1215 = vld [vmem:[#allocation3 + $0xa] sm:$0x3]
  %v1216 = vld [vmem:[#allocation3 + $0xc] sm:$0x3]
  %v1217 = vld [vmem:[#allocation3 + $0xe] sm:$0x3]
  %v1218 = vld [vmem:[#allocation3 + $0x10] sm:$0x3]
  %v1219 = vld [vmem:[#allocation3 + $0x12] sm:$0x3]
  %v1220 = vld [vmem:[#allocation3 + $0x14] sm:$0x3]
  %v1221 = vld [vmem:[#allocation3 + $0x16] sm:$0x3]
  %v1222 = vld [vmem:[#allocation3 + $0x18] sm:$0x3]
  %v1223 = vld [vmem:[#allocation3 + $0x1a] sm:$0x3]
  %v1224 = vld [vmem:[#allocation3 + $0x1c] sm:$0x3]
  %v1225 = vld [vmem:[#allocation3 + $0x1e] sm:$0x3]
  %v1226 = vld [vmem:[#allocation4] sm:$0x3]
  %v1227 = vld [vmem:[#allocation4 + $0x2] sm:$0x3]
  %v1228 = vld [vmem:[#allocation4 + $0x4] sm:$0x3]
  %v1229 = vld [vmem:[#allocation4 + $0x6] sm:$0x3]
  %v1230 = vld [vmem:[#allocation4 + $0x8] sm:$0x3]
  %v1231 = vld [vmem:[#allocation4 + $0xa] sm:$0x3]
  %v1232 = vld [vmem:[#allocation4 + $0xc] sm:$0x3]
  %v1233 = vld [vmem:[#allocation4 + $0xe] sm:$0x3]
  %v1234 = vld [vmem:[#allocation4 + $0x10] sm:$0x3]
  %v1235 = vld [vmem:[#allocation4 + $0x12] sm:$0x3]
  %v1236 = vld [vmem:[#allocation4 + $0x14] sm:$0x3]
  %v1237 = vld [vmem:[#allocation4 + $0x16] sm:$0x3]
  %v1238 = vld [vmem:[#allocation4 + $0x18] sm:$0x3]
  %v1239 = vld [vmem:[#allocation4 + $0x1a] sm:$0x3]
  %v1240 = vld [vmem:[#allocation4 + $0x1c] sm:$0x3]
  %v1241 = vld [vmem:[#allocation4 + $0x1e] sm:$0x3]
  %1258 = vrot.lane.b32.xlu0 %v1226, 32
  %v1259 = vpop.permute.xlu0 %1258
  %1260 = vrot.lane.b32.xlu0 %v1227, 32
  %v1261 = vpop.permute.xlu0 %1260
  %1262 = vrot.lane.b32.xlu0 %v1228, 32
  %v1263 = vpop.permute.xlu0 %1262
  %1264 = vrot.lane.b32.xlu0 %v1229, 32
  %v1265 = vpop.permute.xlu0 %1264
  %1266 = vrot.lane.b32.xlu0 %v1230, 32
  %v1267 = vpop.permute.xlu0 %1266
  %1268 = vrot.lane.b32.xlu0 %v1231, 32
  %v1269 = vpop.permute.xlu0 %1268
  %1270 = vrot.lane.b32.xlu0 %v1232, 32
  %v1271 = vpop.permute.xlu0 %1270
  %1272 = vrot.lane.b32.xlu0 %v1233, 32
  %v1273 = vpop.permute.xlu0 %1272
  %1274 = vrot.lane.b32.xlu0 %v1234, 32
  %v1275 = vpop.permute.xlu0 %1274
  %1276 = vrot.lane.b32.xlu0 %v1235, 32
  %v1277 = vpop.permute.xlu0 %1276
  %1278 = vrot.lane.b32.xlu0 %v1236, 32
  %v1279 = vpop.permute.xlu0 %1278
  %1280 = vrot.lane.b32.xlu0 %v1237, 32
  %v1281 = vpop.permute.xlu0 %1280
  %1282 = vrot.lane.b32.xlu0 %v1238, 32
  %v1283 = vpop.permute.xlu0 %1282
  %1284 = vrot.lane.b32.xlu0 %v1239, 32
  %v1285 = vpop.permute.xlu0 %1284
  %1286 = vrot.lane.b32.xlu0 %v1240, 32
  %v1287 = vpop.permute.xlu0 %1286
  %1288 = vrot.lane.b32.xlu0 %v1241, 32
  %v1289 = vpop.permute.xlu0 %1288
  %v1306 = vsel %vm163, %v1210, %v1259
  %v1307 = vsel %vm163, %v1211, %v1261
  %v1308 = vsel %vm163, %v1212, %v1263
  %v1309 = vsel %vm163, %v1213, %v1265
  %v1310 = vsel %vm163, %v1214, %v1267
  %v1311 = vsel %vm163, %v1215, %v1269
  %v1312 = vsel %vm163, %v1216, %v1271
  %v1313 = vsel %vm163, %v1217, %v1273
  %v1314 = vsel %vm163, %v1218, %v1275
  %v1315 = vsel %vm163, %v1219, %v1277
  %v1316 = vsel %vm163, %v1220, %v1279
  %v1317 = vsel %vm163, %v1221, %v1281
  %v1318 = vsel %vm163, %v1222, %v1283
  %v1319 = vsel %vm163, %v1223, %v1285
  %v1320 = vsel %vm163, %v1224, %v1287
  %v1321 = vsel %vm163, %v1225, %v1289
  %vm1322 = vcmask 517120
  %1323 = vst.msk [vmem:[%s9] sm:$0x3] %vm1322, %v1306
  %1324 = vst.msk [vmem:[%s9 + $0x2] sm:$0x3] %vm1322, %v1307
  %1325 = vst.msk [vmem:[%s9 + $0x4] sm:$0x3] %vm1322, %v1308
  %1326 = vst.msk [vmem:[%s9 + $0x6] sm:$0x3] %vm1322, %v1309
  %1327 = vst.msk [vmem:[%s9 + $0x8] sm:$0x3] %vm1322, %v1310
  %1328 = vst.msk [vmem:[%s9 + $0xa] sm:$0x3] %vm1322, %v1311
  %1329 = vst.msk [vmem:[%s9 + $0xc] sm:$0x3] %vm1322, %v1312
  %1330 = vst.msk [vmem:[%s9 + $0xe] sm:$0x3] %vm1322, %v1313
  %1331 = vst.msk [vmem:[%s9 + $0x10] sm:$0x3] %vm1322, %v1314
  %1332 = vst.msk [vmem:[%s9 + $0x12] sm:$0x3] %vm1322, %v1315
  %1333 = vst.msk [vmem:[%s9 + $0x14] sm:$0x3] %vm1322, %v1316
  %1334 = vst.msk [vmem:[%s9 + $0x16] sm:$0x3] %vm1322, %v1317
  %1335 = vst.msk [vmem:[%s9 + $0x18] sm:$0x3] %vm1322, %v1318
  %1336 = vst.msk [vmem:[%s9 + $0x1a] sm:$0x3] %vm1322, %v1319
  %1337 = vst.msk [vmem:[%s9 + $0x1c] sm:$0x3] %vm1322, %v1320
  %1338 = vst.msk [vmem:[%s9 + $0x1e] sm:$0x3] %vm1322, %v1321
  // Predicated region
  $region52: #{cbhg_forward.3} parent=0 // pred_check
    _
  $region53: #{cbhg_forward.3} parent=0 // pred_check_branch
    %1340 = sbr.rel (0) target = $region55
  $region54: #{cbhg_forward.3} parent=0 // pred_region
    _
  $region55: #{cbhg_forward.3} parent=0 // pred_fallthru
    _
  // Predicated region
  $region56: #{cbhg_forward.3} parent=0 // pred_check
    _
  $region57: #{cbhg_forward.3} parent=0 // pred_check_branch
    %1342 = sbr.rel (0) target = $region59
  $region58: #{cbhg_forward.3} parent=0 // pred_region
    _
  $region59: #{cbhg_forward.3} parent=0 // pred_fallthru
    _

// kernel: cbhg_forward.2
$region0: #{cbhg_forward.2}
  #allocation0 [shape = 'u32[]', space=smem, size = 0x4, offset = 0x4, fixed_abs, tag = 'smem constant byte address 0x4 - core index']
  #allocation1 [shape = 'u32[144,128]{1,0:T(1,128)}', space=vmem, size = 0x12000, scoped, tag = 'internal scratch']
  %s0 = inlined_call_operand.vmem [shape: f32[2,16,32], index: 0, kind: input, shape index: {}]
  %s1 = inlined_call_operand.vmem [shape: f32[32,32], index: 1, kind: input, shape index: {}]
  %s2 = inlined_call_operand.vmem [shape: f32[64,32], index: 2, kind: input, shape index: {}]
  %s3 = inlined_call_operand.vmem [shape: f32[96,32], index: 3, kind: input, shape index: {}]
  %s4 = inlined_call_operand.vmem [shape: f32[128,32], index: 4, kind: input, shape index: {}]
  %s5 = inlined_call_operand.vmem [shape: f32[4,1,32], index: 5, kind: input, shape index: {}]
  %s6 = inlined_call_operand.vmem [shape: f32[4,1,32], index: 6, kind: input, shape index: {}]
  %s7 = inlined_call_operand.vmem [shape: f32[4,1,32], index: 7, kind: input, shape index: {}]
  %s8 = inlined_call_operand.vmem [shape: f32[384,32], index: 8, kind: input, shape index: {}]
  %s9 = inlined_call_operand.vmem [shape: f32[1,32], index: 9, kind: input, shape index: {}]
  %s10 = inlined_call_operand.vmem [shape: f32[1,32], index: 10, kind: input, shape index: {}]
  %s11 = inlined_call_operand.vmem [shape: f32[1,32], index: 11, kind: input, shape index: {}]
  %s12 = inlined_call_operand.vmem [shape: f32[96,32], index: 12, kind: input, shape index: {}]
  %s13 = inlined_call_operand.vmem [shape: f32[1,32], index: 13, kind: input, shape index: {}]
  %s14 = inlined_call_operand.vmem [shape: f32[1,32], index: 14, kind: input, shape index: {}]
  %s15 = inlined_call_operand.vmem [shape: f32[1,32], index: 15, kind: input, shape index: {}]
  %s16 = inlined_call_operand.vmem [shape: f32[4,32,64], index: 16, kind: input, shape index: {}]
  %s17 = inlined_call_operand.vmem [shape: f32[4,1,64], index: 17, kind: input, shape index: {}]
  %s18 = inlined_call_operand.vmem [shape: f32[2,16,32], index: 18, kind: output, shape index: {}]
  %s19 = sld [smem:[#allocation0]]
  $region82: #{cbhg_forward.2} parent=0
    _
  %s21 = ssub.s32 1, %s19
  %s22 = scalar_select 0, %s21, %s19
  // Predicated region
  $region2: #{cbhg_forward.2} parent=0 // pred_check
    _
  $region3: #{cbhg_forward.2} parent=0 // pred_check_branch
    %24 = sbr.rel (0) target = $region5
  $region4: #{cbhg_forward.2} parent=0 // pred_region
    _
  $region5: #{cbhg_forward.2} parent=0 // pred_fallthru
    _
  // Predicated region
  $region6: #{cbhg_forward.2} parent=0 // pred_check
    _
  $region7: #{cbhg_forward.2} parent=0 // pred_check_branch
    %26 = sbr.rel (0) target = $region9
  $region8: #{cbhg_forward.2} parent=0 // pred_region
    _
  $region9: #{cbhg_forward.2} parent=0 // pred_fallthru
    _
  // Predicated region
  $region10: #{cbhg_forward.2} parent=0 // pred_check
    _
  $region11: #{cbhg_forward.2} parent=0 // pred_check_branch
    %28 = sbr.rel (0) target = $region13
  $region12: #{cbhg_forward.2} parent=0 // pred_region
    _
  $region13: #{cbhg_forward.2} parent=0 // pred_fallthru
    _
  // Predicated region
  $region14: #{cbhg_forward.2} parent=0 // pred_check
    _
  $region15: #{cbhg_forward.2} parent=0 // pred_check_branch
    %30 = sbr.rel (0) target = $region17
  $region16: #{cbhg_forward.2} parent=0 // pred_region
    _
  $region17: #{cbhg_forward.2} parent=0 // pred_fallthru
    _
  // Predicated region
  $region18: #{cbhg_forward.2} parent=0 // pred_check
    _
  $region19: #{cbhg_forward.2} parent=0 // pred_check_branch
    %32 = sbr.rel (0) target = $region21
  $region20: #{cbhg_forward.2} parent=0 // pred_region
    _
  $region21: #{cbhg_forward.2} parent=0 // pred_fallthru
    _
  // Predicated region
  $region22: #{cbhg_forward.2} parent=0 // pred_check
    _
  $region23: #{cbhg_forward.2} parent=0 // pred_check_branch
    %34 = sbr.rel (0) target = $region25
  $region24: #{cbhg_forward.2} parent=0 // pred_region
    _
  $region25: #{cbhg_forward.2} parent=0 // pred_fallthru
    _
  // Predicated region
  $region26: #{cbhg_forward.2} parent=0 // pred_check
    _
  $region27: #{cbhg_forward.2} parent=0 // pred_check_branch
    %36 = sbr.rel (0) target = $region29
  $region28: #{cbhg_forward.2} parent=0 // pred_region
    _
  $region29: #{cbhg_forward.2} parent=0 // pred_fallthru
    _
  // Predicated region
  $region30: #{cbhg_forward.2} parent=0 // pred_check
    _
  $region31: #{cbhg_forward.2} parent=0 // pred_check_branch
    %38 = sbr.rel (0) target = $region33
  $region32: #{cbhg_forward.2} parent=0 // pred_region
    _
  $region33: #{cbhg_forward.2} parent=0 // pred_fallthru
    _
  // Predicated region
  $region34: #{cbhg_forward.2} parent=0 // pred_check
    _
  $region35: #{cbhg_forward.2} parent=0 // pred_check_branch
    %40 = sbr.rel (0) target = $region37
  $region36: #{cbhg_forward.2} parent=0 // pred_region
    _
  $region37: #{cbhg_forward.2} parent=0 // pred_fallthru
    _
  // Predicated region
  $region38: #{cbhg_forward.2} parent=0 // pred_check
    _
  $region39: #{cbhg_forward.2} parent=0 // pred_check_branch
    %42 = sbr.rel (0) target = $region41
  $region40: #{cbhg_forward.2} parent=0 // pred_region
    _
  $region41: #{cbhg_forward.2} parent=0 // pred_fallthru
    _
  // Predicated region
  $region42: #{cbhg_forward.2} parent=0 // pred_check
    _
  $region43: #{cbhg_forward.2} parent=0 // pred_check_branch
    %44 = sbr.rel (0) target = $region45
  $region44: #{cbhg_forward.2} parent=0 // pred_region
    _
  $region45: #{cbhg_forward.2} parent=0 // pred_fallthru
    _
  // Predicated region
  $region46: #{cbhg_forward.2} parent=0 // pred_check
    _
  $region47: #{cbhg_forward.2} parent=0 // pred_check_branch
    %46 = sbr.rel (0) target = $region49
  $region48: #{cbhg_forward.2} parent=0 // pred_region
    _
  $region49: #{cbhg_forward.2} parent=0 // pred_fallthru
    _
  // Predicated region
  $region50: #{cbhg_forward.2} parent=0 // pred_check
    _
  $region51: #{cbhg_forward.2} parent=0 // pred_check_branch
    %48 = sbr.rel (0) target = $region53
  $region52: #{cbhg_forward.2} parent=0 // pred_region
    _
  $region53: #{cbhg_forward.2} parent=0 // pred_fallthru
    _
  // Predicated region
  $region54: #{cbhg_forward.2} parent=0 // pred_check
    _
  $region55: #{cbhg_forward.2} parent=0 // pred_check_branch
    %50 = sbr.rel (0) target = $region57
  $region56: #{cbhg_forward.2} parent=0 // pred_region
    _
  $region57: #{cbhg_forward.2} parent=0 // pred_fallthru
    _
  // Predicated region
  $region58: #{cbhg_forward.2} parent=0 // pred_check
    _
  $region59: #{cbhg_forward.2} parent=0 // pred_check_branch
    %52 = sbr.rel (0) target = $region61
  $region60: #{cbhg_forward.2} parent=0 // pred_region
    _
  $region61: #{cbhg_forward.2} parent=0 // pred_fallthru
    _
  // Predicated region
  $region62: #{cbhg_forward.2} parent=0 // pred_check
    _
  $region63: #{cbhg_forward.2} parent=0 // pred_check_branch
    %54 = sbr.rel (0) target = $region65
  $region64: #{cbhg_forward.2} parent=0 // pred_region
    _
  $region65: #{cbhg_forward.2} parent=0 // pred_fallthru
    _
  // Predicated region
  $region66: #{cbhg_forward.2} parent=0 // pred_check
    _
  $region67: #{cbhg_forward.2} parent=0 // pred_check_branch
    %56 = sbr.rel (0) target = $region69
  $region68: #{cbhg_forward.2} parent=0 // pred_region
    _
  $region69: #{cbhg_forward.2} parent=0 // pred_fallthru
    _
  // Predicated region
  $region70: #{cbhg_forward.2} parent=0 // pred_check
    _
  $region71: #{cbhg_forward.2} parent=0 // pred_check_branch
    %58 = sbr.rel (0) target = $region73
  $region72: #{cbhg_forward.2} parent=0 // pred_region
    _
  $region73: #{cbhg_forward.2} parent=0 // pred_fallthru
    _
  %v60 = vld [vmem:[%s0] sm:$0xff]
  %v61 = vld [vmem:[%s0 + $0x8] sm:$0xff]
  %v62 = vld [vmem:[%s0 + $0x10] sm:$0xff]
  %v63 = vld [vmem:[%s0 + $0x18] sm:$0xff]
  %v64 = vld [vmem:[%s1] sm:$0xff]
  %v65 = vld [vmem:[%s1 + $0x8] sm:$0xff]
  %v66 = vld [vmem:[%s1 + $0x10] sm:$0xff]
  %v67 = vld [vmem:[%s1 + $0x18] sm:$0xff]
  %v68 = vld [vmem:[%s5] sm:$0x1]
  %v69 = vld [vmem:[%s6] sm:$0x1]
  %v70 = vld [vmem:[%s7] sm:$0x1]
  %v71 = vpack.c.bf16 %v61, %v60
  %v72 = vpack.c.bf16 %v63, %v62
  %v73 = vpack.c.bf16 %v65, %v64
  %v74 = vpack.c.bf16 %v67, %v66
  %v76 = vlaneseq
  %v77 = vshrl.u32 %v76, 7
  %v78 = vsub.s32 0, %v77
  %v79 = vrot.slane %v68, %v78
  %vm81 = vcmask 261120
  %v83 = vsel %vm81, %v71, 0
  %v86 = vsel %vm81, %v72, 0
  %88 = vmatprep.subr.bf16.mxu0 0
  %89 = vmatpush1.bf16.msra.mxu0 %v73
  %90 = vmatprep.subr.bf16.mxu0 0
  %91 = vmatpush1.bf16.msra.mxu0 %v74
  %92 = vmatprep.subr.bf16.mxu0 0
  %93 = vmatpush1.bf16.msra.mxu0 0
  %94 = vmatprep.subr.bf16.mxu0 0
  %95 = vmatpush1.bf16.msra.mxu0 0
  %96 = vmatprep.subr.bf16.mxu0 0
  %97 = vmatpush1.bf16.msra.mxu0 0
  %98 = vmatprep.subr.bf16.mxu0 0
  %99 = vmatpush1.bf16.msra.mxu0 0
  %100 = vmatprep.subr.bf16.mxu0 0
  %101 = vmatpush1.bf16.msra.mxu0 0
  %102 = vmatprep.subr.bf16.mxu0 0
  %103 = vmatpush1.bf16.msra.mxu0 0
  %104 = vmatprep.subr.bf16.mxu0 0
  %105 = vmatpush1.bf16.msra.mxu0 0
  %106 = vmatprep.subr.bf16.mxu0 0
  %107 = vmatpush1.bf16.msra.mxu0 0
  %108 = vmatprep.subr.bf16.mxu0 0
  %109 = vmatpush1.bf16.msra.mxu0 0
  %110 = vmatprep.subr.bf16.mxu0 0
  %111 = vmatpush1.bf16.msra.mxu0 0
  %112 = vmatprep.subr.bf16.mxu0 0
  %113 = vmatpush1.bf16.msra.mxu0 0
  %114 = vmatprep.subr.bf16.mxu0 0
  %115 = vmatpush1.bf16.msra.mxu0 0
  %116 = vmatprep.subr.bf16.mxu0 0
  %117 = vmatpush1.bf16.msra.mxu0 0
  %118 = vmatprep.subr.bf16.mxu0 0
  %119 = vmatpush1.bf16.msra.mxu0 0
  %120 = vmatprep.mubr.bf16.mxu0 0
  %121 = vmatmul.mubr.bf16.gmra.mrb[0].mxu0 %v83
  %v122 = vpop.f32.mrb[0].mxu0
  %v123 = vadd.f32 %v79, %v122
  %v124 = vpop.f32.mrb[0].mxu0
  %v125 = vpop.f32.mrb[0].mxu0
  %v126 = vadd.f32 %v79, %v125
  %v127 = vpop.f32.mrb[0].mxu0
  %128 = vmatprep.mubr.bf16.mxu0 0
  %129 = vmatmul.mubr.bf16.gmra.mrb[0].mxu0 %v86
  %v130 = vpop.f32.mrb[0].mxu0
  %v131 = vadd.f32 %v79, %v130
  %v132 = vpop.f32.mrb[0].mxu0
  %v133 = vpop.f32.mrb[0].mxu0
  %v134 = vadd.f32 %v79, %v133
  %v135 = vpop.f32.mrb[0].mxu0
  %136 = vdwg.mxu0
  %v137 = vsel %vm81, %v123, 0.0
  %v138 = vsel %vm81, %v126, 0.0
  %v139 = vadd.f32 %v137, %v138
  %v140 = vsel %vm81, %v131, 0.0
  %v141 = vadd.f32 %v139, %v140
  %v142 = vsel %vm81, %v134, 0.0
  %v143 = vadd.f32 %v141, %v142
  %v144 = vrot.slane %v143, 4
  %v145 = vadd.f32 %v143, %v144
  %v146 = vrot.slane %v145, 2
  %v147 = vadd.f32 %v145, %v146
  %v148 = vrot.slane %v147, 1
  %v149 = vadd.f32 %v147, %v148
  %v150 = vrcp.pop 32.0
  %v151 = vmul.f32 %v149, %v150
  %v152 = vsub.f32 %v123, %v151
  %v153 = vsub.f32 %v126, %v151
  %v154 = vsub.f32 %v131, %v151
  %v155 = vsub.f32 %v134, %v151
  %v156 = vmul.f32 %v152, %v152
  %v157 = vmul.f32 %v153, %v153
  %v158 = vmul.f32 %v154, %v154
  %v159 = vmul.f32 %v155, %v155
  %v160 = vsel %vm81, %v156, 0.0
  %v161 = vsel %vm81, %v157, 0.0
  %v162 = vadd.f32 %v160, %v161
  %v163 = vsel %vm81, %v158, 0.0
  %v164 = vadd.f32 %v162, %v163
  %v165 = vsel %vm81, %v159, 0.0
  %v166 = vadd.f32 %v164, %v165
  %v167 = vrot.slane %v166, 4
  %v168 = vadd.f32 %v166, %v167
  %v169 = vrot.slane %v168, 2
  %v170 = vadd.f32 %v168, %v169
  %v171 = vrot.slane %v170, 1
  %v172 = vadd.f32 %v170, %v171
  %v173 = vmul.f32 %v172, %v150
  %v174 = vadd.f32 %v173, 1e-05
  %v175 = vrsqrt.pop %v174
  %v176 = vmul.f32 %v152, %v175
  %v177 = vmul.f32 %v153, %v175
  %v178 = vmul.f32 %v154, %v175
  %v179 = vmul.f32 %v155, %v175
  %v181 = vlaneseq
  %v182 = vshrl.u32 %v181, 7
  %v183 = vsub.s32 0, %v182
  %v184 = vrot.slane %v69, %v183
  %v186 = vmul.f32 %v176, %v184
  %v187 = vmul.f32 %v177, %v184
  %v188 = vmul.f32 %v178, %v184
  %v189 = vmul.f32 %v179, %v184
  %v191 = vlaneseq
  %v192 = vshrl.u32 %v191, 7
  %v193 = vsub.s32 0, %v192
  %v194 = vrot.slane %v70, %v193
  %v196 = vadd.f32 %v186, %v194
  %v197 = vadd.f32 %v187, %v194
  %v198 = vadd.f32 %v188, %v194
  %v199 = vadd.f32 %v189, %v194
  %v200 = vmax.f32 %v196, 0.0
  %v201 = vmax.f32 %v197, 0.0
  %v202 = vmax.f32 %v198, 0.0
  %v203 = vmax.f32 %v199, 0.0
  %v204 = vld [vmem:[%s2] sm:$0xff]
  %v205 = vld [vmem:[%s2 + $0x8] sm:$0xff]
  %v206 = vld [vmem:[%s2 + $0x10] sm:$0xff]
  %v207 = vld [vmem:[%s2 + $0x18] sm:$0xff]
  %v208 = vld [vmem:[%s2 + $0x20] sm:$0xff]
  %v209 = vld [vmem:[%s2 + $0x28] sm:$0xff]
  %v210 = vld [vmem:[%s2 + $0x30] sm:$0xff]
  %v211 = vld [vmem:[%s2 + $0x38] sm:$0xff]
  %s212 = scalar_lea.vmem %s5, 1
  %v213 = vld [vmem:[%s212] sm:$0x1]
  %s214 = scalar_lea.vmem %s6, 1
  %v215 = vld [vmem:[%s214] sm:$0x1]
  %s216 = scalar_lea.vmem %s7, 1
  %v217 = vld [vmem:[%s216] sm:$0x1]
  %v218 = vlaneseq
  %v219 = vshrl.u32 %v218, 7
  %v220 = vadd.s32 %v219, 8
  %v221 = vrot.slane %v200, 7
  %v222 = vrot.slane %v202, 7
  %v223 = vrot.slane %v201, 7
  %v224 = vrot.slane %v203, 7
  %vm225 = vcmp.lt.s32.totalorder %v219, 1
  %v226 = vsel %vm225, %v221, %v223
  %v227 = vsel %vm225, %v222, %v224
  %v228 = vsel %vm225, %v223, %v221
  %v229 = vsel %vm225, %v224, %v222
  %v230 = vadd.s32 %v219, 4294967295
  %v231 = vadd.s32 %v220, 4294967295
  %vm232 = vcmp.ge.s32.totalorder %v230, 0
  %vm233 = vcmp.ge.s32.totalorder %v231, 0
  %vm234 = vcmp.lt.s32.totalorder %v230, 16
  %vm235 = vcmp.lt.s32.totalorder %v231, 16
  %vm236 = vmand %vm232, %vm234
  %vm237 = vmand %vm233, %vm235
  %v238 = vsel %vm236, %v228, 0.0
  %v239 = vsel %vm237, %v226, 0.0
  %v240 = vsel %vm236, %v229, 0.0
  %v241 = vsel %vm237, %v227, 0.0
  %246 = vrot.lane.b32.xlu0 %v200, 32
  %v247 = vpop.permute.xlu0 %246
  %248 = vrot.lane.b32.xlu0 %v201, 32
  %v249 = vpop.permute.xlu0 %248
  %250 = vrot.lane.b32.xlu0 %v202, 32
  %v251 = vpop.permute.xlu0 %250
  %252 = vrot.lane.b32.xlu0 %v203, 32
  %v253 = vpop.permute.xlu0 %252
  %v258 = vsel %vm81, %v238, %v247
  %v259 = vsel %vm81, %v239, %v249
  %v260 = vsel %vm81, %v240, %v251
  %v261 = vsel %vm81, %v241, %v253
  %v262 = vpack.c.bf16 %v259, %v258
  %v263 = vpack.c.bf16 %v261, %v260
  %v264 = vpack.c.bf16 %v205, %v204
  %v265 = vpack.c.bf16 %v207, %v206
  %v266 = vpack.c.bf16 %v209, %v208
  %v267 = vpack.c.bf16 %v211, %v210
  %v269 = vlaneseq
  %v270 = vshrl.u32 %v269, 7
  %v271 = vsub.s32 0, %v270
  %v272 = vrot.slane %v213, %v271
  %vm274 = vcmask 523264
  %v276 = vsel %vm274, %v262, 0
  %v279 = vsel %vm274, %v263, 0
  %281 = vmatprep.subr.bf16.mxu0 0
  %282 = vmatpush1.bf16.msra.mxu0 %v264
  %283 = vmatprep.subr.bf16.mxu0 0
  %284 = vmatpush1.bf16.msra.mxu0 %v265
  %285 = vmatprep.subr.bf16.mxu0 0
  %286 = vmatpush1.bf16.msra.mxu0 %v266
  %287 = vmatprep.subr.bf16.mxu0 0
  %288 = vmatpush1.bf16.msra.mxu0 %v267
  %289 = vmatprep.subr.bf16.mxu0 0
  %290 = vmatpush1.bf16.msra.mxu0 0
  %291 = vmatprep.subr.bf16.mxu0 0
  %292 = vmatpush1.bf16.msra.mxu0 0
  %293 = vmatprep.subr.bf16.mxu0 0
  %294 = vmatpush1.bf16.msra.mxu0 0
  %295 = vmatprep.subr.bf16.mxu0 0
  %296 = vmatpush1.bf16.msra.mxu0 0
  %297 = vmatprep.subr.bf16.mxu0 0
  %298 = vmatpush1.bf16.msra.mxu0 0
  %299 = vmatprep.subr.bf16.mxu0 0
  %300 = vmatpush1.bf16.msra.mxu0 0
  %301 = vmatprep.subr.bf16.mxu0 0
  %302 = vmatpush1.bf16.msra.mxu0 0
  %303 = vmatprep.subr.bf16.mxu0 0
  %304 = vmatpush1.bf16.msra.mxu0 0
  %305 = vmatprep.subr.bf16.mxu0 0
  %306 = vmatpush1.bf16.msra.mxu0 0
  %307 = vmatprep.subr.bf16.mxu0 0
  %308 = vmatpush1.bf16.msra.mxu0 0
  %309 = vmatprep.subr.bf16.mxu0 0
  %310 = vmatpush1.bf16.msra.mxu0 0
  %311 = vmatprep.subr.bf16.mxu0 0
  %312 = vmatpush1.bf16.msra.mxu0 0
  %313 = vmatprep.mubr.bf16.mxu0 0
  %314 = vmatmul.mubr.bf16.gmra.mrb[0].mxu0 %v276
  %v315 = vpop.f32.mrb[0].mxu0
  %v316 = vadd.f32 %v272, %v315
  %v317 = vpop.f32.mrb[0].mxu0
  %v318 = vpop.f32.mrb[0].mxu0
  %v319 = vadd.f32 %v272, %v318
  %v320 = vpop.f32.mrb[0].mxu0
  %321 = vmatprep.mubr.bf16.mxu0 0
  %322 = vmatmul.mubr.bf16.gmra.mrb[0].mxu0 %v279
  %v323 = vpop.f32.mrb[0].mxu0
  %v324 = vadd.f32 %v272, %v323
  %v325 = vpop.f32.mrb[0].mxu0
  %v326 = vpop.f32.mrb[0].mxu0
  %v327 = vadd.f32 %v272, %v326
  %v328 = vpop.f32.mrb[0].mxu0
  %329 = vdwg.mxu0
  %v330 = vsel %vm81, %v316, 0.0
  %v331 = vsel %vm81, %v319, 0.0
  %v332 = vadd.f32 %v330, %v331
  %v333 = vsel %vm81, %v324, 0.0
  %v334 = vadd.f32 %v332, %v333
  %v335 = vsel %vm81, %v327, 0.0
  %v336 = vadd.f32 %v334, %v335
  %v337 = vrot.slane %v336, 4
  %v338 = vadd.f32 %v336, %v337
  %v339 = vrot.slane %v338, 2
  %v340 = vadd.f32 %v338, %v339
  %v341 = vrot.slane %v340, 1
  %v342 = vadd.f32 %v340, %v341
  %v343 = vmul.f32 %v342, %v150
  %v344 = vsub.f32 %v316, %v343
  %v345 = vsub.f32 %v319, %v343
  %v346 = vsub.f32 %v324, %v343
  %v347 = vsub.f32 %v327, %v343
  %v348 = vmul.f32 %v344, %v344
  %v349 = vmul.f32 %v345, %v345
  %v350 = vmul.f32 %v346, %v346
  %v351 = vmul.f32 %v347, %v347
  %v352 = vsel %vm81, %v348, 0.0
  %v353 = vsel %vm81, %v349, 0.0
  %v354 = vadd.f32 %v352, %v353
  %v355 = vsel %vm81, %v350, 0.0
  %v356 = vadd.f32 %v354, %v355
  %v357 = vsel %vm81, %v351, 0.0
  %v358 = vadd.f32 %v356, %v357
  %v359 = vrot.slane %v358, 4
  %v360 = vadd.f32 %v358, %v359
  %v361 = vrot.slane %v360, 2
  %v362 = vadd.f32 %v360, %v361
  %v363 = vrot.slane %v362, 1
  %v364 = vadd.f32 %v362, %v363
  %v365 = vmul.f32 %v364, %v150
  %v366 = vadd.f32 %v365, 1e-05
  %v367 = vrsqrt.pop %v366
  %v368 = vmul.f32 %v344, %v367
  %v369 = vmul.f32 %v345, %v367
  %v370 = vmul.f32 %v346, %v367
  %v371 = vmul.f32 %v347, %v367
  %v373 = vlaneseq
  %v374 = vshrl.u32 %v373, 7
  %v375 = vsub.s32 0, %v374
  %v376 = vrot.slane %v215, %v375
  %v378 = vmul.f32 %v368, %v376
  %v379 = vmul.f32 %v369, %v376
  %v380 = vmul.f32 %v370, %v376
  %v381 = vmul.f32 %v371, %v376
  %v383 = vlaneseq
  %v384 = vshrl.u32 %v383, 7
  %v385 = vsub.s32 0, %v384
  %v386 = vrot.slane %v217, %v385
  %v388 = vadd.f32 %v378, %v386
  %v389 = vadd.f32 %v379, %v386
  %v390 = vadd.f32 %v380, %v386
  %v391 = vadd.f32 %v381, %v386
  %v392 = vmax.f32 %v388, 0.0
  %v393 = vmax.f32 %v389, 0.0
  %v394 = vmax.f32 %v390, 0.0
  %v395 = vmax.f32 %v391, 0.0
  %v396 = vld [vmem:[%s3] sm:$0xff]
  %v397 = vld [vmem:[%s3 + $0x8] sm:$0xff]
  %v398 = vld [vmem:[%s3 + $0x10] sm:$0xff]
  %v399 = vld [vmem:[%s3 + $0x18] sm:$0xff]
  %v400 = vld [vmem:[%s3 + $0x20] sm:$0xff]
  %v401 = vld [vmem:[%s3 + $0x28] sm:$0xff]
  %v402 = vld [vmem:[%s3 + $0x30] sm:$0xff]
  %v403 = vld [vmem:[%s3 + $0x38] sm:$0xff]
  %v404 = vld [vmem:[%s3 + $0x40] sm:$0xff]
  %v405 = vld [vmem:[%s3 + $0x48] sm:$0xff]
  %v406 = vld [vmem:[%s3 + $0x50] sm:$0xff]
  %v407 = vld [vmem:[%s3 + $0x58] sm:$0xff]
  %s408 = scalar_lea.vmem %s5, 2
  %v409 = vld [vmem:[%s408] sm:$0x1]
  %s410 = scalar_lea.vmem %s6, 2
  %v411 = vld [vmem:[%s410] sm:$0x1]
  %s412 = scalar_lea.vmem %s7, 2
  %v413 = vld [vmem:[%s412] sm:$0x1]
  %v414 = vrot.slane %v392, 7
  %v415 = vrot.slane %v394, 7
  %v416 = vrot.slane %v393, 7
  %v417 = vrot.slane %v395, 7
  %v418 = vsel %vm225, %v414, %v416
  %v419 = vsel %vm225, %v415, %v417
  %v420 = vsel %vm225, %v416, %v414
  %v421 = vsel %vm225, %v417, %v415
  %v422 = vsel %vm236, %v420, 0.0
  %v423 = vsel %vm237, %v418, 0.0
  %v424 = vsel %vm236, %v421, 0.0
  %v425 = vsel %vm237, %v419, 0.0
  %v426 = vrot.slane %v392, 1
  %v427 = vrot.slane %v394, 1
  %v428 = vrot.slane %v393, 1
  %v429 = vrot.slane %v395, 1
  %vm430 = vcmp.lt.s32.totalorder %v219, 7
  %v431 = vsel %vm430, %v426, %v428
  %v432 = vsel %vm430, %v427, %v429
  %v433 = vsel %vm430, %v428, %v426
  %v434 = vsel %vm430, %v429, %v427
  %v435 = vadd.s32 %v219, 1
  %v436 = vadd.s32 %v220, 1
  %vm437 = vcmp.ge.s32.totalorder %v435, 0
  %vm438 = vcmp.ge.s32.totalorder %v436, 0
  %vm439 = vcmp.lt.s32.totalorder %v435, 16
  %vm440 = vcmp.lt.s32.totalorder %v436, 16
  %vm441 = vmand %vm437, %vm439
  %vm442 = vmand %vm438, %vm440
  %v443 = vsel %vm441, %v431, 0.0
  %v444 = vsel %vm442, %v433, 0.0
  %v445 = vsel %vm441, %v432, 0.0
  %v446 = vsel %vm442, %v434, 0.0
  %451 = vrot.lane.b32.xlu0 %v392, 32
  %v452 = vpop.permute.xlu0 %451
  %453 = vrot.lane.b32.xlu0 %v393, 32
  %v454 = vpop.permute.xlu0 %453
  %455 = vrot.lane.b32.xlu0 %v394, 32
  %v456 = vpop.permute.xlu0 %455
  %457 = vrot.lane.b32.xlu0 %v395, 32
  %v458 = vpop.permute.xlu0 %457
  %467 = vrot.lane.b32.xlu0 %v443, 64
  %v468 = vpop.permute.xlu0 %467
  %469 = vrot.lane.b32.xlu0 %v444, 64
  %v470 = vpop.permute.xlu0 %469
  %471 = vrot.lane.b32.xlu0 %v445, 64
  %v472 = vpop.permute.xlu0 %471
  %473 = vrot.lane.b32.xlu0 %v446, 64
  %v474 = vpop.permute.xlu0 %473
  %v479 = vsel %vm81, %v422, %v452
  %v480 = vsel %vm81, %v423, %v454
  %v481 = vsel %vm81, %v424, %v456
  %v482 = vsel %vm81, %v425, %v458
  %v483 = vsel %vm274, %v479, %v468
  %v484 = vsel %vm274, %v480, %v470
  %v485 = vsel %vm274, %v481, %v472
  %v486 = vsel %vm274, %v482, %v474
  %v487 = vpack.c.bf16 %v484, %v483
  %v488 = vpack.c.bf16 %v486, %v485
  %v489 = vpack.c.bf16 %v397, %v396
  %v490 = vpack.c.bf16 %v399, %v398
  %v491 = vpack.c.bf16 %v401, %v400
  %v492 = vpack.c.bf16 %v403, %v402
  %v493 = vpack.c.bf16 %v405, %v404
  %v494 = vpack.c.bf16 %v407, %v406
  %v496 = vlaneseq
  %v497 = vshrl.u32 %v496, 7
  %v498 = vsub.s32 0, %v497
  %v499 = vrot.slane %v409, %v498
  %vm501 = vcmask 785408
  %v503 = vsel %vm501, %v487, 0
  %v506 = vsel %vm501, %v488, 0
  %508 = vmatprep.subr.bf16.mxu0 0
  %509 = vmatpush1.bf16.msra.mxu0 %v489
  %510 = vmatprep.subr.bf16.mxu0 0
  %511 = vmatpush1.bf16.msra.mxu0 %v490
  %512 = vmatprep.subr.bf16.mxu0 0
  %513 = vmatpush1.bf16.msra.mxu0 %v491
  %514 = vmatprep.subr.bf16.mxu0 0
  %515 = vmatpush1.bf16.msra.mxu0 %v492
  %516 = vmatprep.subr.bf16.mxu0 0
  %517 = vmatpush1.bf16.msra.mxu0 %v493
  %518 = vmatprep.subr.bf16.mxu0 0
  %519 = vmatpush1.bf16.msra.mxu0 %v494
  %520 = vmatprep.subr.bf16.mxu0 0
  %521 = vmatpush1.bf16.msra.mxu0 0
  %522 = vmatprep.subr.bf16.mxu0 0
  %523 = vmatpush1.bf16.msra.mxu0 0
  %524 = vmatprep.subr.bf16.mxu0 0
  %525 = vmatpush1.bf16.msra.mxu0 0
  %526 = vmatprep.subr.bf16.mxu0 0
  %527 = vmatpush1.bf16.msra.mxu0 0
  %528 = vmatprep.subr.bf16.mxu0 0
  %529 = vmatpush1.bf16.msra.mxu0 0
  %530 = vmatprep.subr.bf16.mxu0 0
  %531 = vmatpush1.bf16.msra.mxu0 0
  %532 = vmatprep.subr.bf16.mxu0 0
  %533 = vmatpush1.bf16.msra.mxu0 0
  %534 = vmatprep.subr.bf16.mxu0 0
  %535 = vmatpush1.bf16.msra.mxu0 0
  %536 = vmatprep.subr.bf16.mxu0 0
  %537 = vmatpush1.bf16.msra.mxu0 0
  %538 = vmatprep.subr.bf16.mxu0 0
  %539 = vmatpush1.bf16.msra.mxu0 0
  %540 = vmatprep.mubr.bf16.mxu0 0
  %541 = vmatmul.mubr.bf16.gmra.mrb[0].mxu0 %v503
  %v542 = vpop.f32.mrb[0].mxu0
  %v543 = vadd.f32 %v499, %v542
  %v544 = vpop.f32.mrb[0].mxu0
  %v545 = vpop.f32.mrb[0].mxu0
  %v546 = vadd.f32 %v499, %v545
  %v547 = vpop.f32.mrb[0].mxu0
  %548 = vmatprep.mubr.bf16.mxu0 0
  %549 = vmatmul.mubr.bf16.gmra.mrb[0].mxu0 %v506
  %v550 = vpop.f32.mrb[0].mxu0
  %v551 = vadd.f32 %v499, %v550
  %v552 = vpop.f32.mrb[0].mxu0
  %v553 = vpop.f32.mrb[0].mxu0
  %v554 = vadd.f32 %v499, %v553
  %v555 = vpop.f32.mrb[0].mxu0
  %556 = vdwg.mxu0
  %v557 = vsel %vm81, %v543, 0.0
  %v558 = vsel %vm81, %v546, 0.0
  %v559 = vadd.f32 %v557, %v558
  %v560 = vsel %vm81, %v551, 0.0
  %v561 = vadd.f32 %v559, %v560
  %v562 = vsel %vm81, %v554, 0.0
  %v563 = vadd.f32 %v561, %v562
  %v564 = vrot.slane %v563, 4
  %v565 = vadd.f32 %v563, %v564
  %v566 = vrot.slane %v565, 2
  %v567 = vadd.f32 %v565, %v566
  %v568 = vrot.slane %v567, 1
  %v569 = vadd.f32 %v567, %v568
  %v570 = vmul.f32 %v569, %v150
  %v571 = vsub.f32 %v543, %v570
  %v572 = vsub.f32 %v546, %v570
  %v573 = vsub.f32 %v551, %v570
  %v574 = vsub.f32 %v554, %v570
  %v575 = vmul.f32 %v571, %v571
  %v576 = vmul.f32 %v572, %v572
  %v577 = vmul.f32 %v573, %v573
  %v578 = vmul.f32 %v574, %v574
  %v579 = vsel %vm81, %v575, 0.0
  %v580 = vsel %vm81, %v576, 0.0
  %v581 = vadd.f32 %v579, %v580
  %v582 = vsel %vm81, %v577, 0.0
  %v583 = vadd.f32 %v581, %v582
  %v584 = vsel %vm81, %v578, 0.0
  %v585 = vadd.f32 %v583, %v584
  %v586 = vrot.slane %v585, 4
  %v587 = vadd.f32 %v585, %v586
  %v588 = vrot.slane %v587, 2
  %v589 = vadd.f32 %v587, %v588
  %v590 = vrot.slane %v589, 1
  %v591 = vadd.f32 %v589, %v590
  %v592 = vmul.f32 %v591, %v150
  %v593 = vadd.f32 %v592, 1e-05
  %v594 = vrsqrt.pop %v593
  %v595 = vmul.f32 %v571, %v594
  %v596 = vmul.f32 %v572, %v594
  %v597 = vmul.f32 %v573, %v594
  %v598 = vmul.f32 %v574, %v594
  %v600 = vlaneseq
  %v601 = vshrl.u32 %v600, 7
  %v602 = vsub.s32 0, %v601
  %v603 = vrot.slane %v411, %v602
  %v605 = vmul.f32 %v595, %v603
  %v606 = vmul.f32 %v596, %v603
  %v607 = vmul.f32 %v597, %v603
  %v608 = vmul.f32 %v598, %v603
  %v610 = vlaneseq
  %v611 = vshrl.u32 %v610, 7
  %v612 = vsub.s32 0, %v611
  %v613 = vrot.slane %v413, %v612
  %v615 = vadd.f32 %v605, %v613
  %v616 = vadd.f32 %v606, %v613
  %v617 = vadd.f32 %v607, %v613
  %v618 = vadd.f32 %v608, %v613
  %v619 = vmax.f32 %v615, 0.0
  %v620 = vmax.f32 %v616, 0.0
  %v621 = vmax.f32 %v617, 0.0
  %v622 = vmax.f32 %v618, 0.0
  %v623 = vld [vmem:[%s4] sm:$0xff]
  %v624 = vld [vmem:[%s4 + $0x8] sm:$0xff]
  %v625 = vld [vmem:[%s4 + $0x10] sm:$0xff]
  %v626 = vld [vmem:[%s4 + $0x18] sm:$0xff]
  %v627 = vld [vmem:[%s4 + $0x20] sm:$0xff]
  %v628 = vld [vmem:[%s4 + $0x28] sm:$0xff]
  %v629 = vld [vmem:[%s4 + $0x30] sm:$0xff]
  %v630 = vld [vmem:[%s4 + $0x38] sm:$0xff]
  %v631 = vld [vmem:[%s4 + $0x40] sm:$0xff]
  %v632 = vld [vmem:[%s4 + $0x48] sm:$0xff]
  %v633 = vld [vmem:[%s4 + $0x50] sm:$0xff]
  %v634 = vld [vmem:[%s4 + $0x58] sm:$0xff]
  %v635 = vld [vmem:[%s4 + $0x60] sm:$0xff]
  %v636 = vld [vmem:[%s4 + $0x68] sm:$0xff]
  %v637 = vld [vmem:[%s4 + $0x70] sm:$0xff]
  %v638 = vld [vmem:[%s4 + $0x78] sm:$0xff]
  %s639 = scalar_lea.vmem %s5, 3
  %v640 = vld [vmem:[%s639] sm:$0x1]
  %s641 = scalar_lea.vmem %s6, 3
  %v642 = vld [vmem:[%s641] sm:$0x1]
  %s643 = scalar_lea.vmem %s7, 3
  %v644 = vld [vmem:[%s643] sm:$0x1]
  %v645 = vrot.slane %v619, 6
  %v646 = vrot.slane %v621, 6
  %v647 = vrot.slane %v620, 6
  %v648 = vrot.slane %v622, 6
  %vm649 = vcmp.lt.s32.totalorder %v219, 2
  %v650 = vsel %vm649, %v645, %v647
  %v651 = vsel %vm649, %v646, %v648
  %v652 = vsel %vm649, %v647, %v645
  %v653 = vsel %vm649, %v648, %v646
  %v654 = vadd.s32 %v219, 4294967294
  %v655 = vadd.s32 %v220, 4294967294
  %vm656 = vcmp.ge.s32.totalorder %v654, 0
  %vm657 = vcmp.ge.s32.totalorder %v655, 0
  %vm658 = vcmp.lt.s32.totalorder %v654, 16
  %vm659 = vcmp.lt.s32.totalorder %v655, 16
  %vm660 = vmand %vm656, %vm658
  %vm661 = vmand %vm657, %vm659
  %v662 = vsel %vm660, %v652, 0.0
  %v663 = vsel %vm661, %v650, 0.0
  %v664 = vsel %vm660, %v653, 0.0
  %v665 = vsel %vm661, %v651, 0.0
  %v666 = vrot.slane %v619, 7
  %v667 = vrot.slane %v621, 7
  %v668 = vrot.slane %v620, 7
  %v669 = vrot.slane %v622, 7
  %v670 = vsel %vm225, %v666, %v668
  %v671 = vsel %vm225, %v667, %v669
  %v672 = vsel %vm225, %v668, %v666
  %v673 = vsel %vm225, %v669, %v667
  %v674 = vsel %vm236, %v672, 0.0
  %v675 = vsel %vm237, %v670, 0.0
  %v676 = vsel %vm236, %v673, 0.0
  %v677 = vsel %vm237, %v671, 0.0
  %v678 = vrot.slane %v619, 1
  %v679 = vrot.slane %v621, 1
  %v680 = vrot.slane %v620, 1
  %v681 = vrot.slane %v622, 1
  %v682 = vsel %vm430, %v678, %v680
  %v683 = vsel %vm430, %v679, %v681
  %v684 = vsel %vm430, %v680, %v678
  %v685 = vsel %vm430, %v681, %v679
  %v686 = vsel %vm441, %v682, 0.0
  %v687 = vsel %vm442, %v684, 0.0
  %v688 = vsel %vm441, %v683, 0.0
  %v689 = vsel %vm442, %v685, 0.0
  %694 = vrot.lane.b32.xlu0 %v674, 32
  %v695 = vpop.permute.xlu0 %694
  %696 = vrot.lane.b32.xlu0 %v675, 32
  %v697 = vpop.permute.xlu0 %696
  %698 = vrot.lane.b32.xlu0 %v676, 32
  %v699 = vpop.permute.xlu0 %698
  %700 = vrot.lane.b32.xlu0 %v677, 32
  %v701 = vpop.permute.xlu0 %700
  %710 = vrot.lane.b32.xlu0 %v619, 64
  %v711 = vpop.permute.xlu0 %710
  %712 = vrot.lane.b32.xlu0 %v620, 64
  %v713 = vpop.permute.xlu0 %712
  %714 = vrot.lane.b32.xlu0 %v621, 64
  %v715 = vpop.permute.xlu0 %714
  %716 = vrot.lane.b32.xlu0 %v622, 64
  %v717 = vpop.permute.xlu0 %716
  %726 = vrot.lane.b32.xlu0 %v686, 96
  %v727 = vpop.permute.xlu0 %726
  %728 = vrot.lane.b32.xlu0 %v687, 96
  %v729 = vpop.permute.xlu0 %728
  %730 = vrot.lane.b32.xlu0 %v688, 96
  %v731 = vpop.permute.xlu0 %730
  %732 = vrot.lane.b32.xlu0 %v689, 96
  %v733 = vpop.permute.xlu0 %732
  %v738 = vsel %vm81, %v662, %v695
  %v739 = vsel %vm81, %v663, %v697
  %v740 = vsel %vm81, %v664, %v699
  %v741 = vsel %vm81, %v665, %v701
  %v742 = vsel %vm274, %v738, %v711
  %v743 = vsel %vm274, %v739, %v713
  %v744 = vsel %vm274, %v740, %v715
  %v745 = vsel %vm274, %v741, %v717
  %v746 = vsel %vm501, %v742, %v727
  %v747 = vsel %vm501, %v743, %v729
  %v748 = vsel %vm501, %v744, %v731
  %v749 = vsel %vm501, %v745, %v733
  %v750 = vpack.c.bf16 %v747, %v746
  %v751 = vpack.c.bf16 %v749, %v748
  %v752 = vpack.c.bf16 %v624, %v623
  %v753 = vpack.c.bf16 %v626, %v625
  %v754 = vpack.c.bf16 %v628, %v627
  %v755 = vpack.c.bf16 %v630, %v629
  %v756 = vpack.c.bf16 %v632, %v631
  %v757 = vpack.c.bf16 %v634, %v633
  %v758 = vpack.c.bf16 %v636, %v635
  %v759 = vpack.c.bf16 %v638, %v637
  %v761 = vlaneseq
  %v762 = vshrl.u32 %v761, 7
  %v763 = vsub.s32 0, %v762
  %v764 = vrot.slane %v640, %v763
  %766 = vmatprep.subr.bf16.mxu0 0
  %767 = vmatpush1.bf16.msra.mxu0 %v752
  %768 = vmatprep.subr.bf16.mxu0 0
  %769 = vmatpush1.bf16.msra.mxu0 %v753
  %770 = vmatprep.subr.bf16.mxu0 0
  %771 = vmatpush1.bf16.msra.mxu0 %v754
  %772 = vmatprep.subr.bf16.mxu0 0
  %773 = vmatpush1.bf16.msra.mxu0 %v755
  %774 = vmatprep.subr.bf16.mxu0 0
  %775 = vmatpush1.bf16.msra.mxu0 %v756
  %776 = vmatprep.subr.bf16.mxu0 0
  %777 = vmatpush1.bf16.msra.mxu0 %v757
  %778 = vmatprep.subr.bf16.mxu0 0
  %779 = vmatpush1.bf16.msra.mxu0 %v758
  %780 = vmatprep.subr.bf16.mxu0 0
  %781 = vmatpush1.bf16.msra.mxu0 %v759
  %782 = vmatprep.subr.bf16.mxu0 0
  %783 = vmatpush1.bf16.msra.mxu0 0
  %784 = vmatprep.subr.bf16.mxu0 0
  %785 = vmatpush1.bf16.msra.mxu0 0
  %786 = vmatprep.subr.bf16.mxu0 0
  %787 = vmatpush1.bf16.msra.mxu0 0
  %788 = vmatprep.subr.bf16.mxu0 0
  %789 = vmatpush1.bf16.msra.mxu0 0
  %790 = vmatprep.subr.bf16.mxu0 0
  %791 = vmatpush1.bf16.msra.mxu0 0
  %792 = vmatprep.subr.bf16.mxu0 0
  %793 = vmatpush1.bf16.msra.mxu0 0
  %794 = vmatprep.subr.bf16.mxu0 0
  %795 = vmatpush1.bf16.msra.mxu0 0
  %796 = vmatprep.subr.bf16.mxu0 0
  %797 = vmatpush1.bf16.msra.mxu0 0
  %798 = vmatprep.mubr.bf16.mxu0 0
  %799 = vmatmul.mubr.bf16.gmra.mrb[0].mxu0 %v750
  %v800 = vpop.f32.mrb[0].mxu0
  %v801 = vadd.f32 %v764, %v800
  %v802 = vpop.f32.mrb[0].mxu0
  %v803 = vpop.f32.mrb[0].mxu0
  %v804 = vadd.f32 %v764, %v803
  %v805 = vpop.f32.mrb[0].mxu0
  %806 = vmatprep.mubr.bf16.mxu0 0
  %807 = vmatmul.mubr.bf16.gmra.mrb[0].mxu0 %v751
  %v808 = vpop.f32.mrb[0].mxu0
  %v809 = vadd.f32 %v764, %v808
  %v810 = vpop.f32.mrb[0].mxu0
  %v811 = vpop.f32.mrb[0].mxu0
  %v812 = vadd.f32 %v764, %v811
  %v813 = vpop.f32.mrb[0].mxu0
  %814 = vdwg.mxu0
  %v815 = vsel %vm81, %v801, 0.0
  %v816 = vsel %vm81, %v804, 0.0
  %v817 = vadd.f32 %v815, %v816
  %v818 = vsel %vm81, %v809, 0.0
  %v819 = vadd.f32 %v817, %v818
  %v820 = vsel %vm81, %v812, 0.0
  %v821 = vadd.f32 %v819, %v820
  %v822 = vrot.slane %v821, 4
  %v823 = vadd.f32 %v821, %v822
  %v824 = vrot.slane %v823, 2
  %v825 = vadd.f32 %v823, %v824
  %v826 = vrot.slane %v825, 1
  %v827 = vadd.f32 %v825, %v826
  %v828 = vmul.f32 %v827, %v150
  %v829 = vsub.f32 %v801, %v828
  %v830 = vsub.f32 %v804, %v828
  %v831 = vsub.f32 %v809, %v828
  %v832 = vsub.f32 %v812, %v828
  %v833 = vmul.f32 %v829, %v829
  %v834 = vmul.f32 %v830, %v830
  %v835 = vmul.f32 %v831, %v831
  %v836 = vmul.f32 %v832, %v832
  %v837 = vsel %vm81, %v833, 0.0
  %v838 = vsel %vm81, %v834, 0.0
  %v839 = vadd.f32 %v837, %v838
  %v840 = vsel %vm81, %v835, 0.0
  %v841 = vadd.f32 %v839, %v840
  %v842 = vsel %vm81, %v836, 0.0
  %v843 = vadd.f32 %v841, %v842
  %v844 = vrot.slane %v843, 4
  %v845 = vadd.f32 %v843, %v844
  %v846 = vrot.slane %v845, 2
  %v847 = vadd.f32 %v845, %v846
  %v848 = vrot.slane %v847, 1
  %v849 = vadd.f32 %v847, %v848
  %v850 = vmul.f32 %v849, %v150
  %v851 = vadd.f32 %v850, 1e-05
  %v852 = vrsqrt.pop %v851
  %v853 = vmul.f32 %v829, %v852
  %v854 = vmul.f32 %v830, %v852
  %v855 = vmul.f32 %v831, %v852
  %v856 = vmul.f32 %v832, %v852
  %v858 = vlaneseq
  %v859 = vshrl.u32 %v858, 7
  %v860 = vsub.s32 0, %v859
  %v861 = vrot.slane %v642, %v860
  %v863 = vmul.f32 %v853, %v861
  %v864 = vmul.f32 %v854, %v861
  %v865 = vmul.f32 %v855, %v861
  %v866 = vmul.f32 %v856, %v861
  %v868 = vlaneseq
  %v869 = vshrl.u32 %v868, 7
  %v870 = vsub.s32 0, %v869
  %v871 = vrot.slane %v644, %v870
  %v873 = vadd.f32 %v863, %v871
  %v874 = vadd.f32 %v864, %v871
  %v875 = vadd.f32 %v865, %v871
  %v876 = vadd.f32 %v866, %v871
  %v877 = vmax.f32 %v873, 0.0
  %v878 = vmax.f32 %v874, 0.0
  %v879 = vmax.f32 %v875, 0.0
  %v880 = vmax.f32 %v876, 0.0
  %885 = vrot.lane.b32.xlu0 %v877, 96
  %v886 = vpop.permute.xlu0 %885
  %887 = vrot.lane.b32.xlu0 %v878, 96
  %v888 = vpop.permute.xlu0 %887
  %889 = vrot.lane.b32.xlu0 %v879, 96
  %v890 = vpop.permute.xlu0 %889
  %891 = vrot.lane.b32.xlu0 %v880, 96
  %v892 = vpop.permute.xlu0 %891
  %v897 = vsel %vm81, %v200, %v452
  %v898 = vsel %vm81, %v201, %v454
  %v899 = vsel %vm81, %v202, %v456
  %v900 = vsel %vm81, %v203, %v458
  %v901 = vsel %vm274, %v897, %v711
  %v902 = vsel %vm274, %v898, %v713
  %v903 = vsel %vm274, %v899, %v715
  %v904 = vsel %vm274, %v900, %v717
  %v905 = vsel %vm501, %v901, %v886
  %v906 = vsel %vm501, %v902, %v888
  %v907 = vsel %vm501, %v903, %v890
  %v908 = vsel %vm501, %v904, %v892
  %vm909 = vcmp.eq.s32.totalorder %v219, 0
  %vm910 = vcmp.eq.s32.totalorder %v220, 0
  %v911 = vrot.slane %v905, 7
  %v912 = vrot.slane %v907, 7
  %v913 = vrot.slane %v906, 7
  %v914 = vrot.slane %v908, 7
  %v915 = vsel %vm225, %v911, %v913
  %v916 = vsel %vm225, %v912, %v914
  %v917 = vsel %vm225, %v913, %v911
  %v918 = vsel %vm225, %v914, %v912
  %v919 = vsel %vm909, %v905, %v917
  %v920 = vsel %vm910, %v906, %v915
  %v921 = vsel %vm909, %v907, %v918
  %v922 = vsel %vm910, %v908, %v916
  %v923 = vmax.f32 %v905, %v919
  %v924 = vmax.f32 %v906, %v920
  %v925 = vmax.f32 %v907, %v921
  %v926 = vmax.f32 %v908, %v922
  %v927 = vld [vmem:[%s8] sm:$0xff]
  %v928 = vld [vmem:[%s8 + $0x8] sm:$0xff]
  %v929 = vld [vmem:[%s8 + $0x10] sm:$0xff]
  %v930 = vld [vmem:[%s8 + $0x18] sm:$0xff]
  %v931 = vld [vmem:[%s8 + $0x20] sm:$0xff]
  %v932 = vld [vmem:[%s8 + $0x28] sm:$0xff]
  %v933 = vld [vmem:[%s8 + $0x30] sm:$0xff]
  %v934 = vld [vmem:[%s8 + $0x38] sm:$0xff]
  %v935 = vld [vmem:[%s8 + $0x40] sm:$0xff]
  %v936 = vld [vmem:[%s8 + $0x48] sm:$0xff]
  %v937 = vld [vmem:[%s8 + $0x50] sm:$0xff]
  %v938 = vld [vmem:[%s8 + $0x58] sm:$0xff]
  %v939 = vld [vmem:[%s8 + $0x60] sm:$0xff]
  %v940 = vld [vmem:[%s8 + $0x68] sm:$0xff]
  %v941 = vld [vmem:[%s8 + $0x70] sm:$0xff]
  %v942 = vld [vmem:[%s8 + $0x78] sm:$0xff]
  %v943 = vld [vmem:[%s8 + $0x80] sm:$0xff]
  %v944 = vld [vmem:[%s8 + $0x88] sm:$0xff]
  %v945 = vld [vmem:[%s8 + $0x90] sm:$0xff]
  %v946 = vld [vmem:[%s8 + $0x98] sm:$0xff]
  %v947 = vld [vmem:[%s8 + $0xa0] sm:$0xff]
  %v948 = vld [vmem:[%s8 + $0xa8] sm:$0xff]
  %v949 = vld [vmem:[%s8 + $0xb0] sm:$0xff]
  %v950 = vld [vmem:[%s8 + $0xb8] sm:$0xff]
  %v951 = vld [vmem:[%s8 + $0xc0] sm:$0xff]
  %v952 = vld [vmem:[%s8 + $0xc8] sm:$0xff]
  %v953 = vld [vmem:[%s8 + $0xd0] sm:$0xff]
  %v954 = vld [vmem:[%s8 + $0xd8] sm:$0xff]
  %v955 = vld [vmem:[%s8 + $0xe0] sm:$0xff]
  %v956 = vld [vmem:[%s8 + $0xe8] sm:$0xff]
  %v957 = vld [vmem:[%s8 + $0xf0] sm:$0xff]
  %v958 = vld [vmem:[%s8 + $0xf8] sm:$0xff]
  %v959 = vld [vmem:[%s8 + $0x100] sm:$0xff]
  %v960 = vld [vmem:[%s8 + $0x108] sm:$0xff]
  %v961 = vld [vmem:[%s8 + $0x110] sm:$0xff]
  %v962 = vld [vmem:[%s8 + $0x118] sm:$0xff]
  %v963 = vld [vmem:[%s8 + $0x120] sm:$0xff]
  %v964 = vld [vmem:[%s8 + $0x128] sm:$0xff]
  %v965 = vld [vmem:[%s8 + $0x130] sm:$0xff]
  %v966 = vld [vmem:[%s8 + $0x138] sm:$0xff]
  %v967 = vld [vmem:[%s8 + $0x140] sm:$0xff]
  %v968 = vld [vmem:[%s8 + $0x148] sm:$0xff]
  %v969 = vld [vmem:[%s8 + $0x150] sm:$0xff]
  %v970 = vld [vmem:[%s8 + $0x158] sm:$0xff]
  %v971 = vld [vmem:[%s8 + $0x160] sm:$0xff]
  %v972 = vld [vmem:[%s8 + $0x168] sm:$0xff]
  %v973 = vld [vmem:[%s8 + $0x170] sm:$0xff]
  %v974 = vld [vmem:[%s8 + $0x178] sm:$0xff]
  %v975 = vld [vmem:[%s9] sm:$0x1]
  %v976 = vld [vmem:[%s10] sm:$0x1]
  %v977 = vld [vmem:[%s11] sm:$0x1]
  %v978 = vrot.slane %v923, 7
  %v979 = vrot.slane %v925, 7
  %v980 = vrot.slane %v924, 7
  %v981 = vrot.slane %v926, 7
  %v982 = vsel %vm225, %v978, %v980
  %v983 = vsel %vm225, %v979, %v981
  %v984 = vsel %vm225, %v980, %v978
  %v985 = vsel %vm225, %v981, %v979
  %v986 = vsel %vm236, %v984, 0.0
  %v987 = vsel %vm237, %v982, 0.0
  %v988 = vsel %vm236, %v985, 0.0
  %v989 = vsel %vm237, %v983, 0.0
  %v990 = vrot.slane %v923, 1
  %v991 = vrot.slane %v925, 1
  %v992 = vrot.slane %v924, 1
  %v993 = vrot.slane %v926, 1
  %v994 = vsel %vm430, %v990, %v992
  %v995 = vsel %vm430, %v991, %v993
  %v996 = vsel %vm430, %v992, %v990
  %v997 = vsel %vm430, %v993, %v991
  %v998 = vsel %vm441, %v994, 0.0
  %v999 = vsel %vm442, %v996, 0.0
  %v1000 = vsel %vm441, %v995, 0.0
  %v1001 = vsel %vm442, %v997, 0.0
  %v1002 = vpack.c.bf16 %v987, %v986
  %v1003 = vpack.c.bf16 %v924, %v923
  %v1004 = vpack.c.bf16 %v999, %v998
  %v1005 = vpack.c.bf16 %v989, %v988
  %v1006 = vpack.c.bf16 %v926, %v925
  %v1007 = vpack.c.bf16 %v1001, %v1000
  %v1008 = vpack.c.bf16 %v928, %v927
  %v1009 = vpack.c.bf16 %v930, %v929
  %v1010 = vpack.c.bf16 %v932, %v931
  %v1011 = vpack.c.bf16 %v934, %v933
  %v1012 = vpack.c.bf16 %v936, %v935
  %v1013 = vpack.c.bf16 %v938, %v937
  %v1014 = vpack.c.bf16 %v940, %v939
  %v1015 = vpack.c.bf16 %v942, %v941
  %v1016 = vpack.c.bf16 %v944, %v943
  %v1017 = vpack.c.bf16 %v946, %v945
  %v1018 = vpack.c.bf16 %v948, %v947
  %v1019 = vpack.c.bf16 %v950, %v949
  %v1020 = vpack.c.bf16 %v952, %v951
  %v1021 = vpack.c.bf16 %v954, %v953
  %v1022 = vpack.c.bf16 %v956, %v955
  %v1023 = vpack.c.bf16 %v958, %v957
  %v1024 = vpack.c.bf16 %v960, %v959
  %v1025 = vpack.c.bf16 %v962, %v961
  %v1026 = vpack.c.bf16 %v964, %v963
  %v1027 = vpack.c.bf16 %v966, %v965
  %v1028 = vpack.c.bf16 %v968, %v967
  %v1029 = vpack.c.bf16 %v970, %v969
  %v1030 = vpack.c.bf16 %v972, %v971
  %v1031 = vpack.c.bf16 %v974, %v973
  %v1033 = vlaneseq
  %v1034 = vshrl.u32 %v1033, 7
  %v1035 = vsub.s32 0, %v1034
  %v1036 = vrot.slane %v975, %v1035
  %1038 = vmatprep.subr.bf16.mxu0 0
  %1039 = vmatpush1.bf16.msra.mxu0 %v1008
  %1040 = vmatprep.subr.bf16.mxu0 0
  %1041 = vmatpush1.bf16.msra.mxu0 %v1009
  %1042 = vmatprep.subr.bf16.mxu0 0
  %1043 = vmatpush1.bf16.msra.mxu0 %v1010
  %1044 = vmatprep.subr.bf16.mxu0 0
  %1045 = vmatpush1.bf16.msra.mxu0 %v1011
  %1046 = vmatprep.subr.bf16.mxu0 0
  %1047 = vmatpush1.bf16.msra.mxu0 %v1012
  %1048 = vmatprep.subr.bf16.mxu0 0
  %1049 = vmatpush1.bf16.msra.mxu0 %v1013
  %1050 = vmatprep.subr.bf16.mxu0 0
  %1051 = vmatpush1.bf16.msra.mxu0 %v1014
  %1052 = vmatprep.subr.bf16.mxu0 0
  %1053 = vmatpush1.bf16.msra.mxu0 %v1015
  %1054 = vmatprep.subr.bf16.mxu0 0
  %1055 = vmatpush1.bf16.msra.mxu0 %v1016
  %1056 = vmatprep.subr.bf16.mxu0 0
  %1057 = vmatpush1.bf16.msra.mxu0 %v1017
  %1058 = vmatprep.subr.bf16.mxu0 0
  %1059 = vmatpush1.bf16.msra.mxu0 %v1018
  %1060 = vmatprep.subr.bf16.mxu0 0
  %1061 = vmatpush1.bf16.msra.mxu0 %v1019
  %1062 = vmatprep.subr.bf16.mxu0 0
  %1063 = vmatpush1.bf16.msra.mxu0 %v1020
  %1064 = vmatprep.subr.bf16.mxu0 0
  %1065 = vmatpush1.bf16.msra.mxu0 %v1021
  %1066 = vmatprep.subr.bf16.mxu0 0
  %1067 = vmatpush1.bf16.msra.mxu0 %v1022
  %1068 = vmatprep.subr.bf16.mxu0 0
  %1069 = vmatpush1.bf16.msra.mxu0 %v1023
  %1070 = vmatprep.mubr.bf16.mxu0 %v1003
  %1071 = vmatmul.mubr.bf16.gmra.mrb[0].mxu0 %v1002
  %v1072 = vpop.f32.mrb[0].mxu0
  %v1073 = vadd.f32 %v1036, %v1072
  %v1074 = vpop.f32.mrb[0].mxu0
  %v1075 = vpop.f32.mrb[0].mxu0
  %v1076 = vadd.f32 %v1036, %v1075
  %v1077 = vpop.f32.mrb[0].mxu0
  %1078 = vmatprep.mubr.bf16.mxu0 %v1006
  %1079 = vmatmul.mubr.bf16.gmra.mrb[0].mxu0 %v1005
  %v1080 = vpop.f32.mrb[0].mxu0
  %v1081 = vadd.f32 %v1036, %v1080
  %v1082 = vpop.f32.mrb[0].mxu0
  %v1083 = vpop.f32.mrb[0].mxu0
  %v1084 = vadd.f32 %v1036, %v1083
  %v1085 = vpop.f32.mrb[0].mxu0
  %1086 = vdwg.mxu0
  %1087 = vmatprep.subr.bf16.mxu0 0
  %1088 = vmatpush1.bf16.msra.mxu0 %v1024
  %1089 = vmatprep.subr.bf16.mxu0 0
  %1090 = vmatpush1.bf16.msra.mxu0 %v1025
  %1091 = vmatprep.subr.bf16.mxu0 0
  %1092 = vmatpush1.bf16.msra.mxu0 %v1026
  %1093 = vmatprep.subr.bf16.mxu0 0
  %1094 = vmatpush1.bf16.msra.mxu0 %v1027
  %1095 = vmatprep.subr.bf16.mxu0 0
  %1096 = vmatpush1.bf16.msra.mxu0 %v1028
  %1097 = vmatprep.subr.bf16.mxu0 0
  %1098 = vmatpush1.bf16.msra.mxu0 %v1029
  %1099 = vmatprep.subr.bf16.mxu0 0
  %1100 = vmatpush1.bf16.msra.mxu0 %v1030
  %1101 = vmatprep.subr.bf16.mxu0 0
  %1102 = vmatpush1.bf16.msra.mxu0 %v1031
  %1103 = vmatprep.subr.bf16.mxu0 0
  %1104 = vmatpush1.bf16.msra.mxu0 0
  %1105 = vmatprep.subr.bf16.mxu0 0
  %1106 = vmatpush1.bf16.msra.mxu0 0
  %1107 = vmatprep.subr.bf16.mxu0 0
  %1108 = vmatpush1.bf16.msra.mxu0 0
  %1109 = vmatprep.subr.bf16.mxu0 0
  %1110 = vmatpush1.bf16.msra.mxu0 0
  %1111 = vmatprep.subr.bf16.mxu0 0
  %1112 = vmatpush1.bf16.msra.mxu0 0
  %1113 = vmatprep.subr.bf16.mxu0 0
  %1114 = vmatpush1.bf16.msra.mxu0 0
  %1115 = vmatprep.subr.bf16.mxu0 0
  %1116 = vmatpush1.bf16.msra.mxu0 0
  %1117 = vmatprep.subr.bf16.mxu0 0
  %1118 = vmatpush1.bf16.msra.mxu0 0
  %1119 = vmatprep.mubr.bf16.mxu0 0
  %1120 = vmatmul.mubr.bf16.gmra.mrb[0].mxu0 %v1004
  %v1121 = vpop.f32.mrb[0].mxu0
  %v1122 = vadd.f32 %v1073, %v1121
  %v1123 = vpop.f32.mrb[0].mxu0
  %v1124 = vpop.f32.mrb[0].mxu0
  %v1125 = vadd.f32 %v1076, %v1124
  %v1126 = vpop.f32.mrb[0].mxu0
  %1127 = vmatprep.mubr.bf16.mxu0 0
  %1128 = vmatmul.mubr.bf16.gmra.mrb[0].mxu0 %v1007
  %v1129 = vpop.f32.mrb[0].mxu0
  %v1130 = vadd.f32 %v1081, %v1129
  %v1131 = vpop.f32.mrb[0].mxu0
  %v1132 = vpop.f32.mrb[0].mxu0
  %v1133 = vadd.f32 %v1084, %v1132
  %v1134 = vpop.f32.mrb[0].mxu0
  %1135 = vdwg.mxu0
  %v1136 = vsel %vm81, %v1122, 0.0
  %v1137 = vsel %vm81, %v1125, 0.0
  %v1138 = vadd.f32 %v1136, %v1137
  %v1139 = vsel %vm81, %v1130, 0.0
  %v1140 = vadd.f32 %v1138, %v1139
  %v1141 = vsel %vm81, %v1133, 0.0
  %v1142 = vadd.f32 %v1140, %v1141
  %v1143 = vrot.slane %v1142, 4
  %v1144 = vadd.f32 %v1142, %v1143
  %v1145 = vrot.slane %v1144, 2
  %v1146 = vadd.f32 %v1144, %v1145
  %v1147 = vrot.slane %v1146, 1
  %v1148 = vadd.f32 %v1146, %v1147
  %v1149 = vmul.f32 %v1148, %v150
  %v1150 = vsub.f32 %v1122, %v1149
  %v1151 = vsub.f32 %v1125, %v1149
  %v1152 = vsub.f32 %v1130, %v1149
  %v1153 = vsub.f32 %v1133, %v1149
  %v1154 = vmul.f32 %v1150, %v1150
  %v1155 = vmul.f32 %v1151, %v1151
  %v1156 = vmul.f32 %v1152, %v1152
  %v1157 = vmul.f32 %v1153, %v1153
  %v1158 = vsel %vm81, %v1154, 0.0
  %v1159 = vsel %vm81, %v1155, 0.0
  %v1160 = vadd.f32 %v1158, %v1159
  %v1161 = vsel %vm81, %v1156, 0.0
  %v1162 = vadd.f32 %v1160, %v1161
  %v1163 = vsel %vm81, %v1157, 0.0
  %v1164 = vadd.f32 %v1162, %v1163
  %v1165 = vrot.slane %v1164, 4
  %v1166 = vadd.f32 %v1164, %v1165
  %v1167 = vrot.slane %v1166, 2
  %v1168 = vadd.f32 %v1166, %v1167
  %v1169 = vrot.slane %v1168, 1
  %v1170 = vadd.f32 %v1168, %v1169
  %v1171 = vmul.f32 %v1170, %v150
  %v1172 = vadd.f32 %v1171, 1e-05
  %v1173 = vrsqrt.pop %v1172
  %v1174 = vmul.f32 %v1150, %v1173
  %v1175 = vmul.f32 %v1151, %v1173
  %v1176 = vmul.f32 %v1152, %v1173
  %v1177 = vmul.f32 %v1153, %v1173
  %v1179 = vlaneseq
  %v1180 = vshrl.u32 %v1179, 7
  %v1181 = vsub.s32 0, %v1180
  %v1182 = vrot.slane %v976, %v1181
  %v1184 = vmul.f32 %v1174, %v1182
  %v1185 = vmul.f32 %v1175, %v1182
  %v1186 = vmul.f32 %v1176, %v1182
  %v1187 = vmul.f32 %v1177, %v1182
  %v1189 = vlaneseq
  %v1190 = vshrl.u32 %v1189, 7
  %v1191 = vsub.s32 0, %v1190
  %v1192 = vrot.slane %v977, %v1191
  %v1194 = vadd.f32 %v1184, %v1192
  %v1195 = vadd.f32 %v1185, %v1192
  %v1196 = vadd.f32 %v1186, %v1192
  %v1197 = vadd.f32 %v1187, %v1192
  %v1198 = vmax.f32 %v1194, 0.0
  %v1199 = vmax.f32 %v1195, 0.0
  %v1200 = vmax.f32 %v1196, 0.0
  %v1201 = vmax.f32 %v1197, 0.0
  %v1202 = vld [vmem:[%s12] sm:$0xff]
  %v1203 = vld [vmem:[%s12 + $0x8] sm:$0xff]
  %v1204 = vld [vmem:[%s12 + $0x10] sm:$0xff]
  %v1205 = vld [vmem:[%s12 + $0x18] sm:$0xff]
  %v1206 = vld [vmem:[%s12 + $0x20] sm:$0xff]
  %v1207 = vld [vmem:[%s12 + $0x28] sm:$0xff]
  %v1208 = vld [vmem:[%s12 + $0x30] sm:$0xff]
  %v1209 = vld [vmem:[%s12 + $0x38] sm:$0xff]
  %v1210 = vld [vmem:[%s12 + $0x40] sm:$0xff]
  %v1211 = vld [vmem:[%s12 + $0x48] sm:$0xff]
  %v1212 = vld [vmem:[%s12 + $0x50] sm:$0xff]
  %v1213 = vld [vmem:[%s12 + $0x58] sm:$0xff]
  %v1214 = vld [vmem:[%s13] sm:$0x1]
  %v1215 = vld [vmem:[%s14] sm:$0x1]
  %v1216 = vld [vmem:[%s15] sm:$0x1]
  %v1217 = vrot.slane %v1198, 7
  %v1218 = vrot.slane %v1200, 7
  %v1219 = vrot.slane %v1199, 7
  %v1220 = vrot.slane %v1201, 7
  %v1221 = vsel %vm225, %v1217, %v1219
  %v1222 = vsel %vm225, %v1218, %v1220
  %v1223 = vsel %vm225, %v1219, %v1217
  %v1224 = vsel %vm225, %v1220, %v1218
  %v1225 = vsel %vm236, %v1223, 0.0
  %v1226 = vsel %vm237, %v1221, 0.0
  %v1227 = vsel %vm236, %v1224, 0.0
  %v1228 = vsel %vm237, %v1222, 0.0
  %v1229 = vrot.slane %v1198, 1
  %v1230 = vrot.slane %v1200, 1
  %v1231 = vrot.slane %v1199, 1
  %v1232 = vrot.slane %v1201, 1
  %v1233 = vsel %vm430, %v1229, %v1231
  %v1234 = vsel %vm430, %v1230, %v1232
  %v1235 = vsel %vm430, %v1231, %v1229
  %v1236 = vsel %vm430, %v1232, %v1230
  %v1237 = vsel %vm441, %v1233, 0.0
  %v1238 = vsel %vm442, %v1235, 0.0
  %v1239 = vsel %vm441, %v1234, 0.0
  %v1240 = vsel %vm442, %v1236, 0.0
  %1245 = vrot.lane.b32.xlu0 %v1198, 32
  %v1246 = vpop.permute.xlu0 %1245
  %1247 = vrot.lane.b32.xlu0 %v1199, 32
  %v1248 = vpop.permute.xlu0 %1247
  %1249 = vrot.lane.b32.xlu0 %v1200, 32
  %v1250 = vpop.permute.xlu0 %1249
  %1251 = vrot.lane.b32.xlu0 %v1201, 32
  %v1252 = vpop.permute.xlu0 %1251
  %1261 = vrot.lane.b32.xlu0 %v1237, 64
  %v1262 = vpop.permute.xlu0 %1261
  %1263 = vrot.lane.b32.xlu0 %v1238, 64
  %v1264 = vpop.permute.xlu0 %1263
  %1265 = vrot.lane.b32.xlu0 %v1239, 64
  %v1266 = vpop.permute.xlu0 %1265
  %1267 = vrot.lane.b32.xlu0 %v1240, 64
  %v1268 = vpop.permute.xlu0 %1267
  %v1273 = vsel %vm81, %v1225, %v1246
  %v1274 = vsel %vm81, %v1226, %v1248
  %v1275 = vsel %vm81, %v1227, %v1250
  %v1276 = vsel %vm81, %v1228, %v1252
  %v1277 = vsel %vm274, %v1273, %v1262
  %v1278 = vsel %vm274, %v1274, %v1264
  %v1279 = vsel %vm274, %v1275, %v1266
  %v1280 = vsel %vm274, %v1276, %v1268
  %v1281 = vpack.c.bf16 %v1278, %v1277
  %v1282 = vpack.c.bf16 %v1280, %v1279
  %v1283 = vpack.c.bf16 %v1203, %v1202
  %v1284 = vpack.c.bf16 %v1205, %v1204
  %v1285 = vpack.c.bf16 %v1207, %v1206
  %v1286 = vpack.c.bf16 %v1209, %v1208
  %v1287 = vpack.c.bf16 %v1211, %v1210
  %v1288 = vpack.c.bf16 %v1213, %v1212
  %v1290 = vlaneseq
  %v1291 = vshrl.u32 %v1290, 7
  %v1292 = vsub.s32 0, %v1291
  %v1293 = vrot.slane %v1214, %v1292
  %v1296 = vsel %vm501, %v1281, 0
  %v1299 = vsel %vm501, %v1282, 0
  %1301 = vmatprep.subr.bf16.mxu0 0
  %1302 = vmatpush1.bf16.msra.mxu0 %v1283
  %1303 = vmatprep.subr.bf16.mxu0 0
  %1304 = vmatpush1.bf16.msra.mxu0 %v1284
  %1305 = vmatprep.subr.bf16.mxu0 0
  %1306 = vmatpush1.bf16.msra.mxu0 %v1285
  %1307 = vmatprep.subr.bf16.mxu0 0
  %1308 = vmatpush1.bf16.msra.mxu0 %v1286
  %1309 = vmatprep.subr.bf16.mxu0 0
  %1310 = vmatpush1.bf16.msra.mxu0 %v1287
  %1311 = vmatprep.subr.bf16.mxu0 0
  %1312 = vmatpush1.bf16.msra.mxu0 %v1288
  %1313 = vmatprep.subr.bf16.mxu0 0
  %1314 = vmatpush1.bf16.msra.mxu0 0
  %1315 = vmatprep.subr.bf16.mxu0 0
  %1316 = vmatpush1.bf16.msra.mxu0 0
  %1317 = vmatprep.subr.bf16.mxu0 0
  %1318 = vmatpush1.bf16.msra.mxu0 0
  %1319 = vmatprep.subr.bf16.mxu0 0
  %1320 = vmatpush1.bf16.msra.mxu0 0
  %1321 = vmatprep.subr.bf16.mxu0 0
  %1322 = vmatpush1.bf16.msra.mxu0 0
  %1323 = vmatprep.subr.bf16.mxu0 0
  %1324 = vmatpush1.bf16.msra.mxu0 0
  %1325 = vmatprep.subr.bf16.mxu0 0
  %1326 = vmatpush1.bf16.msra.mxu0 0
  %1327 = vmatprep.subr.bf16.mxu0 0
  %1328 = vmatpush1.bf16.msra.mxu0 0
  %1329 = vmatprep.subr.bf16.mxu0 0
  %1330 = vmatpush1.bf16.msra.mxu0 0
  %1331 = vmatprep.subr.bf16.mxu0 0
  %1332 = vmatpush1.bf16.msra.mxu0 0
  %1333 = vmatprep.mubr.bf16.mxu0 0
  %1334 = vmatmul.mubr.bf16.gmra.mrb[0].mxu0 %v1296
  %v1335 = vpop.f32.mrb[0].mxu0
  %v1336 = vadd.f32 %v1293, %v1335
  %v1337 = vpop.f32.mrb[0].mxu0
  %v1338 = vpop.f32.mrb[0].mxu0
  %v1339 = vadd.f32 %v1293, %v1338
  %v1340 = vpop.f32.mrb[0].mxu0
  %1341 = vmatprep.mubr.bf16.mxu0 0
  %1342 = vmatmul.mubr.bf16.gmra.mrb[0].mxu0 %v1299
  %v1343 = vpop.f32.mrb[0].mxu0
  %v1344 = vadd.f32 %v1293, %v1343
  %v1345 = vpop.f32.mrb[0].mxu0
  %v1346 = vpop.f32.mrb[0].mxu0
  %v1347 = vadd.f32 %v1293, %v1346
  %v1348 = vpop.f32.mrb[0].mxu0
  %1349 = vdwg.mxu0
  %v1350 = vsel %vm81, %v1336, 0.0
  %v1351 = vsel %vm81, %v1339, 0.0
  %v1352 = vadd.f32 %v1350, %v1351
  %v1353 = vsel %vm81, %v1344, 0.0
  %v1354 = vadd.f32 %v1352, %v1353
  %v1355 = vsel %vm81, %v1347, 0.0
  %v1356 = vadd.f32 %v1354, %v1355
  %v1357 = vrot.slane %v1356, 4
  %v1358 = vadd.f32 %v1356, %v1357
  %v1359 = vrot.slane %v1358, 2
  %v1360 = vadd.f32 %v1358, %v1359
  %v1361 = vrot.slane %v1360, 1
  %v1362 = vadd.f32 %v1360, %v1361
  %v1363 = vmul.f32 %v1362, %v150
  %v1364 = vsub.f32 %v1336, %v1363
  %v1365 = vsub.f32 %v1339, %v1363
  %v1366 = vsub.f32 %v1344, %v1363
  %v1367 = vsub.f32 %v1347, %v1363
  %v1368 = vmul.f32 %v1364, %v1364
  %v1369 = vmul.f32 %v1365, %v1365
  %v1370 = vmul.f32 %v1366, %v1366
  %v1371 = vmul.f32 %v1367, %v1367
  %v1372 = vsel %vm81, %v1368, 0.0
  %v1373 = vsel %vm81, %v1369, 0.0
  %v1374 = vadd.f32 %v1372, %v1373
  %v1375 = vsel %vm81, %v1370, 0.0
  %v1376 = vadd.f32 %v1374, %v1375
  %v1377 = vsel %vm81, %v1371, 0.0
  %v1378 = vadd.f32 %v1376, %v1377
  %v1379 = vrot.slane %v1378, 4
  %v1380 = vadd.f32 %v1378, %v1379
  %v1381 = vrot.slane %v1380, 2
  %v1382 = vadd.f32 %v1380, %v1381
  %v1383 = vrot.slane %v1382, 1
  %v1384 = vadd.f32 %v1382, %v1383
  %v1385 = vmul.f32 %v1384, %v150
  %v1386 = vadd.f32 %v1385, 1e-05
  %v1387 = vrsqrt.pop %v1386
  %v1388 = vmul.f32 %v1364, %v1387
  %v1389 = vmul.f32 %v1365, %v1387
  %v1390 = vmul.f32 %v1366, %v1387
  %v1391 = vmul.f32 %v1367, %v1387
  %v1393 = vlaneseq
  %v1394 = vshrl.u32 %v1393, 7
  %v1395 = vsub.s32 0, %v1394
  %v1396 = vrot.slane %v1215, %v1395
  %v1398 = vmul.f32 %v1388, %v1396
  %v1399 = vmul.f32 %v1389, %v1396
  %v1400 = vmul.f32 %v1390, %v1396
  %v1401 = vmul.f32 %v1391, %v1396
  %v1403 = vlaneseq
  %v1404 = vshrl.u32 %v1403, 7
  %v1405 = vsub.s32 0, %v1404
  %v1406 = vrot.slane %v1216, %v1405
  %v1408 = vadd.f32 %v1398, %v1406
  %v1409 = vadd.f32 %v1399, %v1406
  %v1410 = vadd.f32 %v1400, %v1406
  %v1411 = vadd.f32 %v1401, %v1406
  %v1412 = vadd.f32 %v1408, %v60
  %v1413 = vadd.f32 %v1409, %v61
  %v1414 = vadd.f32 %v1410, %v62
  %v1415 = vadd.f32 %v1411, %v63
  %v1416 = vpack.c.bf16 %v1413, %v1412
  %v1417 = vpack.c.bf16 %v1415, %v1414
  %v1418 = vld [vmem:[%s16] sm:$0xff]
  %v1419 = vld [vmem:[%s16 + $0x8] sm:$0xff]
  %v1420 = vld [vmem:[%s16 + $0x10] sm:$0xff]
  %v1421 = vld [vmem:[%s16 + $0x18] sm:$0xff]
  %v1422 = vpack.c.bf16 %v1419, %v1418
  %v1423 = vpack.c.bf16 %v1421, %v1420
  %v1424 = vld [vmem:[%s17] sm:$0x1]
  %v1426 = vlaneseq
  %v1427 = vshrl.u32 %v1426, 7
  %v1428 = vsub.s32 0, %v1427
  %v1429 = vrot.slane %v1424, %v1428
  %v1432 = vsel %vm81, %v1416, 0
  %v1435 = vsel %vm81, %v1417, 0
  %1437 = vmatprep.subr.bf16.mxu0 0
  %1438 = vmatpush1.bf16.msra.mxu0 %v1422
  %1439 = vmatprep.subr.bf16.mxu0 0
  %1440 = vmatpush1.bf16.msra.mxu0 %v1423
  %1441 = vmatprep.subr.bf16.mxu0 0
  %1442 = vmatpush1.bf16.msra.mxu0 0
  %1443 = vmatprep.subr.bf16.mxu0 0
  %1444 = vmatpush1.bf16.msra.mxu0 0
  %1445 = vmatprep.subr.bf16.mxu0 0
  %1446 = vmatpush1.bf16.msra.mxu0 0
  %1447 = vmatprep.subr.bf16.mxu0 0
  %1448 = vmatpush1.bf16.msra.mxu0 0
  %1449 = vmatprep.subr.bf16.mxu0 0
  %1450 = vmatpush1.bf16.msra.mxu0 0
  %1451 = vmatprep.subr.bf16.mxu0 0
  %1452 = vmatpush1.bf16.msra.mxu0 0
  %1453 = vmatprep.subr.bf16.mxu0 0
  %1454 = vmatpush1.bf16.msra.mxu0 0
  %1455 = vmatprep.subr.bf16.mxu0 0
  %1456 = vmatpush1.bf16.msra.mxu0 0
  %1457 = vmatprep.subr.bf16.mxu0 0
  %1458 = vmatpush1.bf16.msra.mxu0 0
  %1459 = vmatprep.subr.bf16.mxu0 0
  %1460 = vmatpush1.bf16.msra.mxu0 0
  %1461 = vmatprep.subr.bf16.mxu0 0
  %1462 = vmatpush1.bf16.msra.mxu0 0
  %1463 = vmatprep.subr.bf16.mxu0 0
  %1464 = vmatpush1.bf16.msra.mxu0 0
  %1465 = vmatprep.subr.bf16.mxu0 0
  %1466 = vmatpush1.bf16.msra.mxu0 0
  %1467 = vmatprep.subr.bf16.mxu0 0
  %1468 = vmatpush1.bf16.msra.mxu0 0
  %1469 = vmatprep.mubr.bf16.mxu0 0
  %1470 = vmatmul.mubr.bf16.gmra.mrb[0].mxu0 %v1432
  %v1471 = vpop.f32.mrb[0].mxu0
  %v1472 = vadd.f32 %v1429, %v1471
  %v1473 = vpop.f32.mrb[0].mxu0
  %v1474 = vpop.f32.mrb[0].mxu0
  %v1475 = vadd.f32 %v1429, %v1474
  %v1476 = vpop.f32.mrb[0].mxu0
  %1477 = vmatprep.mubr.bf16.mxu0 0
  %1478 = vmatmul.mubr.bf16.gmra.mrb[0].mxu0 %v1435
  %v1479 = vpop.f32.mrb[0].mxu0
  %v1480 = vadd.f32 %v1429, %v1479
  %v1481 = vpop.f32.mrb[0].mxu0
  %v1482 = vpop.f32.mrb[0].mxu0
  %v1483 = vadd.f32 %v1429, %v1482
  %v1484 = vpop.f32.mrb[0].mxu0
  %1485 = vdwg.mxu0
  %v1486 = vmax.f32 %v1472, 0.0
  %v1487 = vmax.f32 %v1475, 0.0
  %v1488 = vmax.f32 %v1480, 0.0
  %v1489 = vmax.f32 %v1483, 0.0
  %v1490 = vxor.u32 %v1472, 2147483648
  %v1491 = vxor.u32 %v1475, 2147483648
  %v1492 = vxor.u32 %v1480, 2147483648
  %v1493 = vxor.u32 %v1483, 2147483648
  %v1494 = vmul.f32 %v1490, 1.442695
  %v1495 = vpow.pop %v1494
  %v1496 = vmul.f32 %v1491, 1.442695
  %v1497 = vpow.pop %v1496
  %v1498 = vmul.f32 %v1492, 1.442695
  %v1499 = vpow.pop %v1498
  %v1500 = vmul.f32 %v1493, 1.442695
  %v1501 = vpow.pop %v1500
  %v1502 = vadd.f32 %v1495, 1.0
  %v1503 = vadd.f32 %v1497, 1.0
  %v1504 = vadd.f32 %v1499, 1.0
  %v1505 = vadd.f32 %v1501, 1.0
  %v1506 = vrcp.pop %v1502
  %v1507 = vmul.f32 1.0, %v1506
  %v1508 = vrcp.pop %v1503
  %v1509 = vmul.f32 1.0, %v1508
  %v1510 = vrcp.pop %v1504
  %v1511 = vmul.f32 1.0, %v1510
  %v1512 = vrcp.pop %v1505
  %v1513 = vmul.f32 1.0, %v1512
  %1518 = vrot.lane.b32.xlu0 %v1507, 96
  %v1519 = vpop.permute.xlu0 %1518
  %1520 = vrot.lane.b32.xlu0 %v1509, 96
  %v1521 = vpop.permute.xlu0 %1520
  %1522 = vrot.lane.b32.xlu0 %v1511, 96
  %v1523 = vpop.permute.xlu0 %1522
  %1524 = vrot.lane.b32.xlu0 %v1513, 96
  %v1525 = vpop.permute.xlu0 %1524
  %v1530 = vmul.f32 %v1486, %v1519
  %v1531 = vmul.f32 %v1487, %v1521
  %v1532 = vmul.f32 %v1488, %v1523
  %v1533 = vmul.f32 %v1489, %v1525
  %v1534 = vsub.f32 1.0, %v1507
  %v1535 = vsub.f32 1.0, %v1509
  %v1536 = vsub.f32 1.0, %v1511
  %v1537 = vsub.f32 1.0, %v1513
  %1542 = vrot.lane.b32.xlu0 %v1534, 96
  %v1543 = vpop.permute.xlu0 %1542
  %1544 = vrot.lane.b32.xlu0 %v1535, 96
  %v1545 = vpop.permute.xlu0 %1544
  %1546 = vrot.lane.b32.xlu0 %v1536, 96
  %v1547 = vpop.permute.xlu0 %1546
  %1548 = vrot.lane.b32.xlu0 %v1537, 96
  %v1549 = vpop.permute.xlu0 %1548
  %v1554 = vmul.f32 %v1412, %v1543
  %v1555 = vmul.f32 %v1413, %v1545
  %v1556 = vmul.f32 %v1414, %v1547
  %v1557 = vmul.f32 %v1415, %v1549
  %v1558 = vadd.f32 %v1530, %v1554
  %v1559 = vadd.f32 %v1531, %v1555
  %v1560 = vadd.f32 %v1532, %v1556
  %v1561 = vadd.f32 %v1533, %v1557
  %v1562 = vpack.c.bf16 %v1559, %v1558
  %v1563 = vpack.c.bf16 %v1561, %v1560
  %s1564 = scalar_lea.vmem %s16, 32
  %v1565 = vld [vmem:[%s1564] sm:$0xff]
  %v1566 = vld [vmem:[%s1564 + $0x8] sm:$0xff]
  %v1567 = vld [vmem:[%s1564 + $0x10] sm:$0xff]
  %v1568 = vld [vmem:[%s1564 + $0x18] sm:$0xff]
  %v1569 = vpack.c.bf16 %v1566, %v1565
  %v1570 = vpack.c.bf16 %v1568, %v1567
  %s1571 = scalar_lea.vmem %s17, 1
  %v1572 = vld [vmem:[%s1571] sm:$0x1]
  %v1574 = vlaneseq
  %v1575 = vshrl.u32 %v1574, 7
  %v1576 = vsub.s32 0, %v1575
  %v1577 = vrot.slane %v1572, %v1576
  %v1580 = vsel %vm81, %v1562, 0
  %v1583 = vsel %vm81, %v1563, 0
  %1585 = vmatprep.subr.bf16.mxu0 0
  %1586 = vmatpush1.bf16.msra.mxu0 %v1569
  %1587 = vmatprep.subr.bf16.mxu0 0
  %1588 = vmatpush1.bf16.msra.mxu0 %v1570
  %1589 = vmatprep.subr.bf16.mxu0 0
  %1590 = vmatpush1.bf16.msra.mxu0 0
  %1591 = vmatprep.subr.bf16.mxu0 0
  %1592 = vmatpush1.bf16.msra.mxu0 0
  %1593 = vmatprep.subr.bf16.mxu0 0
  %1594 = vmatpush1.bf16.msra.mxu0 0
  %1595 = vmatprep.subr.bf16.mxu0 0
  %1596 = vmatpush1.bf16.msra.mxu0 0
  %1597 = vmatprep.subr.bf16.mxu0 0
  %1598 = vmatpush1.bf16.msra.mxu0 0
  %1599 = vmatprep.subr.bf16.mxu0 0
  %1600 = vmatpush1.bf16.msra.mxu0 0
  %1601 = vmatprep.subr.bf16.mxu0 0
  %1602 = vmatpush1.bf16.msra.mxu0 0
  %1603 = vmatprep.subr.bf16.mxu0 0
  %1604 = vmatpush1.bf16.msra.mxu0 0
  %1605 = vmatprep.subr.bf16.mxu0 0
  %1606 = vmatpush1.bf16.msra.mxu0 0
  %1607 = vmatprep.subr.bf16.mxu0 0
  %1608 = vmatpush1.bf16.msra.mxu0 0
  %1609 = vmatprep.subr.bf16.mxu0 0
  %1610 = vmatpush1.bf16.msra.mxu0 0
  %1611 = vmatprep.subr.bf16.mxu0 0
  %1612 = vmatpush1.bf16.msra.mxu0 0
  %1613 = vmatprep.subr.bf16.mxu0 0
  %1614 = vmatpush1.bf16.msra.mxu0 0
  %1615 = vmatprep.subr.bf16.mxu0 0
  %1616 = vmatpush1.bf16.msra.mxu0 0
  %1617 = vmatprep.mubr.bf16.mxu0 0
  %1618 = vmatmul.mubr.bf16.gmra.mrb[0].mxu0 %v1580
  %v1619 = vpop.f32.mrb[0].mxu0
  %v1620 = vadd.f32 %v1577, %v1619
  %v1621 = vpop.f32.mrb[0].mxu0
  %v1622 = vpop.f32.mrb[0].mxu0
  %v1623 = vadd.f32 %v1577, %v1622
  %v1624 = vpop.f32.mrb[0].mxu0
  %1625 = vmatprep.mubr.bf16.mxu0 0
  %1626 = vmatmul.mubr.bf16.gmra.mrb[0].mxu0 %v1583
  %v1627 = vpop.f32.mrb[0].mxu0
  %v1628 = vadd.f32 %v1577, %v1627
  %v1629 = vpop.f32.mrb[0].mxu0
  %v1630 = vpop.f32.mrb[0].mxu0
  %v1631 = vadd.f32 %v1577, %v1630
  %v1632 = vpop.f32.mrb[0].mxu0
  %1633 = vdwg.mxu0
  %v1634 = vmax.f32 %v1620, 0.0
  %v1635 = vmax.f32 %v1623, 0.0
  %v1636 = vmax.f32 %v1628, 0.0
  %v1637 = vmax.f32 %v1631, 0.0
  %v1638 = vxor.u32 %v1620, 2147483648
  %v1639 = vxor.u32 %v1623, 2147483648
  %v1640 = vxor.u32 %v1628, 2147483648
  %v1641 = vxor.u32 %v1631, 2147483648
  %v1642 = vmul.f32 %v1638, 1.442695
  %v1643 = vpow.pop %v1642
  %v1644 = vmul.f32 %v1639, 1.442695
  %v1645 = vpow.pop %v1644
  %v1646 = vmul.f32 %v1640, 1.442695
  %v1647 = vpow.pop %v1646
  %v1648 = vmul.f32 %v1641, 1.442695
  %v1649 = vpow.pop %v1648
  %v1650 = vadd.f32 %v1643, 1.0
  %v1651 = vadd.f32 %v1645, 1.0
  %v1652 = vadd.f32 %v1647, 1.0
  %v1653 = vadd.f32 %v1649, 1.0
  %v1654 = vrcp.pop %v1650
  %v1655 = vmul.f32 1.0, %v1654
  %v1656 = vrcp.pop %v1651
  %v1657 = vmul.f32 1.0, %v1656
  %v1658 = vrcp.pop %v1652
  %v1659 = vmul.f32 1.0, %v1658
  %v1660 = vrcp.pop %v1653
  %v1661 = vmul.f32 1.0, %v1660
  %1666 = vrot.lane.b32.xlu0 %v1655, 96
  %v1667 = vpop.permute.xlu0 %1666
  %1668 = vrot.lane.b32.xlu0 %v1657, 96
  %v1669 = vpop.permute.xlu0 %1668
  %1670 = vrot.lane.b32.xlu0 %v1659, 96
  %v1671 = vpop.permute.xlu0 %1670
  %1672 = vrot.lane.b32.xlu0 %v1661, 96
  %v1673 = vpop.permute.xlu0 %1672
  %v1678 = vmul.f32 %v1634, %v1667
  %v1679 = vmul.f32 %v1635, %v1669
  %v1680 = vmul.f32 %v1636, %v1671
  %v1681 = vmul.f32 %v1637, %v1673
  %v1682 = vsub.f32 1.0, %v1655
  %v1683 = vsub.f32 1.0, %v1657
  %v1684 = vsub.f32 1.0, %v1659
  %v1685 = vsub.f32 1.0, %v1661
  %1690 = vrot.lane.b32.xlu0 %v1682, 96
  %v1691 = vpop.permute.xlu0 %1690
  %1692 = vrot.lane.b32.xlu0 %v1683, 96
  %v1693 = vpop.permute.xlu0 %1692
  %1694 = vrot.lane.b32.xlu0 %v1684, 96
  %v1695 = vpop.permute.xlu0 %1694
  %1696 = vrot.lane.b32.xlu0 %v1685, 96
  %v1697 = vpop.permute.xlu0 %1696
  %v1702 = vmul.f32 %v1558, %v1691
  %v1703 = vmul.f32 %v1559, %v1693
  %v1704 = vmul.f32 %v1560, %v1695
  %v1705 = vmul.f32 %v1561, %v1697
  %v1706 = vadd.f32 %v1678, %v1702
  %v1707 = vadd.f32 %v1679, %v1703
  %v1708 = vadd.f32 %v1680, %v1704
  %v1709 = vadd.f32 %v1681, %v1705
  %v1710 = vpack.c.bf16 %v1707, %v1706
  %v1711 = vpack.c.bf16 %v1709, %v1708
  %s1712 = scalar_lea.vmem %s16, 64
  %v1713 = vld [vmem:[%s1712] sm:$0xff]
  %v1714 = vld [vmem:[%s1712 + $0x8] sm:$0xff]
  %v1715 = vld [vmem:[%s1712 + $0x10] sm:$0xff]
  %v1716 = vld [vmem:[%s1712 + $0x18] sm:$0xff]
  %v1717 = vpack.c.bf16 %v1714, %v1713
  %v1718 = vpack.c.bf16 %v1716, %v1715
  %s1719 = scalar_lea.vmem %s17, 2
  %v1720 = vld [vmem:[%s1719] sm:$0x1]
  %v1722 = vlaneseq
  %v1723 = vshrl.u32 %v1722, 7
  %v1724 = vsub.s32 0, %v1723
  %v1725 = vrot.slane %v1720, %v1724
  %v1728 = vsel %vm81, %v1710, 0
  %v1731 = vsel %vm81, %v1711, 0
  %1733 = vmatprep.subr.bf16.mxu0 0
  %1734 = vmatpush1.bf16.msra.mxu0 %v1717
  %1735 = vmatprep.subr.bf16.mxu0 0
  %1736 = vmatpush1.bf16.msra.mxu0 %v1718
  %1737 = vmatprep.subr.bf16.mxu0 0
  %1738 = vmatpush1.bf16.msra.mxu0 0
  %1739 = vmatprep.subr.bf16.mxu0 0
  %1740 = vmatpush1.bf16.msra.mxu0 0
  %1741 = vmatprep.subr.bf16.mxu0 0
  %1742 = vmatpush1.bf16.msra.mxu0 0
  %1743 = vmatprep.subr.bf16.mxu0 0
  %1744 = vmatpush1.bf16.msra.mxu0 0
  %1745 = vmatprep.subr.bf16.mxu0 0
  %1746 = vmatpush1.bf16.msra.mxu0 0
  %1747 = vmatprep.subr.bf16.mxu0 0
  %1748 = vmatpush1.bf16.msra.mxu0 0
  %1749 = vmatprep.subr.bf16.mxu0 0
  %1750 = vmatpush1.bf16.msra.mxu0 0
  %1751 = vmatprep.subr.bf16.mxu0 0
  %1752 = vmatpush1.bf16.msra.mxu0 0
  %1753 = vmatprep.subr.bf16.mxu0 0
  %1754 = vmatpush1.bf16.msra.mxu0 0
  %1755 = vmatprep.subr.bf16.mxu0 0
  %1756 = vmatpush1.bf16.msra.mxu0 0
  %1757 = vmatprep.subr.bf16.mxu0 0
  %1758 = vmatpush1.bf16.msra.mxu0 0
  %1759 = vmatprep.subr.bf16.mxu0 0
  %1760 = vmatpush1.bf16.msra.mxu0 0
  %1761 = vmatprep.subr.bf16.mxu0 0
  %1762 = vmatpush1.bf16.msra.mxu0 0
  %1763 = vmatprep.subr.bf16.mxu0 0
  %1764 = vmatpush1.bf16.msra.mxu0 0
  %1765 = vmatprep.mubr.bf16.mxu0 0
  %1766 = vmatmul.mubr.bf16.gmra.mrb[0].mxu0 %v1728
  %v1767 = vpop.f32.mrb[0].mxu0
  %v1768 = vadd.f32 %v1725, %v1767
  %v1769 = vpop.f32.mrb[0].mxu0
  %v1770 = vpop.f32.mrb[0].mxu0
  %v1771 = vadd.f32 %v1725, %v1770
  %v1772 = vpop.f32.mrb[0].mxu0
  %1773 = vmatprep.mubr.bf16.mxu0 0
  %1774 = vmatmul.mubr.bf16.gmra.mrb[0].mxu0 %v1731
  %v1775 = vpop.f32.mrb[0].mxu0
  %v1776 = vadd.f32 %v1725, %v1775
  %v1777 = vpop.f32.mrb[0].mxu0
  %v1778 = vpop.f32.mrb[0].mxu0
  %v1779 = vadd.f32 %v1725, %v1778
  %v1780 = vpop.f32.mrb[0].mxu0
  %1781 = vdwg.mxu0
  %v1782 = vmax.f32 %v1768, 0.0
  %v1783 = vmax.f32 %v1771, 0.0
  %v1784 = vmax.f32 %v1776, 0.0
  %v1785 = vmax.f32 %v1779, 0.0
  %v1786 = vxor.u32 %v1768, 2147483648
  %v1787 = vxor.u32 %v1771, 2147483648
  %v1788 = vxor.u32 %v1776, 2147483648
  %v1789 = vxor.u32 %v1779, 2147483648
  %v1790 = vmul.f32 %v1786, 1.442695
  %v1791 = vpow.pop %v1790
  %v1792 = vmul.f32 %v1787, 1.442695
  %v1793 = vpow.pop %v1792
  %v1794 = vmul.f32 %v1788, 1.442695
  %v1795 = vpow.pop %v1794
  %v1796 = vmul.f32 %v1789, 1.442695
  %v1797 = vpow.pop %v1796
  %v1798 = vadd.f32 %v1791, 1.0
  %v1799 = vadd.f32 %v1793, 1.0
  %v1800 = vadd.f32 %v1795, 1.0
  %v1801 = vadd.f32 %v1797, 1.0
  %v1802 = vrcp.pop %v1798
  %v1803 = vmul.f32 1.0, %v1802
  %v1804 = vrcp.pop %v1799
  %v1805 = vmul.f32 1.0, %v1804
  %v1806 = vrcp.pop %v1800
  %v1807 = vmul.f32 1.0, %v1806
  %v1808 = vrcp.pop %v1801
  %v1809 = vmul.f32 1.0, %v1808
  %1814 = vrot.lane.b32.xlu0 %v1803, 96
  %v1815 = vpop.permute.xlu0 %1814
  %1816 = vrot.lane.b32.xlu0 %v1805, 96
  %v1817 = vpop.permute.xlu0 %1816
  %1818 = vrot.lane.b32.xlu0 %v1807, 96
  %v1819 = vpop.permute.xlu0 %1818
  %1820 = vrot.lane.b32.xlu0 %v1809, 96
  %v1821 = vpop.permute.xlu0 %1820
  %v1826 = vmul.f32 %v1782, %v1815
  %v1827 = vmul.f32 %v1783, %v1817
  %v1828 = vmul.f32 %v1784, %v1819
  %v1829 = vmul.f32 %v1785, %v1821
  %v1830 = vsub.f32 1.0, %v1803
  %v1831 = vsub.f32 1.0, %v1805
  %v1832 = vsub.f32 1.0, %v1807
  %v1833 = vsub.f32 1.0, %v1809
  %1838 = vrot.lane.b32.xlu0 %v1830, 96
  %v1839 = vpop.permute.xlu0 %1838
  %1840 = vrot.lane.b32.xlu0 %v1831, 96
  %v1841 = vpop.permute.xlu0 %1840
  %1842 = vrot.lane.b32.xlu0 %v1832, 96
  %v1843 = vpop.permute.xlu0 %1842
  %1844 = vrot.lane.b32.xlu0 %v1833, 96
  %v1845 = vpop.permute.xlu0 %1844
  %v1850 = vmul.f32 %v1706, %v1839
  %v1851 = vmul.f32 %v1707, %v1841
  %v1852 = vmul.f32 %v1708, %v1843
  %v1853 = vmul.f32 %v1709, %v1845
  %v1854 = vadd.f32 %v1826, %v1850
  %v1855 = vadd.f32 %v1827, %v1851
  %v1856 = vadd.f32 %v1828, %v1852
  %v1857 = vadd.f32 %v1829, %v1853
  %v1858 = vpack.c.bf16 %v1855, %v1854
  %v1859 = vpack.c.bf16 %v1857, %v1856
  %s1860 = scalar_lea.vmem %s16, 96
  %v1861 = vld [vmem:[%s1860] sm:$0xff]
  %v1862 = vld [vmem:[%s1860 + $0x8] sm:$0xff]
  %v1863 = vld [vmem:[%s1860 + $0x10] sm:$0xff]
  %v1864 = vld [vmem:[%s1860 + $0x18] sm:$0xff]
  %v1865 = vpack.c.bf16 %v1862, %v1861
  %v1866 = vpack.c.bf16 %v1864, %v1863
  %s1867 = scalar_lea.vmem %s17, 3
  %v1868 = vld [vmem:[%s1867] sm:$0x1]
  %v1870 = vlaneseq
  %v1871 = vshrl.u32 %v1870, 7
  %v1872 = vsub.s32 0, %v1871
  %v1873 = vrot.slane %v1868, %v1872
  %v1876 = vsel %vm81, %v1858, 0
  %v1879 = vsel %vm81, %v1859, 0
  %1881 = vmatprep.subr.bf16.mxu0 0
  %1882 = vmatpush1.bf16.msra.mxu0 %v1865
  %1883 = vmatprep.subr.bf16.mxu0 0
  %1884 = vmatpush1.bf16.msra.mxu0 %v1866
  %1885 = vmatprep.subr.bf16.mxu0 0
  %1886 = vmatpush1.bf16.msra.mxu0 0
  %1887 = vmatprep.subr.bf16.mxu0 0
  %1888 = vmatpush1.bf16.msra.mxu0 0
  %1889 = vmatprep.subr.bf16.mxu0 0
  %1890 = vmatpush1.bf16.msra.mxu0 0
  %1891 = vmatprep.subr.bf16.mxu0 0
  %1892 = vmatpush1.bf16.msra.mxu0 0
  %1893 = vmatprep.subr.bf16.mxu0 0
  %1894 = vmatpush1.bf16.msra.mxu0 0
  %1895 = vmatprep.subr.bf16.mxu0 0
  %1896 = vmatpush1.bf16.msra.mxu0 0
  %1897 = vmatprep.subr.bf16.mxu0 0
  %1898 = vmatpush1.bf16.msra.mxu0 0
  %1899 = vmatprep.subr.bf16.mxu0 0
  %1900 = vmatpush1.bf16.msra.mxu0 0
  %1901 = vmatprep.subr.bf16.mxu0 0
  %1902 = vmatpush1.bf16.msra.mxu0 0
  %1903 = vmatprep.subr.bf16.mxu0 0
  %1904 = vmatpush1.bf16.msra.mxu0 0
  %1905 = vmatprep.subr.bf16.mxu0 0
  %1906 = vmatpush1.bf16.msra.mxu0 0
  %1907 = vmatprep.subr.bf16.mxu0 0
  %1908 = vmatpush1.bf16.msra.mxu0 0
  %1909 = vmatprep.subr.bf16.mxu0 0
  %1910 = vmatpush1.bf16.msra.mxu0 0
  %1911 = vmatprep.subr.bf16.mxu0 0
  %1912 = vmatpush1.bf16.msra.mxu0 0
  %1913 = vmatprep.mubr.bf16.mxu0 0
  %1914 = vmatmul.mubr.bf16.gmra.mrb[0].mxu0 %v1876
  %v1915 = vpop.f32.mrb[0].mxu0
  %v1916 = vadd.f32 %v1873, %v1915
  %v1917 = vpop.f32.mrb[0].mxu0
  %v1918 = vpop.f32.mrb[0].mxu0
  %v1919 = vadd.f32 %v1873, %v1918
  %v1920 = vpop.f32.mrb[0].mxu0
  %1921 = vmatprep.mubr.bf16.mxu0 0
  %1922 = vmatmul.mubr.bf16.gmra.mrb[0].mxu0 %v1879
  %v1923 = vpop.f32.mrb[0].mxu0
  %v1924 = vadd.f32 %v1873, %v1923
  %v1925 = vpop.f32.mrb[0].mxu0
  %v1926 = vpop.f32.mrb[0].mxu0
  %v1927 = vadd.f32 %v1873, %v1926
  %v1928 = vpop.f32.mrb[0].mxu0
  %1929 = vdwg.mxu0
  %v1930 = vmax.f32 %v1916, 0.0
  %v1931 = vmax.f32 %v1919, 0.0
  %v1932 = vmax.f32 %v1924, 0.0
  %v1933 = vmax.f32 %v1927, 0.0
  %v1934 = vxor.u32 %v1916, 2147483648
  %v1935 = vxor.u32 %v1919, 2147483648
  %v1936 = vxor.u32 %v1924, 2147483648
  %v1937 = vxor.u32 %v1927, 2147483648
  %v1938 = vmul.f32 %v1934, 1.442695
  %v1939 = vpow.pop %v1938
  %v1940 = vmul.f32 %v1935, 1.442695
  %v1941 = vpow.pop %v1940
  %v1942 = vmul.f32 %v1936, 1.442695
  %v1943 = vpow.pop %v1942
  %v1944 = vmul.f32 %v1937, 1.442695
  %v1945 = vpow.pop %v1944
  %v1946 = vadd.f32 %v1939, 1.0
  %v1947 = vadd.f32 %v1941, 1.0
  %v1948 = vadd.f32 %v1943, 1.0
  %v1949 = vadd.f32 %v1945, 1.0
  %v1950 = vrcp.pop %v1946
  %v1951 = vmul.f32 1.0, %v1950
  %v1952 = vrcp.pop %v1947
  %v1953 = vmul.f32 1.0, %v1952
  %v1954 = vrcp.pop %v1948
  %v1955 = vmul.f32 1.0, %v1954
  %v1956 = vrcp.pop %v1949
  %v1957 = vmul.f32 1.0, %v1956
  %1962 = vrot.lane.b32.xlu0 %v1951, 96
  %v1963 = vpop.permute.xlu0 %1962
  %1964 = vrot.lane.b32.xlu0 %v1953, 96
  %v1965 = vpop.permute.xlu0 %1964
  %1966 = vrot.lane.b32.xlu0 %v1955, 96
  %v1967 = vpop.permute.xlu0 %1966
  %1968 = vrot.lane.b32.xlu0 %v1957, 96
  %v1969 = vpop.permute.xlu0 %1968
  %v1974 = vmul.f32 %v1930, %v1963
  %v1975 = vmul.f32 %v1931, %v1965
  %v1976 = vmul.f32 %v1932, %v1967
  %v1977 = vmul.f32 %v1933, %v1969
  %v1978 = vsub.f32 1.0, %v1951
  %v1979 = vsub.f32 1.0, %v1953
  %v1980 = vsub.f32 1.0, %v1955
  %v1981 = vsub.f32 1.0, %v1957
  %1986 = vrot.lane.b32.xlu0 %v1978, 96
  %v1987 = vpop.permute.xlu0 %1986
  %1988 = vrot.lane.b32.xlu0 %v1979, 96
  %v1989 = vpop.permute.xlu0 %1988
  %1990 = vrot.lane.b32.xlu0 %v1980, 96
  %v1991 = vpop.permute.xlu0 %1990
  %1992 = vrot.lane.b32.xlu0 %v1981, 96
  %v1993 = vpop.permute.xlu0 %1992
  %v1998 = vmul.f32 %v1854, %v1987
  %v1999 = vmul.f32 %v1855, %v1989
  %v2000 = vmul.f32 %v1856, %v1991
  %v2001 = vmul.f32 %v1857, %v1993
  %v2002 = vadd.f32 %v1974, %v1998
  %v2003 = vadd.f32 %v1975, %v1999
  %v2004 = vadd.f32 %v1976, %v2000
  %v2005 = vadd.f32 %v1977, %v2001
  %2006 = vst.msk [vmem:[%s18] sm:$0xff] %vm81, %v2002
  %2007 = vst.msk [vmem:[%s18 + $0x8] sm:$0xff] %vm81, %v2003
  %2008 = vst.msk [vmem:[%s18 + $0x10] sm:$0xff] %vm81, %v2004
  %2009 = vst.msk [vmem:[%s18 + $0x18] sm:$0xff] %vm81, %v2005
  // Predicated region
  $region74: #{cbhg_forward.2} parent=0 // pred_check
    _
  $region75: #{cbhg_forward.2} parent=0 // pred_check_branch
    %2011 = sbr.rel (0) target = $region77
  $region76: #{cbhg_forward.2} parent=0 // pred_region
    _
  $region77: #{cbhg_forward.2} parent=0 // pred_fallthru
    _
  // Predicated region
  $region78: #{cbhg_forward.2} parent=0 // pred_check
    _
  $region79: #{cbhg_forward.2} parent=0 // pred_check_branch
    %2013 = sbr.rel (0) target = $region81
  $region80: #{cbhg_forward.2} parent=0 // pred_region
    _
  $region81: #{cbhg_forward.2} parent=0 // pred_fallthru
    _

</llo_original>
